<compile_context>
chip_gen: v7x
topology: tpu7x:2x2x1
jax: 0.10.0
libtpu: 0.0.40
codegen_flags: <defaults>
</compile_context>

<pallas_src>
import functools

import jax
import jax.numpy as jnp
from jax import lax
from jax.experimental import pallas as pl
from jax.experimental.pallas import tpu as pltpu

EPS = 1e-5  # PyTorch BatchNorm1d default eps


# ------------------------------ fused kernel -------------------------------- #

def fused_cnn1d_kernel(x_ref,                      # (B, T0, C0) channels-last input
                       w1_ref, s1_ref, b1_ref,     # conv1: (3,C0,64), (1,64), (1,64)
                       w2_ref, s2_ref, b2_ref,     # conv2: (3,64,128), (1,128), (1,128)
                       w3_ref, s3_ref, b3_ref,     # conv3: (3,128,256), (1,256), (1,256)
                       fw1_ref, fb1_ref,           # fc1: (F,1024), (1,1024)  (perm folded)
                       fw2_ref, fb2_ref,           # fc2: (1024,Npad), (1,Npad)
                       o_ref,                      # (B, Npad) logits (padded classes)
                       xp1, xp2, xp3, feat):       # VMEM scratch
    B, T0, C0 = x_ref.shape
    C1 = w1_ref.shape[2]
    C2 = w2_ref.shape[2]
    C3 = w3_ref.shape[2]
    T1, T2, T3 = T0 // 2, T0 // 4, T0 // 8
    seg1, seg2, seg3 = T0 + 2, T1 + 2, T2 + 2     # per-batch padded segment lengths

    # Zero the padded slabs once; only interior rows get overwritten below, so
    # the first/last row of each batch segment stays zero (conv padding=1).
    xp1[...] = jnp.zeros_like(xp1)
    xp2[...] = jnp.zeros_like(xp2)
    xp3[...] = jnp.zeros_like(xp3)

    # Pack the whole batch into the sublane (time) axis of the conv1 slab.
    for b in range(B):                              # static unroll; B is tiny
        xp1[pl.ds(b * seg1 + 1, T0), :] = x_ref[b]

    def conv_bn_relu(xp_ref, w_ref, s_ref, bias_ref):
        # Batch-fused conv(k=3, p=1) over the padded slab: 3 matmuls for all B.
        L = xp_ref.shape[0] - 2
        Cout = w_ref.shape[2]
        xp = xp_ref[...]
        acc = jnp.zeros((L, Cout), jnp.float32)
        for k in range(3):
            acc += jnp.dot(xp[k:k + L, :], w_ref[k],
                           preferred_element_type=jnp.float32)
        return jnp.maximum(acc * s_ref[0] + bias_ref[0], 0.0)   # folded BN + ReLU

    # Layer 1: conv/BN/ReLU (batch-fused), then per-batch MaxPool(2,2).
    acc1 = conv_bn_relu(xp1, w1_ref, s1_ref, b1_ref)            # (B*seg1-2, 64)
    for b in range(B):
        valid = acc1[b * seg1:b * seg1 + T0, :]                 # (T0, 64)
        xp2[pl.ds(b * seg2 + 1, T1), :] = jnp.max(
            valid.reshape(T1, 2, C1), axis=1)

    # Layer 2
    acc2 = conv_bn_relu(xp2, w2_ref, s2_ref, b2_ref)            # (B*seg2-2, 128)
    for b in range(B):
        valid = acc2[b * seg2:b * seg2 + T1, :]                 # (T1, 128)
        xp3[pl.ds(b * seg3 + 1, T2), :] = jnp.max(
            valid.reshape(T2, 2, C2), axis=1)

    # Layer 3
    acc3 = conv_bn_relu(xp3, w3_ref, s3_ref, b3_ref)            # (B*seg3-2, 256)
    for b in range(B):
        valid = acc3[b * seg3:b * seg3 + T2, :]                 # (T2, 256)
        p3 = jnp.max(valid.reshape(T3, 2, C3), axis=1)          # (T3, 256)
        # Flatten in native (t, c) order; the matching row permutation of fc1's
        # weight was applied once at pack time (lane offsets multiples of 256).
        for t in range(T3):
            feat[pl.ds(b, 1), pl.ds(t * C3, C3)] = p3[t:t + 1, :]

    # Fused 2-layer MLP over the whole batch (dropout = identity at inference).
    h = jnp.dot(feat[...], fw1_ref[...], preferred_element_type=jnp.float32)
    h = jnp.maximum(h + fb1_ref[...], 0.0)                      # fc1 + ReLU
    o = jnp.dot(h, fw2_ref[...], preferred_element_type=jnp.float32) + fb2_ref[...]
    o_ref[...] = o.astype(o_ref.dtype)                          # fc2 (padded classes)


# ------------------------------ wrappers ------------------------------------ #

def fused_forward(x_btc, kp):
    # x_btc: (B, T0, C0) channels-last input; kp: packed (kernel-ready) params.
    B, T0, C0 = x_btc.shape
    assert T0 % 8 == 0, "num_frames must be divisible by 8"
    C1 = kp["conv1"]["w"].shape[2]
    C2 = kp["conv2"]["w"].shape[2]
    C3 = kp["conv3"]["w"].shape[2]
    T3 = T0 // 8
    n_pad = kp["fc2"]["w"].shape[1]
    return pl.pallas_call(
        fused_cnn1d_kernel,
        out_shape=jax.ShapeDtypeStruct((B, n_pad), jnp.float32),
        scratch_shapes=[
            pltpu.VMEM((B * (T0 + 2), C0), jnp.float32),       # batch-fused conv1 slab
            pltpu.VMEM((B * (T0 // 2 + 2), C1), jnp.float32),  # batch-fused conv2 slab
            pltpu.VMEM((B * (T0 // 4 + 2), C2), jnp.float32),  # batch-fused conv3 slab
            pltpu.VMEM((B, T3 * C3), jnp.float32),             # flattened features
        ],
    )(x_btc,
      kp["conv1"]["w"], kp["conv1"]["scale"], kp["conv1"]["bias"],
      kp["conv2"]["w"], kp["conv2"]["scale"], kp["conv2"]["bias"],
      kp["conv3"]["w"], kp["conv3"]["scale"], kp["conv3"]["bias"],
      kp["fc1"]["w"], kp["fc1"]["b"], kp["fc2"]["w"], kp["fc2"]["b"])


@functools.partial(jax.jit, static_argnames=("n_classes",))
def cnn1d_forward(x_nct, kp, n_classes):
    # x_nct: (B, num_landmarks*2, num_frames) -- PyTorch NCT layout.
    x = jnp.transpose(x_nct, (0, 2, 1)).astype(jnp.float32)  # tiny (~1 KiB), jitted
    out = fused_forward(x, kp)
    return out[:, :n_classes]                 # drop the 256-lane class padding


# --------------------- parameter init / kernel packing ---------------------- #

def init_params(key, num_landmarks, num_frames, output_classes):
    # Raw parameters in PyTorch layout (used by the pure-JAX reference).
    c_in = num_landmarks * 2
    dims = [(c_in, 64), (64, 128), (128, 256)]
    keys = iter(jax.random.split(key, 32))
    params = {}
    for i, (ci, co) in enumerate(dims, start=1):
        params[f"conv{i}"] = {
            "w_oik": 0.1 * jax.random.normal(next(keys), (co, ci, 3), jnp.float32),
            "b": 0.1 * jax.random.normal(next(keys), (co,), jnp.float32),
        }
        gamma = 1.0 + 0.1 * jax.random.normal(next(keys), (co,), jnp.float32)
        beta = 0.1 * jax.random.normal(next(keys), (co,), jnp.float32)
        mean = 0.1 * jax.random.normal(next(keys), (co,), jnp.float32)
        var = 1.0 + 0.1 * jax.random.uniform(next(keys), (co,), jnp.float32)
        params[f"bn{i}"] = (gamma, beta, mean, var)

    final_dim = num_frames // 8
    f_in = 256 * final_dim
    params["fc1"] = {
        "w": 0.05 * jax.random.normal(next(keys), (1024, f_in), jnp.float32),
        "b": 0.05 * jax.random.normal(next(keys), (1024,), jnp.float32),
    }
    params["fc2"] = {
        "w": 0.05 * jax.random.normal(next(keys), (output_classes, 1024), jnp.float32),
        "b": 0.05 * jax.random.normal(next(keys), (output_classes,), jnp.float32),
    }
    return params


def pack_params(params, num_frames, output_classes):
    # One-time prep: fold BN into scale/bias, transpose conv/fc weights,
    # fold the channel-major flatten into fc1's rows, pad fc2 to 128-lane multiple.
    assert num_frames % 8 == 0, "num_frames must be divisible by 8"
    kp = {}
    for i in (1, 2, 3):
        p = params[f"conv{i}"]
        gamma, beta, mean, var = params[f"bn{i}"]
        scale = gamma / jnp.sqrt(var + EPS)
        bias = beta + scale * (p["b"] - mean)
        kp[f"conv{i}"] = {
            "w": jnp.transpose(p["w_oik"], (2, 1, 0)),   # (K, Cin, Cout)
            "scale": scale.reshape(1, -1),
            "bias": bias.reshape(1, -1),
        }
    T3 = num_frames // 8
    C3 = 256
    F = C3 * T3
    # Kernel flattens (t, c) -> row t*C3+c; PyTorch flattens (c, t) -> row c*T3+t.
    w1t = params["fc1"]["w"].T                           # (F, 1024), rows c*T3+t
    r = jnp.arange(F)
    perm = (r % C3) * T3 + (r // C3)                     # row t*C3+c  ->  c*T3+t
    kp["fc1"] = {"w": w1t[perm, :], "b": params["fc1"]["b"].reshape(1, -1)}

    n_pad = ((output_classes + 127) // 128) * 128        # 250 -> 256 lanes
    w2t = jnp.pad(params["fc2"]["w"].T, ((0, 0), (0, n_pad - output_classes)))
    b2 = jnp.pad(params["fc2"]["b"], (0, n_pad - output_classes)).reshape(1, -1)
    kp["fc2"] = {"w": w2t, "b": b2}
    return kp


# ------------------------------ pure-JAX ref --------------------------------- #

def reference_forward(x_nct, params):
    x = x_nct
    for i in (1, 2, 3):
        p = params[f"conv{i}"]
        x = lax.conv_general_dilated(
            x, p["w_oik"], window_strides=(1,), padding=[(1, 1)],
            dimension_numbers=("NCH", "OIH", "NCH"))
        x = x + p["b"][None, :, None]
        gamma, beta, mean, var = params[f"bn{i}"]
        x = gamma[None, :, None] * (x - mean[None, :, None]) / \
            jnp.sqrt(var[None, :, None] + EPS) + beta[None, :, None]
        x = jnp.maximum(x, 0.0)
        B, C, T = x.shape
        x = jnp.max(x.reshape(B, C, T // 2, 2), axis=-1)
    x = x.reshape(x.shape[0], -1)
    x = jnp.maximum(x @ params["fc1"]["w"].T + params["fc1"]["b"], 0.0)
    return x @ params["fc2"]["w"].T + params["fc2"]["b"]


# ---------------------------------- main ------------------------------------- #

if __name__ == "__main__":
    num_landmarks = 4      # -> C_in = 8
    num_frames = 16        # -> final_dim = 2, fc1 input = 512
    output_classes = 250
    batch = 2

    key = jax.random.PRNGKey(0)
    k_param, k_x = jax.random.split(key)
    params = init_params(k_param, num_landmarks, num_frames, output_classes)
    kparams = pack_params(params, num_frames, output_classes)
    x = jax.random.normal(k_x, (batch, num_landmarks * 2, num_frames), jnp.float32)

    out = jax.block_until_ready(cnn1d_forward(x, kparams, output_classes))
    ref = jax.block_until_ready(reference_forward(x, params))

    assert out.shape == (batch, output_classes), out.shape
    assert jnp.allclose(out, ref, rtol=1e-3, atol=1e-3), \
        float(jnp.max(jnp.abs(out - ref)))
    print("KERNEL_OK")
</pallas_src>

<mosaic_0001>
module attributes {stable_mosaic.version = 11 : i64} {
  func.func @fused_cnn1d_kernel(%arg0: memref<2x16x8xf32, #tpu.memory_space<vmem>>, %arg1: memref<3x8x64xf32, #tpu.memory_space<vmem>>, %arg2: memref<1x64xf32, #tpu.memory_space<vmem>>, %arg3: memref<1x64xf32, #tpu.memory_space<vmem>>, %arg4: memref<3x64x128xf32, #tpu.memory_space<vmem>>, %arg5: memref<1x128xf32, #tpu.memory_space<vmem>>, %arg6: memref<1x128xf32, #tpu.memory_space<vmem>>, %arg7: memref<3x128x256xf32, #tpu.memory_space<vmem>>, %arg8: memref<1x256xf32, #tpu.memory_space<vmem>>, %arg9: memref<1x256xf32, #tpu.memory_space<vmem>>, %arg10: memref<512x1024xf32, #tpu.memory_space<vmem>>, %arg11: memref<1x1024xf32, #tpu.memory_space<vmem>>, %arg12: memref<1024x256xf32, #tpu.memory_space<vmem>>, %arg13: memref<1x256xf32, #tpu.memory_space<vmem>>, %arg14: memref<2x256xf32, #tpu.memory_space<vmem>>, %arg15: memref<36x8xf32, #tpu.memory_space<vmem>>, %arg16: memref<20x64xf32, #tpu.memory_space<vmem>>, %arg17: memref<12x128xf32, #tpu.memory_space<vmem>>, %arg18: memref<2x512xf32, #tpu.memory_space<vmem>>) attributes {dimension_semantics = [], scalar_prefetch = 0 : i64, scratch_operands = 4 : i64, tpu.core_type = #tpu.core_type<tc>} {
    %cst = arith.constant 0.000000e+00 : f32
    %0 = vector.broadcast %cst : f32 to vector<36x8xf32>
    %c0 = arith.constant 0 : index
    %c0_0 = arith.constant 0 : index
    %1 = vector.load %arg15[%c0, %c0_0] : memref<36x8xf32, #tpu.memory_space<vmem>>, vector<36x8xf32>
    tpu.vector_store %arg15[%c0, %c0_0], %0 {strides = array<i32>} : memref<36x8xf32, #tpu.memory_space<vmem>>, vector<36x8xf32>,
    %cst_1 = arith.constant 0.000000e+00 : f32
    %2 = vector.broadcast %cst_1 : f32 to vector<20x64xf32>
    %c0_2 = arith.constant 0 : index
    %c0_3 = arith.constant 0 : index
    %3 = vector.load %arg16[%c0_2, %c0_3] : memref<20x64xf32, #tpu.memory_space<vmem>>, vector<20x64xf32>
    tpu.vector_store %arg16[%c0_2, %c0_3], %2 {strides = array<i32>} : memref<20x64xf32, #tpu.memory_space<vmem>>, vector<20x64xf32>,
    %cst_4 = arith.constant 0.000000e+00 : f32
    %4 = vector.broadcast %cst_4 : f32 to vector<12x128xf32>
    %c0_5 = arith.constant 0 : index
    %c0_6 = arith.constant 0 : index
    %5 = vector.load %arg17[%c0_5, %c0_6] : memref<12x128xf32, #tpu.memory_space<vmem>>, vector<12x128xf32>
    tpu.vector_store %arg17[%c0_5, %c0_6], %4 {strides = array<i32>} : memref<12x128xf32, #tpu.memory_space<vmem>>, vector<12x128xf32>,
    %c0_7 = arith.constant 0 : index
    %c0_8 = arith.constant 0 : index
    %c0_9 = arith.constant 0 : index
    %6 = vector.load %arg0[%c0_7, %c0_8, %c0_9] : memref<2x16x8xf32, #tpu.memory_space<vmem>>, vector<1x16x8xf32>
    %7 = vector.shape_cast %6 : vector<1x16x8xf32> to vector<16x8xf32>
    %c1 = arith.constant 1 : index
    %c0_10 = arith.constant 0 : index
    %8 = vector.load %arg15[%c1, %c0_10] : memref<36x8xf32, #tpu.memory_space<vmem>>, vector<16x8xf32>
    tpu.vector_store %arg15[%c1, %c0_10], %7 {strides = array<i32>} : memref<36x8xf32, #tpu.memory_space<vmem>>, vector<16x8xf32>,
    %c1_11 = arith.constant 1 : index
    %c0_12 = arith.constant 0 : index
    %c0_13 = arith.constant 0 : index
    %9 = vector.load %arg0[%c1_11, %c0_12, %c0_13] : memref<2x16x8xf32, #tpu.memory_space<vmem>>, vector<1x16x8xf32>
    %10 = vector.shape_cast %9 : vector<1x16x8xf32> to vector<16x8xf32>
    %c19 = arith.constant 19 : index
    %c0_14 = arith.constant 0 : index
    %11 = vector.load %arg15[%c19, %c0_14] : memref<36x8xf32, #tpu.memory_space<vmem>>, vector<16x8xf32>
    tpu.vector_store %arg15[%c19, %c0_14], %10 {strides = array<i32>} : memref<36x8xf32, #tpu.memory_space<vmem>>, vector<16x8xf32>,
    %c0_15 = arith.constant 0 : index
    %c0_16 = arith.constant 0 : index
    %12 = vector.load %arg15[%c0_15, %c0_16] : memref<36x8xf32, #tpu.memory_space<vmem>>, vector<36x8xf32>
    %cst_17 = arith.constant 0.000000e+00 : f32
    %13 = vector.broadcast %cst_17 : f32 to vector<34x64xf32>
    %14 = vector.extract_strided_slice %12 {offsets = [0, 0], sizes = [34, 8], strides = [1, 1]} : vector<36x8xf32> to vector<34x8xf32>
    %c0_18 = arith.constant 0 : index
    %c0_19 = arith.constant 0 : index
    %c0_20 = arith.constant 0 : index
    %15 = vector.load %arg1[%c0_18, %c0_19, %c0_20] : memref<3x8x64xf32, #tpu.memory_space<vmem>>, vector<1x8x64xf32>
    %16 = vector.shape_cast %15 : vector<1x8x64xf32> to vector<8x64xf32>
    %cst_21 = arith.constant dense<0.000000e+00> : vector<34x64xf32>
    %17 = tpu.matmul %14, %16, %cst_21 {dimension_numbers = #tpu.dot_dimension_numbers<[1], [0], [0], [1], [0, 0, 1, 1], [], []>} : vector<34x8xf32>, vector<8x64xf32>, vector<34x64xf32> -> vector<34x64xf32>
    %18 = arith.addf %13, %17 : vector<34x64xf32>
    %19 = vector.extract_strided_slice %12 {offsets = [1, 0], sizes = [34, 8], strides = [1, 1]} : vector<36x8xf32> to vector<34x8xf32>
    %c1_22 = arith.constant 1 : index
    %c0_23 = arith.constant 0 : index
    %c0_24 = arith.constant 0 : index
    %20 = vector.load %arg1[%c1_22, %c0_23, %c0_24] : memref<3x8x64xf32, #tpu.memory_space<vmem>>, vector<1x8x64xf32>
    %21 = vector.shape_cast %20 : vector<1x8x64xf32> to vector<8x64xf32>
    %cst_25 = arith.constant dense<0.000000e+00> : vector<34x64xf32>
    %22 = tpu.matmul %19, %21, %cst_25 {dimension_numbers = #tpu.dot_dimension_numbers<[1], [0], [0], [1], [0, 0, 1, 1], [], []>} : vector<34x8xf32>, vector<8x64xf32>, vector<34x64xf32> -> vector<34x64xf32>
    %23 = arith.addf %18, %22 : vector<34x64xf32>
    %24 = vector.extract_strided_slice %12 {offsets = [2, 0], sizes = [34, 8], strides = [1, 1]} : vector<36x8xf32> to vector<34x8xf32>
    %c2 = arith.constant 2 : index
    %c0_26 = arith.constant 0 : index
    %c0_27 = arith.constant 0 : index
    %25 = vector.load %arg1[%c2, %c0_26, %c0_27] : memref<3x8x64xf32, #tpu.memory_space<vmem>>, vector<1x8x64xf32>
    %26 = vector.shape_cast %25 : vector<1x8x64xf32> to vector<8x64xf32>
    %cst_28 = arith.constant dense<0.000000e+00> : vector<34x64xf32>
    %27 = tpu.matmul %24, %26, %cst_28 {dimension_numbers = #tpu.dot_dimension_numbers<[1], [0], [0], [1], [0, 0, 1, 1], [], []>} : vector<34x8xf32>, vector<8x64xf32>, vector<34x64xf32> -> vector<34x64xf32>
    %28 = arith.addf %23, %27 : vector<34x64xf32>
    %c0_29 = arith.constant 0 : index
    %c0_30 = arith.constant 0 : index
    %29 = vector.load %arg2[%c0_29, %c0_30] : memref<1x64xf32, #tpu.memory_space<vmem>>, vector<1x64xf32>
    %30 = vector.shape_cast %29 : vector<1x64xf32> to vector<64xf32>
    %31 = vector.shape_cast %30 : vector<64xf32> to vector<1x64xf32>
    %32 = vector.broadcast %31 : vector<1x64xf32> to vector<34x64xf32>
    %33 = arith.mulf %28, %32 : vector<34x64xf32>
    %c0_31 = arith.constant 0 : index
    %c0_32 = arith.constant 0 : index
    %34 = vector.load %arg3[%c0_31, %c0_32] : memref<1x64xf32, #tpu.memory_space<vmem>>, vector<1x64xf32>
    %35 = vector.shape_cast %34 : vector<1x64xf32> to vector<64xf32>
    %36 = vector.shape_cast %35 : vector<64xf32> to vector<1x64xf32>
    %37 = vector.broadcast %36 : vector<1x64xf32> to vector<34x64xf32>
    %38 = arith.addf %33, %37 : vector<34x64xf32>
    %cst_33 = arith.constant 0.000000e+00 : f32
    %39 = vector.broadcast %cst_33 : f32 to vector<34x64xf32>
    %40 = arith.maximumf %38, %39 : vector<34x64xf32>
    %41 = vector.extract_strided_slice %40 {offsets = [0, 0], sizes = [16, 64], strides = [1, 1]} : vector<34x64xf32> to vector<16x64xf32>
    %42 = vector.shape_cast %41 : vector<16x64xf32> to vector<8x2x64xf32>
    %cst_34 = arith.constant dense<0xFF800000> : vector<8x64xf32>
    %43 = vector.multi_reduction <maximumf>, %42, %cst_34 [1] : vector<8x2x64xf32> to vector<8x64xf32>
    %c1_35 = arith.constant 1 : index
    %c0_36 = arith.constant 0 : index
    %44 = vector.load %arg16[%c1_35, %c0_36] : memref<20x64xf32, #tpu.memory_space<vmem>>, vector<8x64xf32>
    tpu.vector_store %arg16[%c1_35, %c0_36], %43 {strides = array<i32>} : memref<20x64xf32, #tpu.memory_space<vmem>>, vector<8x64xf32>,
    %45 = vector.extract_strided_slice %40 {offsets = [18, 0], sizes = [16, 64], strides = [1, 1]} : vector<34x64xf32> to vector<16x64xf32>
    %46 = vector.shape_cast %45 : vector<16x64xf32> to vector<8x2x64xf32>
    %cst_37 = arith.constant dense<0xFF800000> : vector<8x64xf32>
    %47 = vector.multi_reduction <maximumf>, %46, %cst_37 [1] : vector<8x2x64xf32> to vector<8x64xf32>
    %c11 = arith.constant 11 : index
    %c0_38 = arith.constant 0 : index
    %48 = vector.load %arg16[%c11, %c0_38] : memref<20x64xf32, #tpu.memory_space<vmem>>, vector<8x64xf32>
    tpu.vector_store %arg16[%c11, %c0_38], %47 {strides = array<i32>} : memref<20x64xf32, #tpu.memory_space<vmem>>, vector<8x64xf32>,
    %c0_39 = arith.constant 0 : index
    %c0_40 = arith.constant 0 : index
    %49 = vector.load %arg16[%c0_39, %c0_40] : memref<20x64xf32, #tpu.memory_space<vmem>>, vector<20x64xf32>
    %cst_41 = arith.constant 0.000000e+00 : f32
    %50 = vector.broadcast %cst_41 : f32 to vector<18x128xf32>
    %51 = vector.extract_strided_slice %49 {offsets = [0, 0], sizes = [18, 64], strides = [1, 1]} : vector<20x64xf32> to vector<18x64xf32>
    %c0_42 = arith.constant 0 : index
    %c0_43 = arith.constant 0 : index
    %c0_44 = arith.constant 0 : index
    %52 = vector.load %arg4[%c0_42, %c0_43, %c0_44] : memref<3x64x128xf32, #tpu.memory_space<vmem>>, vector<1x64x128xf32>
    %53 = vector.shape_cast %52 : vector<1x64x128xf32> to vector<64x128xf32>
    %cst_45 = arith.constant dense<0.000000e+00> : vector<18x128xf32>
    %54 = tpu.matmul %51, %53, %cst_45 {dimension_numbers = #tpu.dot_dimension_numbers<[1], [0], [0], [1], [0, 0, 1, 1], [], []>} : vector<18x64xf32>, vector<64x128xf32>, vector<18x128xf32> -> vector<18x128xf32>
    %55 = arith.addf %50, %54 : vector<18x128xf32>
    %56 = vector.extract_strided_slice %49 {offsets = [1, 0], sizes = [18, 64], strides = [1, 1]} : vector<20x64xf32> to vector<18x64xf32>
    %c1_46 = arith.constant 1 : index
    %c0_47 = arith.constant 0 : index
    %c0_48 = arith.constant 0 : index
    %57 = vector.load %arg4[%c1_46, %c0_47, %c0_48] : memref<3x64x128xf32, #tpu.memory_space<vmem>>, vector<1x64x128xf32>
    %58 = vector.shape_cast %57 : vector<1x64x128xf32> to vector<64x128xf32>
    %cst_49 = arith.constant dense<0.000000e+00> : vector<18x128xf32>
    %59 = tpu.matmul %56, %58, %cst_49 {dimension_numbers = #tpu.dot_dimension_numbers<[1], [0], [0], [1], [0, 0, 1, 1], [], []>} : vector<18x64xf32>, vector<64x128xf32>, vector<18x128xf32> -> vector<18x128xf32>
    %60 = arith.addf %55, %59 : vector<18x128xf32>
    %61 = vector.extract_strided_slice %49 {offsets = [2, 0], sizes = [18, 64], strides = [1, 1]} : vector<20x64xf32> to vector<18x64xf32>
    %c2_50 = arith.constant 2 : index
    %c0_51 = arith.constant 0 : index
    %c0_52 = arith.constant 0 : index
    %62 = vector.load %arg4[%c2_50, %c0_51, %c0_52] : memref<3x64x128xf32, #tpu.memory_space<vmem>>, vector<1x64x128xf32>
    %63 = vector.shape_cast %62 : vector<1x64x128xf32> to vector<64x128xf32>
    %cst_53 = arith.constant dense<0.000000e+00> : vector<18x128xf32>
    %64 = tpu.matmul %61, %63, %cst_53 {dimension_numbers = #tpu.dot_dimension_numbers<[1], [0], [0], [1], [0, 0, 1, 1], [], []>} : vector<18x64xf32>, vector<64x128xf32>, vector<18x128xf32> -> vector<18x128xf32>
    %65 = arith.addf %60, %64 : vector<18x128xf32>
    %c0_54 = arith.constant 0 : index
    %c0_55 = arith.constant 0 : index
    %66 = vector.load %arg5[%c0_54, %c0_55] : memref<1x128xf32, #tpu.memory_space<vmem>>, vector<1x128xf32>
    %67 = vector.shape_cast %66 : vector<1x128xf32> to vector<128xf32>
    %68 = vector.shape_cast %67 : vector<128xf32> to vector<1x128xf32>
    %69 = vector.broadcast %68 : vector<1x128xf32> to vector<18x128xf32>
    %70 = arith.mulf %65, %69 : vector<18x128xf32>
    %c0_56 = arith.constant 0 : index
    %c0_57 = arith.constant 0 : index
    %71 = vector.load %arg6[%c0_56, %c0_57] : memref<1x128xf32, #tpu.memory_space<vmem>>, vector<1x128xf32>
    %72 = vector.shape_cast %71 : vector<1x128xf32> to vector<128xf32>
    %73 = vector.shape_cast %72 : vector<128xf32> to vector<1x128xf32>
    %74 = vector.broadcast %73 : vector<1x128xf32> to vector<18x128xf32>
    %75 = arith.addf %70, %74 : vector<18x128xf32>
    %cst_58 = arith.constant 0.000000e+00 : f32
    %76 = vector.broadcast %cst_58 : f32 to vector<18x128xf32>
    %77 = arith.maximumf %75, %76 : vector<18x128xf32>
    %78 = vector.extract_strided_slice %77 {offsets = [0, 0], sizes = [8, 128], strides = [1, 1]} : vector<18x128xf32> to vector<8x128xf32>
    %79 = vector.shape_cast %78 : vector<8x128xf32> to vector<4x2x128xf32>
    %cst_59 = arith.constant dense<0xFF800000> : vector<4x128xf32>
    %80 = vector.multi_reduction <maximumf>, %79, %cst_59 [1] : vector<4x2x128xf32> to vector<4x128xf32>
    %c1_60 = arith.constant 1 : index
    %c0_61 = arith.constant 0 : index
    %81 = vector.load %arg17[%c1_60, %c0_61] : memref<12x128xf32, #tpu.memory_space<vmem>>, vector<4x128xf32>
    tpu.vector_store %arg17[%c1_60, %c0_61], %80 {strides = array<i32>} : memref<12x128xf32, #tpu.memory_space<vmem>>, vector<4x128xf32>,
    %82 = vector.extract_strided_slice %77 {offsets = [10, 0], sizes = [8, 128], strides = [1, 1]} : vector<18x128xf32> to vector<8x128xf32>
    %83 = vector.shape_cast %82 : vector<8x128xf32> to vector<4x2x128xf32>
    %cst_62 = arith.constant dense<0xFF800000> : vector<4x128xf32>
    %84 = vector.multi_reduction <maximumf>, %83, %cst_62 [1] : vector<4x2x128xf32> to vector<4x128xf32>
    %c7 = arith.constant 7 : index
    %c0_63 = arith.constant 0 : index
    %85 = vector.load %arg17[%c7, %c0_63] : memref<12x128xf32, #tpu.memory_space<vmem>>, vector<4x128xf32>
    tpu.vector_store %arg17[%c7, %c0_63], %84 {strides = array<i32>} : memref<12x128xf32, #tpu.memory_space<vmem>>, vector<4x128xf32>,
    %c0_64 = arith.constant 0 : index
    %c0_65 = arith.constant 0 : index
    %86 = vector.load %arg17[%c0_64, %c0_65] : memref<12x128xf32, #tpu.memory_space<vmem>>, vector<12x128xf32>
    %cst_66 = arith.constant 0.000000e+00 : f32
    %87 = vector.broadcast %cst_66 : f32 to vector<10x256xf32>
    %88 = vector.extract_strided_slice %86 {offsets = [0, 0], sizes = [10, 128], strides = [1, 1]} : vector<12x128xf32> to vector<10x128xf32>
    %c0_67 = arith.constant 0 : index
    %c0_68 = arith.constant 0 : index
    %c0_69 = arith.constant 0 : index
    %89 = vector.load %arg7[%c0_67, %c0_68, %c0_69] : memref<3x128x256xf32, #tpu.memory_space<vmem>>, vector<1x128x256xf32>
    %90 = vector.shape_cast %89 : vector<1x128x256xf32> to vector<128x256xf32>
    %cst_70 = arith.constant dense<0.000000e+00> : vector<10x256xf32>
    %91 = tpu.matmul %88, %90, %cst_70 {dimension_numbers = #tpu.dot_dimension_numbers<[1], [0], [0], [1], [0, 0, 1, 1], [], []>} : vector<10x128xf32>, vector<128x256xf32>, vector<10x256xf32> -> vector<10x256xf32>
    %92 = arith.addf %87, %91 : vector<10x256xf32>
    %93 = vector.extract_strided_slice %86 {offsets = [1, 0], sizes = [10, 128], strides = [1, 1]} : vector<12x128xf32> to vector<10x128xf32>
    %c1_71 = arith.constant 1 : index
    %c0_72 = arith.constant 0 : index
    %c0_73 = arith.constant 0 : index
    %94 = vector.load %arg7[%c1_71, %c0_72, %c0_73] : memref<3x128x256xf32, #tpu.memory_space<vmem>>, vector<1x128x256xf32>
    %95 = vector.shape_cast %94 : vector<1x128x256xf32> to vector<128x256xf32>
    %cst_74 = arith.constant dense<0.000000e+00> : vector<10x256xf32>
    %96 = tpu.matmul %93, %95, %cst_74 {dimension_numbers = #tpu.dot_dimension_numbers<[1], [0], [0], [1], [0, 0, 1, 1], [], []>} : vector<10x128xf32>, vector<128x256xf32>, vector<10x256xf32> -> vector<10x256xf32>
    %97 = arith.addf %92, %96 : vector<10x256xf32>
    %98 = vector.extract_strided_slice %86 {offsets = [2, 0], sizes = [10, 128], strides = [1, 1]} : vector<12x128xf32> to vector<10x128xf32>
    %c2_75 = arith.constant 2 : index
    %c0_76 = arith.constant 0 : index
    %c0_77 = arith.constant 0 : index
    %99 = vector.load %arg7[%c2_75, %c0_76, %c0_77] : memref<3x128x256xf32, #tpu.memory_space<vmem>>, vector<1x128x256xf32>
    %100 = vector.shape_cast %99 : vector<1x128x256xf32> to vector<128x256xf32>
    %cst_78 = arith.constant dense<0.000000e+00> : vector<10x256xf32>
    %101 = tpu.matmul %98, %100, %cst_78 {dimension_numbers = #tpu.dot_dimension_numbers<[1], [0], [0], [1], [0, 0, 1, 1], [], []>} : vector<10x128xf32>, vector<128x256xf32>, vector<10x256xf32> -> vector<10x256xf32>
    %102 = arith.addf %97, %101 : vector<10x256xf32>
    %c0_79 = arith.constant 0 : index
    %c0_80 = arith.constant 0 : index
    %103 = vector.load %arg8[%c0_79, %c0_80] : memref<1x256xf32, #tpu.memory_space<vmem>>, vector<1x256xf32>
    %104 = vector.shape_cast %103 : vector<1x256xf32> to vector<256xf32>
    %105 = vector.shape_cast %104 : vector<256xf32> to vector<1x256xf32>
    %106 = vector.broadcast %105 : vector<1x256xf32> to vector<10x256xf32>
    %107 = arith.mulf %102, %106 : vector<10x256xf32>
    %c0_81 = arith.constant 0 : index
    %c0_82 = arith.constant 0 : index
    %108 = vector.load %arg9[%c0_81, %c0_82] : memref<1x256xf32, #tpu.memory_space<vmem>>, vector<1x256xf32>
    %109 = vector.shape_cast %108 : vector<1x256xf32> to vector<256xf32>
    %110 = vector.shape_cast %109 : vector<256xf32> to vector<1x256xf32>
    %111 = vector.broadcast %110 : vector<1x256xf32> to vector<10x256xf32>
    %112 = arith.addf %107, %111 : vector<10x256xf32>
    %cst_83 = arith.constant 0.000000e+00 : f32
    %113 = vector.broadcast %cst_83 : f32 to vector<10x256xf32>
    %114 = arith.maximumf %112, %113 : vector<10x256xf32>
    %115 = vector.extract_strided_slice %114 {offsets = [0, 0], sizes = [4, 256], strides = [1, 1]} : vector<10x256xf32> to vector<4x256xf32>
    %116 = vector.shape_cast %115 : vector<4x256xf32> to vector<2x2x256xf32>
    %cst_84 = arith.constant dense<0xFF800000> : vector<2x256xf32>
    %117 = vector.multi_reduction <maximumf>, %116, %cst_84 [1] : vector<2x2x256xf32> to vector<2x256xf32>
    %118 = vector.extract_strided_slice %117 {offsets = [0, 0], sizes = [1, 256], strides = [1, 1]} : vector<2x256xf32> to vector<1x256xf32>
    %c0_85 = arith.constant 0 : index
    %c0_86 = arith.constant 0 : index
    %119 = vector.load %arg18[%c0_85, %c0_86] : memref<2x512xf32, #tpu.memory_space<vmem>>, vector<1x256xf32>
    tpu.vector_store %arg18[%c0_85, %c0_86], %118 {strides = array<i32>} : memref<2x512xf32, #tpu.memory_space<vmem>>, vector<1x256xf32>,
    %120 = vector.extract_strided_slice %117 {offsets = [1, 0], sizes = [1, 256], strides = [1, 1]} : vector<2x256xf32> to vector<1x256xf32>
    %c0_87 = arith.constant 0 : index
    %c256 = arith.constant 256 : index
    %121 = vector.load %arg18[%c0_87, %c256] : memref<2x512xf32, #tpu.memory_space<vmem>>, vector<1x256xf32>
    tpu.vector_store %arg18[%c0_87, %c256], %120 {strides = array<i32>} : memref<2x512xf32, #tpu.memory_space<vmem>>, vector<1x256xf32>,
    %122 = vector.extract_strided_slice %114 {offsets = [6, 0], sizes = [4, 256], strides = [1, 1]} : vector<10x256xf32> to vector<4x256xf32>
    %123 = vector.shape_cast %122 : vector<4x256xf32> to vector<2x2x256xf32>
    %cst_88 = arith.constant dense<0xFF800000> : vector<2x256xf32>
    %124 = vector.multi_reduction <maximumf>, %123, %cst_88 [1] : vector<2x2x256xf32> to vector<2x256xf32>
    %125 = vector.extract_strided_slice %124 {offsets = [0, 0], sizes = [1, 256], strides = [1, 1]} : vector<2x256xf32> to vector<1x256xf32>
    %c1_89 = arith.constant 1 : index
    %c0_90 = arith.constant 0 : index
    %126 = vector.load %arg18[%c1_89, %c0_90] : memref<2x512xf32, #tpu.memory_space<vmem>>, vector<1x256xf32>
    tpu.vector_store %arg18[%c1_89, %c0_90], %125 {strides = array<i32>} : memref<2x512xf32, #tpu.memory_space<vmem>>, vector<1x256xf32>,
    %127 = vector.extract_strided_slice %124 {offsets = [1, 0], sizes = [1, 256], strides = [1, 1]} : vector<2x256xf32> to vector<1x256xf32>
    %c1_91 = arith.constant 1 : index
    %c256_92 = arith.constant 256 : index
    %128 = vector.load %arg18[%c1_91, %c256_92] : memref<2x512xf32, #tpu.memory_space<vmem>>, vector<1x256xf32>
    tpu.vector_store %arg18[%c1_91, %c256_92], %127 {strides = array<i32>} : memref<2x512xf32, #tpu.memory_space<vmem>>, vector<1x256xf32>,
    %c0_93 = arith.constant 0 : index
    %c0_94 = arith.constant 0 : index
    %129 = vector.load %arg18[%c0_93, %c0_94] : memref<2x512xf32, #tpu.memory_space<vmem>>, vector<2x512xf32>
    %c0_95 = arith.constant 0 : index
    %c0_96 = arith.constant 0 : index
    %130 = vector.load %arg10[%c0_95, %c0_96] : memref<512x1024xf32, #tpu.memory_space<vmem>>, vector<512x1024xf32>
    %cst_97 = arith.constant dense<0.000000e+00> : vector<2x1024xf32>
    %131 = tpu.matmul %129, %130, %cst_97 {dimension_numbers = #tpu.dot_dimension_numbers<[1], [0], [0], [1], [0, 0, 1, 1], [], []>} : vector<2x512xf32>, vector<512x1024xf32>, vector<2x1024xf32> -> vector<2x1024xf32>
    %c0_98 = arith.constant 0 : index
    %c0_99 = arith.constant 0 : index
    %132 = vector.load %arg11[%c0_98, %c0_99] : memref<1x1024xf32, #tpu.memory_space<vmem>>, vector<1x1024xf32>
    %133 = vector.broadcast %132 : vector<1x1024xf32> to vector<2x1024xf32>
    %134 = arith.addf %131, %133 : vector<2x1024xf32>
    %cst_100 = arith.constant 0.000000e+00 : f32
    %135 = vector.broadcast %cst_100 : f32 to vector<2x1024xf32>
    %136 = arith.maximumf %134, %135 : vector<2x1024xf32>
    %c0_101 = arith.constant 0 : index
    %c0_102 = arith.constant 0 : index
    %137 = vector.load %arg12[%c0_101, %c0_102] : memref<1024x256xf32, #tpu.memory_space<vmem>>, vector<1024x256xf32>
    %cst_103 = arith.constant dense<0.000000e+00> : vector<2x256xf32>
    %138 = tpu.matmul %136, %137, %cst_103 {dimension_numbers = #tpu.dot_dimension_numbers<[1], [0], [0], [1], [0, 0, 1, 1], [], []>} : vector<2x1024xf32>, vector<1024x256xf32>, vector<2x256xf32> -> vector<2x256xf32>
    %c0_104 = arith.constant 0 : index
    %c0_105 = arith.constant 0 : index
    %139 = vector.load %arg13[%c0_104, %c0_105] : memref<1x256xf32, #tpu.memory_space<vmem>>, vector<1x256xf32>
    %140 = vector.broadcast %139 : vector<1x256xf32> to vector<2x256xf32>
    %141 = arith.addf %138, %140 : vector<2x256xf32>
    %c0_106 = arith.constant 0 : index
    %c0_107 = arith.constant 0 : index
    %142 = vector.load %arg14[%c0_106, %c0_107] : memref<2x256xf32, #tpu.memory_space<vmem>>, vector<2x256xf32>
    tpu.vector_store %arg14[%c0_106, %c0_107], %141 {strides = array<i32>} : memref<2x256xf32, #tpu.memory_space<vmem>>, vector<2x256xf32>,
    return
  }
}

</mosaic_0001>

<llo_original>
// kernel: cnn1d_forward.1
$region0: #{cnn1d_forward.1}
  #allocation0 [shape = 'u32[]', space=smem, size = 0x4, offset = 0x4, fixed_abs, tag = 'smem constant byte address 0x4 - core index']
  #allocation1 [shape = 'u32[144,128]{1,0:T(1,128)}', space=vmem, size = 0x12000, scoped, tag = 'internal scratch']
  #allocation2 [shape = 'f32[36,8]{1,0:T(8,128)}', space=vmem, size = 0x5000, scoped, tag = 'scratch operand']
  #allocation3 [shape = 'f32[20,64]{1,0:T(8,128)}', space=vmem, size = 0x3000, scoped, tag = 'scratch operand']
  #allocation4 [shape = 'f32[12,128]{1,0:T(8,128)}', space=vmem, size = 0x2000, scoped, tag = 'scratch operand']
  #allocation5 [shape = 'f32[2,512]{1,0:T(2,128)}', space=vmem, size = 0x1000, scoped, tag = 'scratch operand']
  %s0 = inlined_call_operand.vmem [shape: f32[2,16,8], index: 0, kind: input, shape index: {}]
  %s1 = inlined_call_operand.hbm [shape: f32[3,8,64], index: 1, kind: input, shape index: {}]
  %s2 = inlined_call_operand.hbm [shape: f32[1,64], index: 2, kind: input, shape index: {}]
  %s3 = inlined_call_operand.hbm [shape: f32[1,64], index: 3, kind: input, shape index: {}]
  %s4 = inlined_call_operand.hbm [shape: f32[3,64,128], index: 4, kind: input, shape index: {}]
  %s5 = inlined_call_operand.hbm [shape: f32[1,128], index: 5, kind: input, shape index: {}]
  %s6 = inlined_call_operand.hbm [shape: f32[1,128], index: 6, kind: input, shape index: {}]
  %s7 = inlined_call_operand.hbm [shape: f32[3,128,256], index: 7, kind: input, shape index: {}]
  %s8 = inlined_call_operand.hbm [shape: f32[1,256], index: 8, kind: input, shape index: {}]
  %s9 = inlined_call_operand.hbm [shape: f32[1,256], index: 9, kind: input, shape index: {}]
  %s10 = inlined_call_operand.hbm [shape: f32[512,1024], index: 10, kind: input, shape index: {}]
  %s11 = inlined_call_operand.hbm [shape: f32[1,1024], index: 11, kind: input, shape index: {}]
  %s12 = inlined_call_operand.hbm [shape: f32[1024,256], index: 12, kind: input, shape index: {}]
  %s13 = inlined_call_operand.hbm [shape: f32[1,256], index: 13, kind: input, shape index: {}]
  %s14 = inlined_call_operand.hbm [shape: f32[2,256], index: 14, kind: output, shape index: {}]
  %s15 = sld [smem:[#allocation0]]
  $region118: #{cnn1d_forward.1} parent=0
    _
  %s17 = ssub.s32 1, %s15
  %s18 = scalar_select 0, %s17, %s15
  $region1: #{cnn1d_forward.1} parent=0
    #allocation6 [shape = 'u8[12288]{0}', space=vmem, size = 0x3000, scoped, tag = 'input window, operand 1, single buffered']
    #allocation7 [shape = 's32[1]{0}', space=sflag, size = 0x4, scoped, tag = 'scoped memory for cnn1d_forward.1']
    #allocation8 [shape = 's32[1]{0}', space=sflag, size = 0x4, scoped, tag = 'scoped memory for cnn1d_forward.1']
    #allocation9 [shape = 'u8[512]{0}', space=vmem, size = 0x400, scoped, tag = 'input window, operand 2, single buffered']
    #allocation10 [shape = 's32[1]{0}', space=sflag, size = 0x4, scoped, tag = 'scoped memory for cnn1d_forward.1']
    #allocation11 [shape = 'u8[512]{0}', space=vmem, size = 0x400, scoped, tag = 'input window, operand 3, single buffered']
    #allocation12 [shape = 'u8[98304]{0}', space=vmem, size = 0x18000, scoped, tag = 'input window, operand 4, single buffered']
    #allocation13 [shape = 's32[1]{0}', space=sflag, size = 0x4, scoped, tag = 'scoped memory for cnn1d_forward.1']
    #allocation14 [shape = 'u8[512]{0}', space=vmem, size = 0x400, scoped, tag = 'input window, operand 5, single buffered']
    #allocation15 [shape = 'u8[512]{0}', space=vmem, size = 0x400, scoped, tag = 'input window, operand 6, single buffered']
    #allocation16 [shape = 's32[1]{0}', space=sflag, size = 0x4, scoped, tag = 'scoped memory for cnn1d_forward.1']
    #allocation17 [shape = 'u8[393216]{0}', space=vmem, size = 0x60000, scoped, tag = 'input window, operand 7, single buffered']
    #allocation18 [shape = 'u8[1024]{0}', space=vmem, size = 0x400, scoped, tag = 'input window, operand 8, single buffered']
    #allocation19 [shape = 's32[1]{0}', space=sflag, size = 0x4, scoped, tag = 'scoped memory for cnn1d_forward.1']
    #allocation20 [shape = 'u8[1024]{0}', space=vmem, size = 0x400, scoped, tag = 'input window, operand 9, single buffered']
    #allocation21 [shape = 'u8[2097152]{0}', space=vmem, size = 0x200000, scoped, tag = 'input window, operand 10, single buffered']
    #allocation22 [shape = 's32[1]{0}', space=sflag, size = 0x4, scoped, tag = 'scoped memory for cnn1d_forward.1']
    #allocation23 [shape = 'u8[4096]{0}', space=vmem, size = 0x1000, scoped, tag = 'input window, operand 11, single buffered']
    #allocation24 [shape = 'u8[1048576]{0}', space=vmem, size = 0x100000, scoped, tag = 'input window, operand 12, single buffered']
    #allocation25 [shape = 's32[1]{0}', space=sflag, size = 0x4, scoped, tag = 'scoped memory for cnn1d_forward.1']
    #allocation26 [shape = 'u8[1024]{0}', space=vmem, size = 0x400, scoped, tag = 'input window, operand 13, single buffered']
    #allocation27 [shape = 'u8[2048]{0}', space=vmem, size = 0x800, scoped, tag = 'output window, operand 0, single buffered']
    %19 = vsyncpa [#allocation7], 0
    %20 = vsyncpa [#allocation10], 0
    %21 = vsyncpa [#allocation13], 0
    %22 = vsyncpa [#allocation16], 0
    %23 = vsyncpa [#allocation19], 0
    %24 = vsyncpa [#allocation22], 0
    %25 = vsyncpa [#allocation25], 0
    %26 = vsyncpa [#allocation8], 0
    // Predicated region
    $region2: #{cnn1d_forward.1} parent=1 // pred_check
      _
    $region3: #{cnn1d_forward.1} parent=1 // pred_check_branch
      %28 = sbr.rel (0) target = $region5
    $region4: #{cnn1d_forward.1} parent=1 // pred_region
      _
    $region5: #{cnn1d_forward.1} parent=1 // pred_fallthru
      _
    // Predicated region
    $region6: #{cnn1d_forward.1} parent=1 // pred_check
      _
    $region7: #{cnn1d_forward.1} parent=1 // pred_check_branch
      %30 = sbr.rel (0) target = $region9
    $region8: #{cnn1d_forward.1} parent=1 // pred_region
      %s32 = ssub.s32 384, 384
      %33 = vsyncadd [#allocation7], %s32
      %s34 = sshll.u32 [#allocation6], 4
      %s35 = int_to_ptr.vmem [resolvable:$true] %s34
      %40 = dma.hbm_to_vmem [thread:$0]  %s1, 384, %s35, [#allocation7], 128, 128, 8
    $region9: #{cnn1d_forward.1} parent=1 // pred_fallthru
      _
    // Predicated region
    $region10: #{cnn1d_forward.1} parent=1 // pred_check
      _
    $region11: #{cnn1d_forward.1} parent=1 // pred_check_branch
      %42 = sbr.rel (0) target = $region13
    $region12: #{cnn1d_forward.1} parent=1 // pred_region
      %s44 = ssub.s32 16, 16
      %45 = vsyncadd [#allocation10], %s44
      %s47 = sshll.u32 [#allocation9], 4
      %s48 = int_to_ptr.vmem [resolvable:$true] %s47
      %50 = dma.hbm_to_vmem [thread:$0]  %s2, 16, %s48, [#allocation10]
    $region13: #{cnn1d_forward.1} parent=1 // pred_fallthru
      _
    // Predicated region
    $region14: #{cnn1d_forward.1} parent=1 // pred_check
      _
    $region15: #{cnn1d_forward.1} parent=1 // pred_check_branch
      %52 = sbr.rel (0) target = $region17
    $region16: #{cnn1d_forward.1} parent=1 // pred_region
      %s54 = ssub.s32 16, 16
      %55 = vsyncadd [#allocation10], %s54
      %s57 = sshll.u32 [#allocation11], 4
      %s58 = int_to_ptr.vmem [resolvable:$true] %s57
      %60 = dma.hbm_to_vmem [thread:$0]  %s3, 16, %s58, [#allocation10]
    $region17: #{cnn1d_forward.1} parent=1 // pred_fallthru
      _
    // Predicated region
    $region18: #{cnn1d_forward.1} parent=1 // pred_check
      _
    $region19: #{cnn1d_forward.1} parent=1 // pred_check_branch
      %62 = sbr.rel (0) target = $region21
    $region20: #{cnn1d_forward.1} parent=1 // pred_region
      %s64 = ssub.s32 3072, 3072
      %65 = vsyncadd [#allocation13], %s64
      %s66 = sshll.u32 [#allocation12], 4
      %s67 = int_to_ptr.vmem [resolvable:$true] %s66
      %72 = dma.hbm_to_vmem [thread:$0]  %s4, 3072, %s67, [#allocation13], 128, 128, 8
    $region21: #{cnn1d_forward.1} parent=1 // pred_fallthru
      _
    // Predicated region
    $region22: #{cnn1d_forward.1} parent=1 // pred_check
      _
    $region23: #{cnn1d_forward.1} parent=1 // pred_check_branch
      %74 = sbr.rel (0) target = $region25
    $region24: #{cnn1d_forward.1} parent=1 // pred_region
      %s76 = ssub.s32 16, 16
      %77 = vsyncadd [#allocation13], %s76
      %s79 = sshll.u32 [#allocation14], 4
      %s80 = int_to_ptr.vmem [resolvable:$true] %s79
      %82 = dma.hbm_to_vmem [thread:$0]  %s5, 16, %s80, [#allocation13]
    $region25: #{cnn1d_forward.1} parent=1 // pred_fallthru
      _
    // Predicated region
    $region26: #{cnn1d_forward.1} parent=1 // pred_check
      _
    $region27: #{cnn1d_forward.1} parent=1 // pred_check_branch
      %84 = sbr.rel (0) target = $region29
    $region28: #{cnn1d_forward.1} parent=1 // pred_region
      %s86 = ssub.s32 16, 16
      %87 = vsyncadd [#allocation16], %s86
      %s89 = sshll.u32 [#allocation15], 4
      %s90 = int_to_ptr.vmem [resolvable:$true] %s89
      %92 = dma.hbm_to_vmem [thread:$0]  %s6, 16, %s90, [#allocation16]
    $region29: #{cnn1d_forward.1} parent=1 // pred_fallthru
      _
    // Predicated region
    $region30: #{cnn1d_forward.1} parent=1 // pred_check
      _
    $region31: #{cnn1d_forward.1} parent=1 // pred_check_branch
      %94 = sbr.rel (0) target = $region33
    $region32: #{cnn1d_forward.1} parent=1 // pred_region
      %s96 = ssub.s32 12288, 12288
      %97 = vsyncadd [#allocation16], %s96
      %s98 = sshll.u32 [#allocation17], 4
      %s99 = int_to_ptr.vmem [resolvable:$true] %s98
      %104 = dma.hbm_to_vmem [thread:$0]  %s7, 12288, %s99, [#allocation16], 256, 256, 16
    $region33: #{cnn1d_forward.1} parent=1 // pred_fallthru
      _
    // Predicated region
    $region34: #{cnn1d_forward.1} parent=1 // pred_check
      _
    $region35: #{cnn1d_forward.1} parent=1 // pred_check_branch
      %106 = sbr.rel (0) target = $region37
    $region36: #{cnn1d_forward.1} parent=1 // pred_region
      %s108 = ssub.s32 32, 32
      %109 = vsyncadd [#allocation19], %s108
      %s111 = sshll.u32 [#allocation18], 4
      %s112 = int_to_ptr.vmem [resolvable:$true] %s111
      %114 = dma.hbm_to_vmem [thread:$0]  %s8, 32, %s112, [#allocation19]
    $region37: #{cnn1d_forward.1} parent=1 // pred_fallthru
      _
    // Predicated region
    $region38: #{cnn1d_forward.1} parent=1 // pred_check
      _
    $region39: #{cnn1d_forward.1} parent=1 // pred_check_branch
      %116 = sbr.rel (0) target = $region41
    $region40: #{cnn1d_forward.1} parent=1 // pred_region
      %s118 = ssub.s32 32, 32
      %119 = vsyncadd [#allocation19], %s118
      %s121 = sshll.u32 [#allocation20], 4
      %s122 = int_to_ptr.vmem [resolvable:$true] %s121
      %124 = dma.hbm_to_vmem [thread:$0]  %s9, 32, %s122, [#allocation19]
    $region41: #{cnn1d_forward.1} parent=1 // pred_fallthru
      _
    // Predicated region
    $region42: #{cnn1d_forward.1} parent=1 // pred_check
      _
    $region43: #{cnn1d_forward.1} parent=1 // pred_check_branch
      %126 = sbr.rel (0) target = $region45
    $region44: #{cnn1d_forward.1} parent=1 // pred_region
      %s128 = ssub.s32 65536, 65536
      %129 = vsyncadd [#allocation22], %s128
      %s130 = sshll.u32 [#allocation21], 4
      %s131 = int_to_ptr.vmem [resolvable:$true] %s130
      %136 = dma.hbm_to_vmem [thread:$0]  %s10, 65536, %s131, [#allocation22], 1024, 1024, 64
    $region45: #{cnn1d_forward.1} parent=1 // pred_fallthru
      _
    // Predicated region
    $region46: #{cnn1d_forward.1} parent=1 // pred_check
      _
    $region47: #{cnn1d_forward.1} parent=1 // pred_check_branch
      %138 = sbr.rel (0) target = $region49
    $region48: #{cnn1d_forward.1} parent=1 // pred_region
      %s140 = ssub.s32 128, 128
      %141 = vsyncadd [#allocation22], %s140
      %s143 = sshll.u32 [#allocation23], 4
      %s144 = int_to_ptr.vmem [resolvable:$true] %s143
      %146 = dma.hbm_to_vmem [thread:$0]  %s11, 128, %s144, [#allocation22]
    $region49: #{cnn1d_forward.1} parent=1 // pred_fallthru
      _
    // Predicated region
    $region50: #{cnn1d_forward.1} parent=1 // pred_check
      _
    $region51: #{cnn1d_forward.1} parent=1 // pred_check_branch
      %148 = sbr.rel (0) target = $region53
    $region52: #{cnn1d_forward.1} parent=1 // pred_region
      %s150 = ssub.s32 32768, 32768
      %151 = vsyncadd [#allocation25], %s150
      %s152 = sshll.u32 [#allocation24], 4
      %s153 = int_to_ptr.vmem [resolvable:$true] %s152
      %158 = dma.hbm_to_vmem [thread:$0]  %s12, 32768, %s153, [#allocation25], 256, 256, 16
    $region53: #{cnn1d_forward.1} parent=1 // pred_fallthru
      _
    // Predicated region
    $region54: #{cnn1d_forward.1} parent=1 // pred_check
      _
    $region55: #{cnn1d_forward.1} parent=1 // pred_check_branch
      %160 = sbr.rel (0) target = $region57
    $region56: #{cnn1d_forward.1} parent=1 // pred_region
      %s162 = ssub.s32 32, 32
      %163 = vsyncadd [#allocation25], %s162
      %s165 = sshll.u32 [#allocation26], 4
      %s166 = int_to_ptr.vmem [resolvable:$true] %s165
      %168 = dma.hbm_to_vmem [thread:$0]  %s13, 32, %s166, [#allocation25]
    $region57: #{cnn1d_forward.1} parent=1 // pred_fallthru
      _
    // Predicated region
    $region58: #{cnn1d_forward.1} parent=1 // pred_check
      _
    $region59: #{cnn1d_forward.1} parent=1 // pred_check_branch
      %170 = sbr.rel (0) target = $region61
    $region60: #{cnn1d_forward.1} parent=1 // pred_region
      %171 = dma.done [#allocation7], 384
    $region61: #{cnn1d_forward.1} parent=1 // pred_fallthru
      _
    // Predicated region
    $region62: #{cnn1d_forward.1} parent=1 // pred_check
      _
    $region63: #{cnn1d_forward.1} parent=1 // pred_check_branch
      %173 = sbr.rel (0) target = $region65
    $region64: #{cnn1d_forward.1} parent=1 // pred_region
      %174 = dma.done [#allocation10], 16
    $region65: #{cnn1d_forward.1} parent=1 // pred_fallthru
      _
    // Predicated region
    $region66: #{cnn1d_forward.1} parent=1 // pred_check
      _
    $region67: #{cnn1d_forward.1} parent=1 // pred_check_branch
      %176 = sbr.rel (0) target = $region69
    $region68: #{cnn1d_forward.1} parent=1 // pred_region
      %177 = dma.done [#allocation10], 16
    $region69: #{cnn1d_forward.1} parent=1 // pred_fallthru
      _
    // Predicated region
    $region70: #{cnn1d_forward.1} parent=1 // pred_check
      _
    $region71: #{cnn1d_forward.1} parent=1 // pred_check_branch
      %179 = sbr.rel (0) target = $region73
    $region72: #{cnn1d_forward.1} parent=1 // pred_region
      %180 = dma.done [#allocation13], 3072
    $region73: #{cnn1d_forward.1} parent=1 // pred_fallthru
      _
    // Predicated region
    $region74: #{cnn1d_forward.1} parent=1 // pred_check
      _
    $region75: #{cnn1d_forward.1} parent=1 // pred_check_branch
      %182 = sbr.rel (0) target = $region77
    $region76: #{cnn1d_forward.1} parent=1 // pred_region
      %183 = dma.done [#allocation13], 16
    $region77: #{cnn1d_forward.1} parent=1 // pred_fallthru
      _
    // Predicated region
    $region78: #{cnn1d_forward.1} parent=1 // pred_check
      _
    $region79: #{cnn1d_forward.1} parent=1 // pred_check_branch
      %185 = sbr.rel (0) target = $region81
    $region80: #{cnn1d_forward.1} parent=1 // pred_region
      %186 = dma.done [#allocation16], 16
    $region81: #{cnn1d_forward.1} parent=1 // pred_fallthru
      _
    // Predicated region
    $region82: #{cnn1d_forward.1} parent=1 // pred_check
      _
    $region83: #{cnn1d_forward.1} parent=1 // pred_check_branch
      %188 = sbr.rel (0) target = $region85
    $region84: #{cnn1d_forward.1} parent=1 // pred_region
      %189 = dma.done [#allocation16], 12288
    $region85: #{cnn1d_forward.1} parent=1 // pred_fallthru
      _
    // Predicated region
    $region86: #{cnn1d_forward.1} parent=1 // pred_check
      _
    $region87: #{cnn1d_forward.1} parent=1 // pred_check_branch
      %191 = sbr.rel (0) target = $region89
    $region88: #{cnn1d_forward.1} parent=1 // pred_region
      %192 = dma.done [#allocation19], 32
    $region89: #{cnn1d_forward.1} parent=1 // pred_fallthru
      _
    // Predicated region
    $region90: #{cnn1d_forward.1} parent=1 // pred_check
      _
    $region91: #{cnn1d_forward.1} parent=1 // pred_check_branch
      %194 = sbr.rel (0) target = $region93
    $region92: #{cnn1d_forward.1} parent=1 // pred_region
      %195 = dma.done [#allocation19], 32
    $region93: #{cnn1d_forward.1} parent=1 // pred_fallthru
      _
    // Predicated region
    $region94: #{cnn1d_forward.1} parent=1 // pred_check
      _
    $region95: #{cnn1d_forward.1} parent=1 // pred_check_branch
      %197 = sbr.rel (0) target = $region97
    $region96: #{cnn1d_forward.1} parent=1 // pred_region
      %198 = dma.done [#allocation22], 65536
    $region97: #{cnn1d_forward.1} parent=1 // pred_fallthru
      _
    // Predicated region
    $region98: #{cnn1d_forward.1} parent=1 // pred_check
      _
    $region99: #{cnn1d_forward.1} parent=1 // pred_check_branch
      %200 = sbr.rel (0) target = $region101
    $region100: #{cnn1d_forward.1} parent=1 // pred_region
      %201 = dma.done [#allocation22], 128
    $region101: #{cnn1d_forward.1} parent=1 // pred_fallthru
      _
    // Predicated region
    $region102: #{cnn1d_forward.1} parent=1 // pred_check
      _
    $region103: #{cnn1d_forward.1} parent=1 // pred_check_branch
      %203 = sbr.rel (0) target = $region105
    $region104: #{cnn1d_forward.1} parent=1 // pred_region
      %204 = dma.done [#allocation25], 32768
    $region105: #{cnn1d_forward.1} parent=1 // pred_fallthru
      _
    // Predicated region
    $region106: #{cnn1d_forward.1} parent=1 // pred_check
      _
    $region107: #{cnn1d_forward.1} parent=1 // pred_check_branch
      %206 = sbr.rel (0) target = $region109
    $region108: #{cnn1d_forward.1} parent=1 // pred_region
      %207 = dma.done [#allocation25], 32
    $region109: #{cnn1d_forward.1} parent=1 // pred_fallthru
      _
    %vm208 = vcmask 64512
    %209 = vst.msk [vmem:[#allocation2] sm:$0xff] %vm208, 0.0
    %210 = vst.msk [vmem:[#allocation2 + $0x8] sm:$0xff] %vm208, 0.0
    %211 = vst.msk [vmem:[#allocation2 + $0x10] sm:$0xff] %vm208, 0.0
    %212 = vst.msk [vmem:[#allocation2 + $0x18] sm:$0xff] %vm208, 0.0
    %vm213 = vcmask 60416
    %214 = vst.msk [vmem:[#allocation2 + $0x20] sm:$0xf] %vm213, 0.0
    %vm215 = vcmask 523264
    %216 = vst.msk [vmem:[#allocation3] sm:$0xff] %vm215, 0.0
    %217 = vst.msk [vmem:[#allocation3 + $0x8] sm:$0xff] %vm215, 0.0
    %vm218 = vcmask 519168
    %219 = vst.msk [vmem:[#allocation3 + $0x10] sm:$0xf] %vm218, 0.0
    %220 = vst [vmem:[#allocation4] sm:$0xff] 0.0
    %221 = vst [vmem:[#allocation4 + $0x8] sm:$0xf] 0.0
    %v222 = vld [vmem:[%s0] sm:$0xff]
    %v223 = vld [vmem:[%s0 + $0x8] sm:$0xff]
    %224 = vst.msk [vmem:[#allocation2 + $0x1] sm:$0xff] %vm208, %v222
    %225 = vst.msk [vmem:[#allocation2 + $0x9] sm:$0xff] %vm208, %v223
    %s226 = scalar_lea.vmem %s0, 16
    %v227 = vld [vmem:[%s226] sm:$0xff]
    %v228 = vld [vmem:[%s226 + $0x8] sm:$0xff]
    %229 = vst.msk [vmem:[#allocation2 + $0x13] sm:$0xff] %vm208, %v227
    %230 = vst.msk [vmem:[#allocation2 + $0x1b] sm:$0xff] %vm208, %v228
    %v231 = vld [vmem:[#allocation2] sm:$0xff]
    %v232 = vld [vmem:[#allocation2 + $0x8] sm:$0xff]
    %v233 = vld [vmem:[#allocation2 + $0x10] sm:$0xff]
    %v234 = vld [vmem:[#allocation2 + $0x18] sm:$0xff]
    %v235 = vld [vmem:[#allocation2 + $0x20] sm:$0xf]
    %v236 = vld [vmem:[#allocation6] sm:$0xff]
    %s237 = scalar_lea.vmem [#allocation6], 8
    %v238 = vld [vmem:[%s237] sm:$0xff]
    %vm244 = vcmask 1046528
    %v245 = vrot.slane %v231, 1
    %v246 = vrot.slane %v232, 1
    %v247 = vsel %vm244, %v245, %v246
    %v248 = vrot.slane %v233, 1
    %v249 = vsel %vm244, %v246, %v248
    %v250 = vrot.slane %v234, 1
    %v251 = vsel %vm244, %v248, %v250
    %v252 = vrot.slane %v235, 1
    %v253 = vsel %vm244, %v250, %v252
    %v254 = vsel %vm208, %v247, 0
    %v256 = vsel %vm208, %v249, 0
    %v258 = vsel %vm208, %v251, 0
    %v260 = vsel %vm208, %v253, 0
    %v262 = vsel %vm208, %v252, 0
    %264 = vmatprep.subr.mxu0 0.0
    %265 = vmatpush1.msra.mxu0 %v238
    %266 = vmatprep.subr.mxu0 0.0
    %267 = vmatpush1.msra.mxu0 0.0
    %268 = vmatprep.subr.mxu0 0.0
    %269 = vmatpush1.msra.mxu0 0.0
    %270 = vmatprep.subr.mxu0 0.0
    %271 = vmatpush1.msra.mxu0 0.0
    %272 = vmatprep.subr.mxu0 0.0
    %273 = vmatpush1.msra.mxu0 0.0
    %274 = vmatprep.subr.mxu0 0.0
    %275 = vmatpush1.msra.mxu0 0.0
    %276 = vmatprep.subr.mxu0 0.0
    %277 = vmatpush1.msra.mxu0 0.0
    %278 = vmatprep.subr.mxu0 0.0
    %279 = vmatpush1.msra.mxu0 0.0
    %280 = vmatprep.subr.mxu0 0.0
    %281 = vmatpush1.msra.mxu0 0.0
    %282 = vmatprep.subr.mxu0 0.0
    %283 = vmatpush1.msra.mxu0 0.0
    %284 = vmatprep.subr.mxu0 0.0
    %285 = vmatpush1.msra.mxu0 0.0
    %286 = vmatprep.subr.mxu0 0.0
    %287 = vmatpush1.msra.mxu0 0.0
    %288 = vmatprep.subr.mxu0 0.0
    %289 = vmatpush1.msra.mxu0 0.0
    %290 = vmatprep.subr.mxu0 0.0
    %291 = vmatpush1.msra.mxu0 0.0
    %292 = vmatprep.subr.mxu0 0.0
    %293 = vmatpush1.msra.mxu0 0.0
    %294 = vmatprep.subr.mxu0 0.0
    %295 = vmatpush1.msra.mxu0 0.0
    %296 = vmatprep.subr.mxu0 0.0
    %297 = vmatpush1.msra.mxu0 0.0
    %298 = vmatprep.subr.mxu0 0.0
    %299 = vmatpush1.msra.mxu0 0.0
    %300 = vmatprep.subr.mxu0 0.0
    %301 = vmatpush1.msra.mxu0 0.0
    %302 = vmatprep.subr.mxu0 0.0
    %303 = vmatpush1.msra.mxu0 0.0
    %304 = vmatprep.subr.mxu0 0.0
    %305 = vmatpush1.msra.mxu0 0.0
    %306 = vmatprep.subr.mxu0 0.0
    %307 = vmatpush1.msra.mxu0 0.0
    %308 = vmatprep.subr.mxu0 0.0
    %309 = vmatpush1.msra.mxu0 0.0
    %310 = vmatprep.subr.mxu0 0.0
    %311 = vmatpush1.msra.mxu0 0.0
    %312 = vmatprep.subr.mxu0 0.0
    %313 = vmatpush1.msra.mxu0 0.0
    %314 = vmatprep.subr.mxu0 0.0
    %315 = vmatpush1.msra.mxu0 0.0
    %316 = vmatprep.subr.mxu0 0.0
    %317 = vmatpush1.msra.mxu0 0.0
    %318 = vmatprep.subr.mxu0 0.0
    %319 = vmatpush1.msra.mxu0 0.0
    %320 = vmatprep.subr.mxu0 0.0
    %321 = vmatpush1.msra.mxu0 0.0
    %322 = vmatprep.subr.mxu0 0.0
    %323 = vmatpush1.msra.mxu0 0.0
    %324 = vmatprep.subr.mxu0 0.0
    %325 = vmatpush1.msra.mxu0 0.0
    %326 = vmatprep.subr.mxu0 0.0
    %327 = vmatpush1.msra.mxu0 0.0
    %328 = vmatprep.mubr.f32.mxu0 0.0
    %329 = vmatmul.mubr.f32.gmra.mrb[0].mxu0 %v254
    %v330 = vpop.f32.mrb[0].mxu0
    %v331 = vadd.f32 0.0, %v330
    %v332 = vpop.f32.mrb[0].mxu0
    %333 = vmatprep.mubr.f32.mxu0 0.0
    %334 = vmatmul.mubr.f32.gmra.mrb[0].mxu0 %v256
    %v335 = vpop.f32.mrb[0].mxu0
    %v336 = vadd.f32 0.0, %v335
    %v337 = vpop.f32.mrb[0].mxu0
    %338 = vmatprep.mubr.f32.mxu0 0.0
    %339 = vmatmul.mubr.f32.gmra.mrb[0].mxu0 %v258
    %v340 = vpop.f32.mrb[0].mxu0
    %v341 = vadd.f32 0.0, %v340
    %v342 = vpop.f32.mrb[0].mxu0
    %343 = vmatprep.mubr.f32.mxu0 0.0
    %344 = vmatmul.mubr.f32.gmra.mrb[0].mxu0 %v260
    %v345 = vpop.f32.mrb[0].mxu0
    %v346 = vadd.f32 0.0, %v345
    %v347 = vpop.f32.mrb[0].mxu0
    %348 = vmatprep.mubr.f32.mxu0 0.0
    %349 = vmatmul.mubr.f32.gmra.mrb[0].mxu0 %v262
    %v350 = vpop.f32.mrb[0].mxu0
    %v351 = vadd.f32 0.0, %v350
    %v352 = vpop.f32.mrb[0].mxu0
    %353 = vdwg.mxu0
    %v354 = vsel %vm208, %v231, 0
    %v356 = vsel %vm208, %v232, 0
    %v358 = vsel %vm208, %v233, 0
    %v360 = vsel %vm208, %v234, 0
    %v362 = vsel %vm208, %v235, 0
    %364 = vmatprep.subr.mxu0 0.0
    %365 = vmatpush1.msra.mxu0 %v236
    %366 = vmatprep.subr.mxu0 0.0
    %367 = vmatpush1.msra.mxu0 0.0
    %368 = vmatprep.subr.mxu0 0.0
    %369 = vmatpush1.msra.mxu0 0.0
    %370 = vmatprep.subr.mxu0 0.0
    %371 = vmatpush1.msra.mxu0 0.0
    %372 = vmatprep.subr.mxu0 0.0
    %373 = vmatpush1.msra.mxu0 0.0
    %374 = vmatprep.subr.mxu0 0.0
    %375 = vmatpush1.msra.mxu0 0.0
    %376 = vmatprep.subr.mxu0 0.0
    %377 = vmatpush1.msra.mxu0 0.0
    %378 = vmatprep.subr.mxu0 0.0
    %379 = vmatpush1.msra.mxu0 0.0
    %380 = vmatprep.subr.mxu0 0.0
    %381 = vmatpush1.msra.mxu0 0.0
    %382 = vmatprep.subr.mxu0 0.0
    %383 = vmatpush1.msra.mxu0 0.0
    %384 = vmatprep.subr.mxu0 0.0
    %385 = vmatpush1.msra.mxu0 0.0
    %386 = vmatprep.subr.mxu0 0.0
    %387 = vmatpush1.msra.mxu0 0.0
    %388 = vmatprep.subr.mxu0 0.0
    %389 = vmatpush1.msra.mxu0 0.0
    %390 = vmatprep.subr.mxu0 0.0
    %391 = vmatpush1.msra.mxu0 0.0
    %392 = vmatprep.subr.mxu0 0.0
    %393 = vmatpush1.msra.mxu0 0.0
    %394 = vmatprep.subr.mxu0 0.0
    %395 = vmatpush1.msra.mxu0 0.0
    %396 = vmatprep.subr.mxu0 0.0
    %397 = vmatpush1.msra.mxu0 0.0
    %398 = vmatprep.subr.mxu0 0.0
    %399 = vmatpush1.msra.mxu0 0.0
    %400 = vmatprep.subr.mxu0 0.0
    %401 = vmatpush1.msra.mxu0 0.0
    %402 = vmatprep.subr.mxu0 0.0
    %403 = vmatpush1.msra.mxu0 0.0
    %404 = vmatprep.subr.mxu0 0.0
    %405 = vmatpush1.msra.mxu0 0.0
    %406 = vmatprep.subr.mxu0 0.0
    %407 = vmatpush1.msra.mxu0 0.0
    %408 = vmatprep.subr.mxu0 0.0
    %409 = vmatpush1.msra.mxu0 0.0
    %410 = vmatprep.subr.mxu0 0.0
    %411 = vmatpush1.msra.mxu0 0.0
    %412 = vmatprep.subr.mxu0 0.0
    %413 = vmatpush1.msra.mxu0 0.0
    %414 = vmatprep.subr.mxu0 0.0
    %415 = vmatpush1.msra.mxu0 0.0
    %416 = vmatprep.subr.mxu0 0.0
    %417 = vmatpush1.msra.mxu0 0.0
    %418 = vmatprep.subr.mxu0 0.0
    %419 = vmatpush1.msra.mxu0 0.0
    %420 = vmatprep.subr.mxu0 0.0
    %421 = vmatpush1.msra.mxu0 0.0
    %422 = vmatprep.subr.mxu0 0.0
    %423 = vmatpush1.msra.mxu0 0.0
    %424 = vmatprep.subr.mxu0 0.0
    %425 = vmatpush1.msra.mxu0 0.0
    %426 = vmatprep.subr.mxu0 0.0
    %427 = vmatpush1.msra.mxu0 0.0
    %428 = vmatprep.mubr.f32.mxu0 0.0
    %429 = vmatmul.mubr.f32.gmra.mrb[0].mxu0 %v354
    %v430 = vpop.f32.mrb[0].mxu0
    %v431 = vadd.f32 %v331, %v430
    %v432 = vpop.f32.mrb[0].mxu0
    %433 = vmatprep.mubr.f32.mxu0 0.0
    %434 = vmatmul.mubr.f32.gmra.mrb[0].mxu0 %v356
    %v435 = vpop.f32.mrb[0].mxu0
    %v436 = vadd.f32 %v336, %v435
    %v437 = vpop.f32.mrb[0].mxu0
    %438 = vmatprep.mubr.f32.mxu0 0.0
    %439 = vmatmul.mubr.f32.gmra.mrb[0].mxu0 %v358
    %v440 = vpop.f32.mrb[0].mxu0
    %v441 = vadd.f32 %v341, %v440
    %v442 = vpop.f32.mrb[0].mxu0
    %443 = vmatprep.mubr.f32.mxu0 0.0
    %444 = vmatmul.mubr.f32.gmra.mrb[0].mxu0 %v360
    %v445 = vpop.f32.mrb[0].mxu0
    %v446 = vadd.f32 %v346, %v445
    %v447 = vpop.f32.mrb[0].mxu0
    %448 = vmatprep.mubr.f32.mxu0 0.0
    %449 = vmatmul.mubr.f32.gmra.mrb[0].mxu0 %v362
    %v450 = vpop.f32.mrb[0].mxu0
    %v451 = vadd.f32 %v351, %v450
    %v452 = vpop.f32.mrb[0].mxu0
    %453 = vdwg.mxu0
    %s454 = scalar_lea.vmem [#allocation6], 16
    %v455 = vld [vmem:[%s454] sm:$0xff]
    %vm456 = vcmask 1045504
    %v457 = vrot.slane %v231, 2
    %v458 = vrot.slane %v232, 2
    %v459 = vsel %vm456, %v457, %v458
    %v460 = vrot.slane %v233, 2
    %v461 = vsel %vm456, %v458, %v460
    %v462 = vrot.slane %v234, 2
    %v463 = vsel %vm456, %v460, %v462
    %v464 = vrot.slane %v235, 2
    %v465 = vsel %vm456, %v462, %v464
    %v466 = vsel %vm208, %v459, 0
    %v468 = vsel %vm208, %v461, 0
    %v470 = vsel %vm208, %v463, 0
    %v472 = vsel %vm208, %v465, 0
    %v474 = vsel %vm208, %v464, 0
    %476 = vmatprep.subr.mxu0 0.0
    %477 = vmatpush1.msra.mxu0 %v455
    %478 = vmatprep.subr.mxu0 0.0
    %479 = vmatpush1.msra.mxu0 0.0
    %480 = vmatprep.subr.mxu0 0.0
    %481 = vmatpush1.msra.mxu0 0.0
    %482 = vmatprep.subr.mxu0 0.0
    %483 = vmatpush1.msra.mxu0 0.0
    %484 = vmatprep.subr.mxu0 0.0
    %485 = vmatpush1.msra.mxu0 0.0
    %486 = vmatprep.subr.mxu0 0.0
    %487 = vmatpush1.msra.mxu0 0.0
    %488 = vmatprep.subr.mxu0 0.0
    %489 = vmatpush1.msra.mxu0 0.0
    %490 = vmatprep.subr.mxu0 0.0
    %491 = vmatpush1.msra.mxu0 0.0
    %492 = vmatprep.subr.mxu0 0.0
    %493 = vmatpush1.msra.mxu0 0.0
    %494 = vmatprep.subr.mxu0 0.0
    %495 = vmatpush1.msra.mxu0 0.0
    %496 = vmatprep.subr.mxu0 0.0
    %497 = vmatpush1.msra.mxu0 0.0
    %498 = vmatprep.subr.mxu0 0.0
    %499 = vmatpush1.msra.mxu0 0.0
    %500 = vmatprep.subr.mxu0 0.0
    %501 = vmatpush1.msra.mxu0 0.0
    %502 = vmatprep.subr.mxu0 0.0
    %503 = vmatpush1.msra.mxu0 0.0
    %504 = vmatprep.subr.mxu0 0.0
    %505 = vmatpush1.msra.mxu0 0.0
    %506 = vmatprep.subr.mxu0 0.0
    %507 = vmatpush1.msra.mxu0 0.0
    %508 = vmatprep.subr.mxu0 0.0
    %509 = vmatpush1.msra.mxu0 0.0
    %510 = vmatprep.subr.mxu0 0.0
    %511 = vmatpush1.msra.mxu0 0.0
    %512 = vmatprep.subr.mxu0 0.0
    %513 = vmatpush1.msra.mxu0 0.0
    %514 = vmatprep.subr.mxu0 0.0
    %515 = vmatpush1.msra.mxu0 0.0
    %516 = vmatprep.subr.mxu0 0.0
    %517 = vmatpush1.msra.mxu0 0.0
    %518 = vmatprep.subr.mxu0 0.0
    %519 = vmatpush1.msra.mxu0 0.0
    %520 = vmatprep.subr.mxu0 0.0
    %521 = vmatpush1.msra.mxu0 0.0
    %522 = vmatprep.subr.mxu0 0.0
    %523 = vmatpush1.msra.mxu0 0.0
    %524 = vmatprep.subr.mxu0 0.0
    %525 = vmatpush1.msra.mxu0 0.0
    %526 = vmatprep.subr.mxu0 0.0
    %527 = vmatpush1.msra.mxu0 0.0
    %528 = vmatprep.subr.mxu0 0.0
    %529 = vmatpush1.msra.mxu0 0.0
    %530 = vmatprep.subr.mxu0 0.0
    %531 = vmatpush1.msra.mxu0 0.0
    %532 = vmatprep.subr.mxu0 0.0
    %533 = vmatpush1.msra.mxu0 0.0
    %534 = vmatprep.subr.mxu0 0.0
    %535 = vmatpush1.msra.mxu0 0.0
    %536 = vmatprep.subr.mxu0 0.0
    %537 = vmatpush1.msra.mxu0 0.0
    %538 = vmatprep.subr.mxu0 0.0
    %539 = vmatpush1.msra.mxu0 0.0
    %540 = vmatprep.mubr.f32.mxu0 0.0
    %541 = vmatmul.mubr.f32.gmra.mrb[0].mxu0 %v466
    %v542 = vpop.f32.mrb[0].mxu0
    %v543 = vadd.f32 0.0, %v542
    %v544 = vpop.f32.mrb[0].mxu0
    %545 = vmatprep.mubr.f32.mxu0 0.0
    %546 = vmatmul.mubr.f32.gmra.mrb[0].mxu0 %v468
    %v547 = vpop.f32.mrb[0].mxu0
    %v548 = vadd.f32 0.0, %v547
    %v549 = vpop.f32.mrb[0].mxu0
    %550 = vmatprep.mubr.f32.mxu0 0.0
    %551 = vmatmul.mubr.f32.gmra.mrb[0].mxu0 %v470
    %v552 = vpop.f32.mrb[0].mxu0
    %v553 = vadd.f32 0.0, %v552
    %v554 = vpop.f32.mrb[0].mxu0
    %555 = vmatprep.mubr.f32.mxu0 0.0
    %556 = vmatmul.mubr.f32.gmra.mrb[0].mxu0 %v472
    %v557 = vpop.f32.mrb[0].mxu0
    %v558 = vadd.f32 0.0, %v557
    %v559 = vpop.f32.mrb[0].mxu0
    %560 = vmatprep.mubr.f32.mxu0 0.0
    %561 = vmatmul.mubr.f32.gmra.mrb[0].mxu0 %v474
    %v562 = vpop.f32.mrb[0].mxu0
    %v563 = vadd.f32 0.0, %v562
    %v564 = vpop.f32.mrb[0].mxu0
    %565 = vdwg.mxu0
    %v566 = vadd.f32 %v431, %v543
    %v567 = vadd.f32 %v436, %v548
    %v568 = vadd.f32 %v441, %v553
    %v569 = vadd.f32 %v446, %v558
    %v570 = vadd.f32 %v451, %v563
    %v571 = vld [vmem:[#allocation9] sm:$0x1]
    %v573 = vlaneseq
    %v574 = vshrl.u32 %v573, 7
    %v575 = vsub.s32 0, %v574
    %v576 = vrot.slane %v571, %v575
    %v578 = vmul.f32 %v566, %v576
    %v579 = vmul.f32 %v567, %v576
    %v580 = vmul.f32 %v568, %v576
    %v581 = vmul.f32 %v569, %v576
    %v582 = vmul.f32 %v570, %v576
    %v583 = vld [vmem:[#allocation11] sm:$0x1]
    %v585 = vlaneseq
    %v586 = vshrl.u32 %v585, 7
    %v587 = vsub.s32 0, %v586
    %v588 = vrot.slane %v583, %v587
    %v590 = vadd.f32 %v578, %v588
    %v591 = vadd.f32 %v579, %v588
    %v592 = vadd.f32 %v580, %v588
    %v593 = vadd.f32 %v581, %v588
    %v594 = vadd.f32 %v582, %v588
    %v595 = vmax.f32 %v590, 0.0
    %v596 = vmax.f32 %v591, 0.0
    %v597 = vmax.f32 %v592, 0.0
    %v598 = vmax.f32 %v593, 0.0
    %v599 = vmax.f32 %v594, 0.0
    %v602 = vcombine.high %v595, %v595
    %v604 = vunpack.c.l.s4 1983009808
    %v605 = vunpack.c.0.s8 %v604
    %v606 = vlaneseq
    %v607 = vshrl.u32 %v606, 7
    %v608 = vsub.s32 %v605, %v607
    %v609 = vrot.slane %v595, %v608
    %v611 = vunpack.c.l.s4 1983009808
    %v612 = vunpack.c.0.s8 %v611
    %v613 = vlaneseq
    %v614 = vshrl.u32 %v613, 7
    %v615 = vsub.s32 %v612, %v614
    %v616 = vrot.slane %v602, %v615
    %v617 = vcombine.high %v609, %v609
    %v618 = vcombine.high %v616, %v616
    %v619 = vcombine.high %v596, %v596
    %v621 = vunpack.c.l.s4 1983009808
    %v622 = vunpack.c.0.s8 %v621
    %v623 = vlaneseq
    %v624 = vshrl.u32 %v623, 7
    %v625 = vsub.s32 %v622, %v624
    %v626 = vrot.slane %v596, %v625
    %v628 = vunpack.c.l.s4 1983009808
    %v629 = vunpack.c.0.s8 %v628
    %v630 = vlaneseq
    %v631 = vshrl.u32 %v630, 7
    %v632 = vsub.s32 %v629, %v631
    %v633 = vrot.slane %v619, %v632
    %v634 = vcombine.high %v626, %v626
    %v635 = vcombine.high %v633, %v633
    %vm644 = vcmask 517120
    %v645 = vsel %vm644, %v609, -inf
    %v646 = vrot.slane %v645, 4
    %v647 = vmax.f32 %v645, %v646
    %v648 = vrot.slane %v647, 2
    %v649 = vmax.f32 %v647, %v648
    %v650 = vrot.slane %v649, 1
    %v651 = vmax.f32 %v649, %v650
    %v652 = vsel %vm644, %v617, -inf
    %v653 = vrot.slane %v652, 4
    %v654 = vmax.f32 %v652, %v653
    %v655 = vrot.slane %v654, 2
    %v656 = vmax.f32 %v654, %v655
    %v657 = vrot.slane %v656, 1
    %v658 = vmax.f32 %v656, %v657
    %v659 = vsel %vm644, %v616, -inf
    %v660 = vrot.slane %v659, 4
    %v661 = vmax.f32 %v659, %v660
    %v662 = vrot.slane %v661, 2
    %v663 = vmax.f32 %v661, %v662
    %v664 = vrot.slane %v663, 1
    %v665 = vmax.f32 %v663, %v664
    %v666 = vsel %vm644, %v618, -inf
    %v667 = vrot.slane %v666, 4
    %v668 = vmax.f32 %v666, %v667
    %v669 = vrot.slane %v668, 2
    %v670 = vmax.f32 %v668, %v669
    %v671 = vrot.slane %v670, 1
    %v672 = vmax.f32 %v670, %v671
    %v673 = vsel %vm644, %v626, -inf
    %v674 = vrot.slane %v673, 4
    %v675 = vmax.f32 %v673, %v674
    %v676 = vrot.slane %v675, 2
    %v677 = vmax.f32 %v675, %v676
    %v678 = vrot.slane %v677, 1
    %v679 = vmax.f32 %v677, %v678
    %v680 = vsel %vm644, %v634, -inf
    %v681 = vrot.slane %v680, 4
    %v682 = vmax.f32 %v680, %v681
    %v683 = vrot.slane %v682, 2
    %v684 = vmax.f32 %v682, %v683
    %v685 = vrot.slane %v684, 1
    %v686 = vmax.f32 %v684, %v685
    %v687 = vsel %vm644, %v633, -inf
    %v688 = vrot.slane %v687, 4
    %v689 = vmax.f32 %v687, %v688
    %v690 = vrot.slane %v689, 2
    %v691 = vmax.f32 %v689, %v690
    %v692 = vrot.slane %v691, 1
    %v693 = vmax.f32 %v691, %v692
    %v694 = vsel %vm644, %v635, -inf
    %v695 = vrot.slane %v694, 4
    %v696 = vmax.f32 %v694, %v695
    %v697 = vrot.slane %v696, 2
    %v698 = vmax.f32 %v696, %v697
    %v699 = vrot.slane %v698, 1
    %v700 = vmax.f32 %v698, %v699
    %vm709 = vcmask 1041409
    %v710 = vsel %vm709, %v658, %v651
    %vm711 = vcmask 1042434
    %v712 = vsel %vm711, %v665, %v710
    %vm713 = vcmask 1043459
    %v714 = vsel %vm713, %v672, %v712
    %vm715 = vcmask 1044484
    %v716 = vsel %vm715, %v679, %v714
    %vm717 = vcmask 1045509
    %v718 = vsel %vm717, %v686, %v716
    %vm719 = vcmask 1046534
    %v720 = vsel %vm719, %v693, %v718
    %vm721 = vcmask 1047559
    %v722 = vsel %vm721, %v700, %v720
    %724 = vst.msk [vmem:[#allocation3 + $0x1] sm:$0xff] %vm215, %v722
    %v728 = vcombine.high %v597, %v597
    %v730 = vunpack.c.l.s4 1983009808
    %v731 = vunpack.c.0.s8 %v730
    %v732 = vlaneseq
    %v733 = vshrl.u32 %v732, 7
    %v734 = vsub.s32 %v731, %v733
    %v735 = vrot.slane %v597, %v734
    %v737 = vunpack.c.l.s4 1983009808
    %v738 = vunpack.c.0.s8 %v737
    %v739 = vlaneseq
    %v740 = vshrl.u32 %v739, 7
    %v741 = vsub.s32 %v738, %v740
    %v742 = vrot.slane %v728, %v741
    %v743 = vcombine.high %v735, %v735
    %v744 = vcombine.high %v742, %v742
    %v745 = vcombine.high %v598, %v598
    %v747 = vunpack.c.l.s4 1983009808
    %v748 = vunpack.c.0.s8 %v747
    %v749 = vlaneseq
    %v750 = vshrl.u32 %v749, 7
    %v751 = vsub.s32 %v748, %v750
    %v752 = vrot.slane %v598, %v751
    %v754 = vunpack.c.l.s4 1983009808
    %v755 = vunpack.c.0.s8 %v754
    %v756 = vlaneseq
    %v757 = vshrl.u32 %v756, 7
    %v758 = vsub.s32 %v755, %v757
    %v759 = vrot.slane %v745, %v758
    %v760 = vcombine.high %v752, %v752
    %v761 = vcombine.high %v759, %v759
    %v763 = vunpack.c.l.s4 1983009808
    %v764 = vunpack.c.0.s8 %v763
    %v765 = vlaneseq
    %v766 = vshrl.u32 %v765, 7
    %v767 = vsub.s32 %v764, %v766
    %v768 = vrot.slane %v599, %v767
    %v777 = vsel %vm644, %v743, -inf
    %v778 = vrot.slane %v777, 4
    %v779 = vmax.f32 %v777, %v778
    %v780 = vrot.slane %v779, 2
    %v781 = vmax.f32 %v779, %v780
    %v782 = vrot.slane %v781, 1
    %v783 = vmax.f32 %v781, %v782
    %v784 = vsel %vm644, %v742, -inf
    %v785 = vrot.slane %v784, 4
    %v786 = vmax.f32 %v784, %v785
    %v787 = vrot.slane %v786, 2
    %v788 = vmax.f32 %v786, %v787
    %v789 = vrot.slane %v788, 1
    %v790 = vmax.f32 %v788, %v789
    %v791 = vsel %vm644, %v744, -inf
    %v792 = vrot.slane %v791, 4
    %v793 = vmax.f32 %v791, %v792
    %v794 = vrot.slane %v793, 2
    %v795 = vmax.f32 %v793, %v794
    %v796 = vrot.slane %v795, 1
    %v797 = vmax.f32 %v795, %v796
    %v798 = vsel %vm644, %v752, -inf
    %v799 = vrot.slane %v798, 4
    %v800 = vmax.f32 %v798, %v799
    %v801 = vrot.slane %v800, 2
    %v802 = vmax.f32 %v800, %v801
    %v803 = vrot.slane %v802, 1
    %v804 = vmax.f32 %v802, %v803
    %v805 = vsel %vm644, %v760, -inf
    %v806 = vrot.slane %v805, 4
    %v807 = vmax.f32 %v805, %v806
    %v808 = vrot.slane %v807, 2
    %v809 = vmax.f32 %v807, %v808
    %v810 = vrot.slane %v809, 1
    %v811 = vmax.f32 %v809, %v810
    %v812 = vsel %vm644, %v759, -inf
    %v813 = vrot.slane %v812, 4
    %v814 = vmax.f32 %v812, %v813
    %v815 = vrot.slane %v814, 2
    %v816 = vmax.f32 %v814, %v815
    %v817 = vrot.slane %v816, 1
    %v818 = vmax.f32 %v816, %v817
    %v819 = vsel %vm644, %v761, -inf
    %v820 = vrot.slane %v819, 4
    %v821 = vmax.f32 %v819, %v820
    %v822 = vrot.slane %v821, 2
    %v823 = vmax.f32 %v821, %v822
    %v824 = vrot.slane %v823, 1
    %v825 = vmax.f32 %v823, %v824
    %v826 = vsel %vm644, %v768, -inf
    %v827 = vrot.slane %v826, 4
    %v828 = vmax.f32 %v826, %v827
    %v829 = vrot.slane %v828, 2
    %v830 = vmax.f32 %v828, %v829
    %v831 = vrot.slane %v830, 1
    %v832 = vmax.f32 %v830, %v831
    %v841 = vsel %vm709, %v790, %v783
    %v842 = vsel %vm711, %v797, %v841
    %v843 = vsel %vm713, %v804, %v842
    %v844 = vsel %vm715, %v811, %v843
    %v845 = vsel %vm717, %v818, %v844
    %v846 = vsel %vm719, %v825, %v845
    %v847 = vsel %vm721, %v832, %v846
    %849 = vst.msk [vmem:[#allocation3 + $0xb] sm:$0xff] %vm215, %v847
    %v850 = vld [vmem:[#allocation3] sm:$0xff]
    %v851 = vld [vmem:[#allocation3 + $0x8] sm:$0xff]
    %v852 = vld [vmem:[#allocation3 + $0x10] sm:$0xf]
    %v853 = vld [vmem:[#allocation12] sm:$0xff]
    %v854 = vld [vmem:[#allocation12 + $0x8] sm:$0xff]
    %v855 = vld [vmem:[#allocation12 + $0x10] sm:$0xff]
    %v856 = vld [vmem:[#allocation12 + $0x18] sm:$0xff]
    %v857 = vld [vmem:[#allocation12 + $0x20] sm:$0xff]
    %v858 = vld [vmem:[#allocation12 + $0x28] sm:$0xff]
    %v859 = vld [vmem:[#allocation12 + $0x30] sm:$0xff]
    %v860 = vld [vmem:[#allocation12 + $0x38] sm:$0xff]
    %s861 = scalar_lea.vmem [#allocation12], 64
    %v862 = vld [vmem:[%s861] sm:$0xff]
    %v863 = vld [vmem:[%s861 + $0x8] sm:$0xff]
    %v864 = vld [vmem:[%s861 + $0x10] sm:$0xff]
    %v865 = vld [vmem:[%s861 + $0x18] sm:$0xff]
    %v866 = vld [vmem:[%s861 + $0x20] sm:$0xff]
    %v867 = vld [vmem:[%s861 + $0x28] sm:$0xff]
    %v868 = vld [vmem:[%s861 + $0x30] sm:$0xff]
    %v869 = vld [vmem:[%s861 + $0x38] sm:$0xff]
    %v873 = vrot.slane %v850, 1
    %v874 = vrot.slane %v851, 1
    %v875 = vsel %vm244, %v873, %v874
    %v876 = vrot.slane %v852, 1
    %v877 = vsel %vm244, %v874, %v876
    %v878 = vsel %vm215, %v875, 0
    %v880 = vsel %vm215, %v877, 0
    %v882 = vsel %vm215, %v876, 0
    %884 = vmatprep.subr.mxu0 0.0
    %885 = vmatpush1.msra.mxu0 %v862
    %886 = vmatprep.subr.mxu0 0.0
    %887 = vmatpush1.msra.mxu0 %v863
    %888 = vmatprep.subr.mxu0 0.0
    %889 = vmatpush1.msra.mxu0 %v864
    %890 = vmatprep.subr.mxu0 0.0
    %891 = vmatpush1.msra.mxu0 %v865
    %892 = vmatprep.subr.mxu0 0.0
    %893 = vmatpush1.msra.mxu0 %v866
    %894 = vmatprep.subr.mxu0 0.0
    %895 = vmatpush1.msra.mxu0 %v867
    %896 = vmatprep.subr.mxu0 0.0
    %897 = vmatpush1.msra.mxu0 %v868
    %898 = vmatprep.subr.mxu0 0.0
    %899 = vmatpush1.msra.mxu0 %v869
    %900 = vmatprep.subr.mxu0 0.0
    %901 = vmatpush1.msra.mxu0 0.0
    %902 = vmatprep.subr.mxu0 0.0
    %903 = vmatpush1.msra.mxu0 0.0
    %904 = vmatprep.subr.mxu0 0.0
    %905 = vmatpush1.msra.mxu0 0.0
    %906 = vmatprep.subr.mxu0 0.0
    %907 = vmatpush1.msra.mxu0 0.0
    %908 = vmatprep.subr.mxu0 0.0
    %909 = vmatpush1.msra.mxu0 0.0
    %910 = vmatprep.subr.mxu0 0.0
    %911 = vmatpush1.msra.mxu0 0.0
    %912 = vmatprep.subr.mxu0 0.0
    %913 = vmatpush1.msra.mxu0 0.0
    %914 = vmatprep.subr.mxu0 0.0
    %915 = vmatpush1.msra.mxu0 0.0
    %916 = vmatprep.subr.mxu0 0.0
    %917 = vmatpush1.msra.mxu0 0.0
    %918 = vmatprep.subr.mxu0 0.0
    %919 = vmatpush1.msra.mxu0 0.0
    %920 = vmatprep.subr.mxu0 0.0
    %921 = vmatpush1.msra.mxu0 0.0
    %922 = vmatprep.subr.mxu0 0.0
    %923 = vmatpush1.msra.mxu0 0.0
    %924 = vmatprep.subr.mxu0 0.0
    %925 = vmatpush1.msra.mxu0 0.0
    %926 = vmatprep.subr.mxu0 0.0
    %927 = vmatpush1.msra.mxu0 0.0
    %928 = vmatprep.subr.mxu0 0.0
    %929 = vmatpush1.msra.mxu0 0.0
    %930 = vmatprep.subr.mxu0 0.0
    %931 = vmatpush1.msra.mxu0 0.0
    %932 = vmatprep.subr.mxu0 0.0
    %933 = vmatpush1.msra.mxu0 0.0
    %934 = vmatprep.subr.mxu0 0.0
    %935 = vmatpush1.msra.mxu0 0.0
    %936 = vmatprep.subr.mxu0 0.0
    %937 = vmatpush1.msra.mxu0 0.0
    %938 = vmatprep.subr.mxu0 0.0
    %939 = vmatpush1.msra.mxu0 0.0
    %940 = vmatprep.subr.mxu0 0.0
    %941 = vmatpush1.msra.mxu0 0.0
    %942 = vmatprep.subr.mxu0 0.0
    %943 = vmatpush1.msra.mxu0 0.0
    %944 = vmatprep.subr.mxu0 0.0
    %945 = vmatpush1.msra.mxu0 0.0
    %946 = vmatprep.subr.mxu0 0.0
    %947 = vmatpush1.msra.mxu0 0.0
    %948 = vmatprep.mubr.f32.mxu0 0.0
    %949 = vmatmul.mubr.f32.gmra.mrb[0].mxu0 %v878
    %v950 = vpop.f32.mrb[0].mxu0
    %v951 = vadd.f32 0.0, %v950
    %v952 = vpop.f32.mrb[0].mxu0
    %953 = vmatprep.mubr.f32.mxu0 0.0
    %954 = vmatmul.mubr.f32.gmra.mrb[0].mxu0 %v880
    %v955 = vpop.f32.mrb[0].mxu0
    %v956 = vadd.f32 0.0, %v955
    %v957 = vpop.f32.mrb[0].mxu0
    %958 = vmatprep.mubr.f32.mxu0 0.0
    %959 = vmatmul.mubr.f32.gmra.mrb[0].mxu0 %v882
    %v960 = vpop.f32.mrb[0].mxu0
    %v961 = vadd.f32 0.0, %v960
    %v962 = vpop.f32.mrb[0].mxu0
    %963 = vdwg.mxu0
    %v964 = vsel %vm215, %v850, 0
    %v966 = vsel %vm215, %v851, 0
    %v968 = vsel %vm215, %v852, 0
    %970 = vmatprep.subr.mxu0 0.0
    %971 = vmatpush1.msra.mxu0 %v853
    %972 = vmatprep.subr.mxu0 0.0
    %973 = vmatpush1.msra.mxu0 %v854
    %974 = vmatprep.subr.mxu0 0.0
    %975 = vmatpush1.msra.mxu0 %v855
    %976 = vmatprep.subr.mxu0 0.0
    %977 = vmatpush1.msra.mxu0 %v856
    %978 = vmatprep.subr.mxu0 0.0
    %979 = vmatpush1.msra.mxu0 %v857
    %980 = vmatprep.subr.mxu0 0.0
    %981 = vmatpush1.msra.mxu0 %v858
    %982 = vmatprep.subr.mxu0 0.0
    %983 = vmatpush1.msra.mxu0 %v859
    %984 = vmatprep.subr.mxu0 0.0
    %985 = vmatpush1.msra.mxu0 %v860
    %986 = vmatprep.subr.mxu0 0.0
    %987 = vmatpush1.msra.mxu0 0.0
    %988 = vmatprep.subr.mxu0 0.0
    %989 = vmatpush1.msra.mxu0 0.0
    %990 = vmatprep.subr.mxu0 0.0
    %991 = vmatpush1.msra.mxu0 0.0
    %992 = vmatprep.subr.mxu0 0.0
    %993 = vmatpush1.msra.mxu0 0.0
    %994 = vmatprep.subr.mxu0 0.0
    %995 = vmatpush1.msra.mxu0 0.0
    %996 = vmatprep.subr.mxu0 0.0
    %997 = vmatpush1.msra.mxu0 0.0
    %998 = vmatprep.subr.mxu0 0.0
    %999 = vmatpush1.msra.mxu0 0.0
    %1000 = vmatprep.subr.mxu0 0.0
    %1001 = vmatpush1.msra.mxu0 0.0
    %1002 = vmatprep.subr.mxu0 0.0
    %1003 = vmatpush1.msra.mxu0 0.0
    %1004 = vmatprep.subr.mxu0 0.0
    %1005 = vmatpush1.msra.mxu0 0.0
    %1006 = vmatprep.subr.mxu0 0.0
    %1007 = vmatpush1.msra.mxu0 0.0
    %1008 = vmatprep.subr.mxu0 0.0
    %1009 = vmatpush1.msra.mxu0 0.0
    %1010 = vmatprep.subr.mxu0 0.0
    %1011 = vmatpush1.msra.mxu0 0.0
    %1012 = vmatprep.subr.mxu0 0.0
    %1013 = vmatpush1.msra.mxu0 0.0
    %1014 = vmatprep.subr.mxu0 0.0
    %1015 = vmatpush1.msra.mxu0 0.0
    %1016 = vmatprep.subr.mxu0 0.0
    %1017 = vmatpush1.msra.mxu0 0.0
    %1018 = vmatprep.subr.mxu0 0.0
    %1019 = vmatpush1.msra.mxu0 0.0
    %1020 = vmatprep.subr.mxu0 0.0
    %1021 = vmatpush1.msra.mxu0 0.0
    %1022 = vmatprep.subr.mxu0 0.0
    %1023 = vmatpush1.msra.mxu0 0.0
    %1024 = vmatprep.subr.mxu0 0.0
    %1025 = vmatpush1.msra.mxu0 0.0
    %1026 = vmatprep.subr.mxu0 0.0
    %1027 = vmatpush1.msra.mxu0 0.0
    %1028 = vmatprep.subr.mxu0 0.0
    %1029 = vmatpush1.msra.mxu0 0.0
    %1030 = vmatprep.subr.mxu0 0.0
    %1031 = vmatpush1.msra.mxu0 0.0
    %1032 = vmatprep.subr.mxu0 0.0
    %1033 = vmatpush1.msra.mxu0 0.0
    %1034 = vmatprep.mubr.f32.mxu0 0.0
    %1035 = vmatmul.mubr.f32.gmra.mrb[0].mxu0 %v964
    %v1036 = vpop.f32.mrb[0].mxu0
    %v1037 = vadd.f32 %v951, %v1036
    %v1038 = vpop.f32.mrb[0].mxu0
    %1039 = vmatprep.mubr.f32.mxu0 0.0
    %1040 = vmatmul.mubr.f32.gmra.mrb[0].mxu0 %v966
    %v1041 = vpop.f32.mrb[0].mxu0
    %v1042 = vadd.f32 %v956, %v1041
    %v1043 = vpop.f32.mrb[0].mxu0
    %1044 = vmatprep.mubr.f32.mxu0 0.0
    %1045 = vmatmul.mubr.f32.gmra.mrb[0].mxu0 %v968
    %v1046 = vpop.f32.mrb[0].mxu0
    %v1047 = vadd.f32 %v961, %v1046
    %v1048 = vpop.f32.mrb[0].mxu0
    %1049 = vdwg.mxu0
    %s1050 = scalar_lea.vmem [#allocation12], 128
    %v1051 = vld [vmem:[%s1050] sm:$0xff]
    %v1052 = vld [vmem:[%s1050 + $0x8] sm:$0xff]
    %v1053 = vld [vmem:[%s1050 + $0x10] sm:$0xff]
    %v1054 = vld [vmem:[%s1050 + $0x18] sm:$0xff]
    %v1055 = vld [vmem:[%s1050 + $0x20] sm:$0xff]
    %v1056 = vld [vmem:[%s1050 + $0x28] sm:$0xff]
    %v1057 = vld [vmem:[%s1050 + $0x30] sm:$0xff]
    %v1058 = vld [vmem:[%s1050 + $0x38] sm:$0xff]
    %v1059 = vrot.slane %v850, 2
    %v1060 = vrot.slane %v851, 2
    %v1061 = vsel %vm456, %v1059, %v1060
    %v1062 = vrot.slane %v852, 2
    %v1063 = vsel %vm456, %v1060, %v1062
    %v1064 = vsel %vm215, %v1061, 0
    %v1066 = vsel %vm215, %v1063, 0
    %v1068 = vsel %vm215, %v1062, 0
    %1070 = vmatprep.subr.mxu0 0.0
    %1071 = vmatpush1.msra.mxu0 %v1051
    %1072 = vmatprep.subr.mxu0 0.0
    %1073 = vmatpush1.msra.mxu0 %v1052
    %1074 = vmatprep.subr.mxu0 0.0
    %1075 = vmatpush1.msra.mxu0 %v1053
    %1076 = vmatprep.subr.mxu0 0.0
    %1077 = vmatpush1.msra.mxu0 %v1054
    %1078 = vmatprep.subr.mxu0 0.0
    %1079 = vmatpush1.msra.mxu0 %v1055
    %1080 = vmatprep.subr.mxu0 0.0
    %1081 = vmatpush1.msra.mxu0 %v1056
    %1082 = vmatprep.subr.mxu0 0.0
    %1083 = vmatpush1.msra.mxu0 %v1057
    %1084 = vmatprep.subr.mxu0 0.0
    %1085 = vmatpush1.msra.mxu0 %v1058
    %1086 = vmatprep.subr.mxu0 0.0
    %1087 = vmatpush1.msra.mxu0 0.0
    %1088 = vmatprep.subr.mxu0 0.0
    %1089 = vmatpush1.msra.mxu0 0.0
    %1090 = vmatprep.subr.mxu0 0.0
    %1091 = vmatpush1.msra.mxu0 0.0
    %1092 = vmatprep.subr.mxu0 0.0
    %1093 = vmatpush1.msra.mxu0 0.0
    %1094 = vmatprep.subr.mxu0 0.0
    %1095 = vmatpush1.msra.mxu0 0.0
    %1096 = vmatprep.subr.mxu0 0.0
    %1097 = vmatpush1.msra.mxu0 0.0
    %1098 = vmatprep.subr.mxu0 0.0
    %1099 = vmatpush1.msra.mxu0 0.0
    %1100 = vmatprep.subr.mxu0 0.0
    %1101 = vmatpush1.msra.mxu0 0.0
    %1102 = vmatprep.subr.mxu0 0.0
    %1103 = vmatpush1.msra.mxu0 0.0
    %1104 = vmatprep.subr.mxu0 0.0
    %1105 = vmatpush1.msra.mxu0 0.0
    %1106 = vmatprep.subr.mxu0 0.0
    %1107 = vmatpush1.msra.mxu0 0.0
    %1108 = vmatprep.subr.mxu0 0.0
    %1109 = vmatpush1.msra.mxu0 0.0
    %1110 = vmatprep.subr.mxu0 0.0
    %1111 = vmatpush1.msra.mxu0 0.0
    %1112 = vmatprep.subr.mxu0 0.0
    %1113 = vmatpush1.msra.mxu0 0.0
    %1114 = vmatprep.subr.mxu0 0.0
    %1115 = vmatpush1.msra.mxu0 0.0
    %1116 = vmatprep.subr.mxu0 0.0
    %1117 = vmatpush1.msra.mxu0 0.0
    %1118 = vmatprep.subr.mxu0 0.0
    %1119 = vmatpush1.msra.mxu0 0.0
    %1120 = vmatprep.subr.mxu0 0.0
    %1121 = vmatpush1.msra.mxu0 0.0
    %1122 = vmatprep.subr.mxu0 0.0
    %1123 = vmatpush1.msra.mxu0 0.0
    %1124 = vmatprep.subr.mxu0 0.0
    %1125 = vmatpush1.msra.mxu0 0.0
    %1126 = vmatprep.subr.mxu0 0.0
    %1127 = vmatpush1.msra.mxu0 0.0
    %1128 = vmatprep.subr.mxu0 0.0
    %1129 = vmatpush1.msra.mxu0 0.0
    %1130 = vmatprep.subr.mxu0 0.0
    %1131 = vmatpush1.msra.mxu0 0.0
    %1132 = vmatprep.subr.mxu0 0.0
    %1133 = vmatpush1.msra.mxu0 0.0
    %1134 = vmatprep.mubr.f32.mxu0 0.0
    %1135 = vmatmul.mubr.f32.gmra.mrb[0].mxu0 %v1064
    %v1136 = vpop.f32.mrb[0].mxu0
    %v1137 = vadd.f32 0.0, %v1136
    %v1138 = vpop.f32.mrb[0].mxu0
    %1139 = vmatprep.mubr.f32.mxu0 0.0
    %1140 = vmatmul.mubr.f32.gmra.mrb[0].mxu0 %v1066
    %v1141 = vpop.f32.mrb[0].mxu0
    %v1142 = vadd.f32 0.0, %v1141
    %v1143 = vpop.f32.mrb[0].mxu0
    %1144 = vmatprep.mubr.f32.mxu0 0.0
    %1145 = vmatmul.mubr.f32.gmra.mrb[0].mxu0 %v1068
    %v1146 = vpop.f32.mrb[0].mxu0
    %v1147 = vadd.f32 0.0, %v1146
    %v1148 = vpop.f32.mrb[0].mxu0
    %1149 = vdwg.mxu0
    %v1150 = vadd.f32 %v1037, %v1137
    %v1151 = vadd.f32 %v1042, %v1142
    %v1152 = vadd.f32 %v1047, %v1147
    %v1153 = vld [vmem:[#allocation14] sm:$0x1]
    %v1155 = vlaneseq
    %v1156 = vshrl.u32 %v1155, 7
    %v1157 = vsub.s32 0, %v1156
    %v1158 = vrot.slane %v1153, %v1157
    %v1160 = vmul.f32 %v1150, %v1158
    %v1161 = vmul.f32 %v1151, %v1158
    %v1162 = vmul.f32 %v1152, %v1158
    %v1163 = vld [vmem:[#allocation15] sm:$0x1]
    %v1165 = vlaneseq
    %v1166 = vshrl.u32 %v1165, 7
    %v1167 = vsub.s32 0, %v1166
    %v1168 = vrot.slane %v1163, %v1167
    %v1170 = vadd.f32 %v1160, %v1168
    %v1171 = vadd.f32 %v1161, %v1168
    %v1172 = vadd.f32 %v1162, %v1168
    %v1173 = vmax.f32 %v1170, 0.0
    %v1174 = vmax.f32 %v1171, 0.0
    %v1175 = vmax.f32 %v1172, 0.0
    %v1177 = vcombine.high %v1173, %v1173
    %v1179 = vunpack.c.l.s4 1983009808
    %v1180 = vunpack.c.0.s8 %v1179
    %v1181 = vlaneseq
    %v1182 = vshrl.u32 %v1181, 7
    %v1183 = vsub.s32 %v1180, %v1182
    %v1184 = vrot.slane %v1173, %v1183
    %v1186 = vunpack.c.l.s4 1983009808
    %v1187 = vunpack.c.0.s8 %v1186
    %v1188 = vlaneseq
    %v1189 = vshrl.u32 %v1188, 7
    %v1190 = vsub.s32 %v1187, %v1189
    %v1191 = vrot.slane %v1177, %v1190
    %v1192 = vcombine.high %v1184, %v1184
    %v1193 = vcombine.high %v1191, %v1191
    %vm1198 = vcmask 1041408
    %v1199 = vsel %vm1198, %v1184, -inf
    %v1200 = vrot.slane %v1199, 4
    %v1201 = vmax.f32 %v1199, %v1200
    %v1202 = vrot.slane %v1201, 2
    %v1203 = vmax.f32 %v1201, %v1202
    %v1204 = vrot.slane %v1203, 1
    %v1205 = vmax.f32 %v1203, %v1204
    %v1206 = vsel %vm1198, %v1192, -inf
    %v1207 = vrot.slane %v1206, 4
    %v1208 = vmax.f32 %v1206, %v1207
    %v1209 = vrot.slane %v1208, 2
    %v1210 = vmax.f32 %v1208, %v1209
    %v1211 = vrot.slane %v1210, 1
    %v1212 = vmax.f32 %v1210, %v1211
    %v1213 = vsel %vm1198, %v1191, -inf
    %v1214 = vrot.slane %v1213, 4
    %v1215 = vmax.f32 %v1213, %v1214
    %v1216 = vrot.slane %v1215, 2
    %v1217 = vmax.f32 %v1215, %v1216
    %v1218 = vrot.slane %v1217, 1
    %v1219 = vmax.f32 %v1217, %v1218
    %v1220 = vsel %vm1198, %v1193, -inf
    %v1221 = vrot.slane %v1220, 4
    %v1222 = vmax.f32 %v1220, %v1221
    %v1223 = vrot.slane %v1222, 2
    %v1224 = vmax.f32 %v1222, %v1223
    %v1225 = vrot.slane %v1224, 1
    %v1226 = vmax.f32 %v1224, %v1225
    %v1231 = vsel %vm709, %v1212, %v1205
    %v1232 = vsel %vm711, %v1219, %v1231
    %v1233 = vsel %vm713, %v1226, %v1232
    %1235 = vst [vmem:[#allocation4 + $0x1] sm:$0xf] %v1233
    %v1238 = vcombine.high %v1174, %v1174
    %v1240 = vunpack.c.l.s4 1983009808
    %v1241 = vunpack.c.0.s8 %v1240
    %v1242 = vlaneseq
    %v1243 = vshrl.u32 %v1242, 7
    %v1244 = vsub.s32 %v1241, %v1243
    %v1245 = vrot.slane %v1174, %v1244
    %v1247 = vunpack.c.l.s4 1983009808
    %v1248 = vunpack.c.0.s8 %v1247
    %v1249 = vlaneseq
    %v1250 = vshrl.u32 %v1249, 7
    %v1251 = vsub.s32 %v1248, %v1250
    %v1252 = vrot.slane %v1238, %v1251
    %v1253 = vcombine.high %v1245, %v1245
    %v1254 = vcombine.high %v1252, %v1252
    %v1256 = vunpack.c.l.s4 1983009808
    %v1257 = vunpack.c.0.s8 %v1256
    %v1258 = vlaneseq
    %v1259 = vshrl.u32 %v1258, 7
    %v1260 = vsub.s32 %v1257, %v1259
    %v1261 = vrot.slane %v1175, %v1260
    %v1266 = vsel %vm1198, %v1253, -inf
    %v1267 = vrot.slane %v1266, 4
    %v1268 = vmax.f32 %v1266, %v1267
    %v1269 = vrot.slane %v1268, 2
    %v1270 = vmax.f32 %v1268, %v1269
    %v1271 = vrot.slane %v1270, 1
    %v1272 = vmax.f32 %v1270, %v1271
    %v1273 = vsel %vm1198, %v1252, -inf
    %v1274 = vrot.slane %v1273, 4
    %v1275 = vmax.f32 %v1273, %v1274
    %v1276 = vrot.slane %v1275, 2
    %v1277 = vmax.f32 %v1275, %v1276
    %v1278 = vrot.slane %v1277, 1
    %v1279 = vmax.f32 %v1277, %v1278
    %v1280 = vsel %vm1198, %v1254, -inf
    %v1281 = vrot.slane %v1280, 4
    %v1282 = vmax.f32 %v1280, %v1281
    %v1283 = vrot.slane %v1282, 2
    %v1284 = vmax.f32 %v1282, %v1283
    %v1285 = vrot.slane %v1284, 1
    %v1286 = vmax.f32 %v1284, %v1285
    %v1287 = vsel %vm1198, %v1261, -inf
    %v1288 = vrot.slane %v1287, 4
    %v1289 = vmax.f32 %v1287, %v1288
    %v1290 = vrot.slane %v1289, 2
    %v1291 = vmax.f32 %v1289, %v1290
    %v1292 = vrot.slane %v1291, 1
    %v1293 = vmax.f32 %v1291, %v1292
    %v1298 = vsel %vm709, %v1279, %v1272
    %v1299 = vsel %vm711, %v1286, %v1298
    %v1300 = vsel %vm713, %v1293, %v1299
    %1302 = vst [vmem:[#allocation4 + $0x7] sm:$0xf] %v1300
    %v1303 = vld [vmem:[#allocation4] sm:$0xff]
    %v1304 = vld [vmem:[#allocation4 + $0x8] sm:$0xf]
    %v1305 = vld [vmem:[#allocation17] sm:$0xff]
    %v1306 = vld [vmem:[#allocation17 + $0x8] sm:$0xff]
    %v1307 = vld [vmem:[#allocation17 + $0x10] sm:$0xff]
    %v1308 = vld [vmem:[#allocation17 + $0x18] sm:$0xff]
    %v1309 = vld [vmem:[#allocation17 + $0x20] sm:$0xff]
    %v1310 = vld [vmem:[#allocation17 + $0x28] sm:$0xff]
    %v1311 = vld [vmem:[#allocation17 + $0x30] sm:$0xff]
    %v1312 = vld [vmem:[#allocation17 + $0x38] sm:$0xff]
    %v1313 = vld [vmem:[#allocation17 + $0x40] sm:$0xff]
    %v1314 = vld [vmem:[#allocation17 + $0x48] sm:$0xff]
    %v1315 = vld [vmem:[#allocation17 + $0x50] sm:$0xff]
    %v1316 = vld [vmem:[#allocation17 + $0x58] sm:$0xff]
    %v1317 = vld [vmem:[#allocation17 + $0x60] sm:$0xff]
    %v1318 = vld [vmem:[#allocation17 + $0x68] sm:$0xff]
    %v1319 = vld [vmem:[#allocation17 + $0x70] sm:$0xff]
    %v1320 = vld [vmem:[#allocation17 + $0x78] sm:$0xff]
    %v1321 = vld [vmem:[#allocation17 + $0x80] sm:$0xff]
    %v1322 = vld [vmem:[#allocation17 + $0x88] sm:$0xff]
    %v1323 = vld [vmem:[#allocation17 + $0x90] sm:$0xff]
    %v1324 = vld [vmem:[#allocation17 + $0x98] sm:$0xff]
    %v1325 = vld [vmem:[#allocation17 + $0xa0] sm:$0xff]
    %v1326 = vld [vmem:[#allocation17 + $0xa8] sm:$0xff]
    %v1327 = vld [vmem:[#allocation17 + $0xb0] sm:$0xff]
    %v1328 = vld [vmem:[#allocation17 + $0xb8] sm:$0xff]
    %v1329 = vld [vmem:[#allocation17 + $0xc0] sm:$0xff]
    %v1330 = vld [vmem:[#allocation17 + $0xc8] sm:$0xff]
    %v1331 = vld [vmem:[#allocation17 + $0xd0] sm:$0xff]
    %v1332 = vld [vmem:[#allocation17 + $0xd8] sm:$0xff]
    %v1333 = vld [vmem:[#allocation17 + $0xe0] sm:$0xff]
    %v1334 = vld [vmem:[#allocation17 + $0xe8] sm:$0xff]
    %v1335 = vld [vmem:[#allocation17 + $0xf0] sm:$0xff]
    %v1336 = vld [vmem:[#allocation17 + $0xf8] sm:$0xff]
    %s1337 = scalar_lea.vmem [#allocation17], 256
    %v1338 = vld [vmem:[%s1337] sm:$0xff]
    %v1339 = vld [vmem:[%s1337 + $0x8] sm:$0xff]
    %v1340 = vld [vmem:[%s1337 + $0x10] sm:$0xff]
    %v1341 = vld [vmem:[%s1337 + $0x18] sm:$0xff]
    %v1342 = vld [vmem:[%s1337 + $0x20] sm:$0xff]
    %v1343 = vld [vmem:[%s1337 + $0x28] sm:$0xff]
    %v1344 = vld [vmem:[%s1337 + $0x30] sm:$0xff]
    %v1345 = vld [vmem:[%s1337 + $0x38] sm:$0xff]
    %v1346 = vld [vmem:[%s1337 + $0x40] sm:$0xff]
    %v1347 = vld [vmem:[%s1337 + $0x48] sm:$0xff]
    %v1348 = vld [vmem:[%s1337 + $0x50] sm:$0xff]
    %v1349 = vld [vmem:[%s1337 + $0x58] sm:$0xff]
    %v1350 = vld [vmem:[%s1337 + $0x60] sm:$0xff]
    %v1351 = vld [vmem:[%s1337 + $0x68] sm:$0xff]
    %v1352 = vld [vmem:[%s1337 + $0x70] sm:$0xff]
    %v1353 = vld [vmem:[%s1337 + $0x78] sm:$0xff]
    %v1354 = vld [vmem:[%s1337 + $0x80] sm:$0xff]
    %v1355 = vld [vmem:[%s1337 + $0x88] sm:$0xff]
    %v1356 = vld [vmem:[%s1337 + $0x90] sm:$0xff]
    %v1357 = vld [vmem:[%s1337 + $0x98] sm:$0xff]
    %v1358 = vld [vmem:[%s1337 + $0xa0] sm:$0xff]
    %v1359 = vld [vmem:[%s1337 + $0xa8] sm:$0xff]
    %v1360 = vld [vmem:[%s1337 + $0xb0] sm:$0xff]
    %v1361 = vld [vmem:[%s1337 + $0xb8] sm:$0xff]
    %v1362 = vld [vmem:[%s1337 + $0xc0] sm:$0xff]
    %v1363 = vld [vmem:[%s1337 + $0xc8] sm:$0xff]
    %v1364 = vld [vmem:[%s1337 + $0xd0] sm:$0xff]
    %v1365 = vld [vmem:[%s1337 + $0xd8] sm:$0xff]
    %v1366 = vld [vmem:[%s1337 + $0xe0] sm:$0xff]
    %v1367 = vld [vmem:[%s1337 + $0xe8] sm:$0xff]
    %v1368 = vld [vmem:[%s1337 + $0xf0] sm:$0xff]
    %v1369 = vld [vmem:[%s1337 + $0xf8] sm:$0xff]
    %v1372 = vrot.slane %v1303, 1
    %v1373 = vrot.slane %v1304, 1
    %v1374 = vsel %vm244, %v1372, %v1373
    %1377 = vmatprep.subr.mxu0 %v1339
    %1378 = vmatpush1.msra.mxu0 %v1338
    %1379 = vmatprep.subr.mxu0 %v1341
    %1380 = vmatpush1.msra.mxu0 %v1340
    %1381 = vmatprep.subr.mxu0 %v1343
    %1382 = vmatpush1.msra.mxu0 %v1342
    %1383 = vmatprep.subr.mxu0 %v1345
    %1384 = vmatpush1.msra.mxu0 %v1344
    %1385 = vmatprep.subr.mxu0 %v1347
    %1386 = vmatpush1.msra.mxu0 %v1346
    %1387 = vmatprep.subr.mxu0 %v1349
    %1388 = vmatpush1.msra.mxu0 %v1348
    %1389 = vmatprep.subr.mxu0 %v1351
    %1390 = vmatpush1.msra.mxu0 %v1350
    %1391 = vmatprep.subr.mxu0 %v1353
    %1392 = vmatpush1.msra.mxu0 %v1352
    %1393 = vmatprep.subr.mxu0 %v1355
    %1394 = vmatpush1.msra.mxu0 %v1354
    %1395 = vmatprep.subr.mxu0 %v1357
    %1396 = vmatpush1.msra.mxu0 %v1356
    %1397 = vmatprep.subr.mxu0 %v1359
    %1398 = vmatpush1.msra.mxu0 %v1358
    %1399 = vmatprep.subr.mxu0 %v1361
    %1400 = vmatpush1.msra.mxu0 %v1360
    %1401 = vmatprep.subr.mxu0 %v1363
    %1402 = vmatpush1.msra.mxu0 %v1362
    %1403 = vmatprep.subr.mxu0 %v1365
    %1404 = vmatpush1.msra.mxu0 %v1364
    %1405 = vmatprep.subr.mxu0 %v1367
    %1406 = vmatpush1.msra.mxu0 %v1366
    %1407 = vmatprep.subr.mxu0 %v1369
    %1408 = vmatpush1.msra.mxu0 %v1368
    %1409 = vmatprep.subr.mxu0 0.0
    %1410 = vmatpush1.msra.mxu0 0.0
    %1411 = vmatprep.subr.mxu0 0.0
    %1412 = vmatpush1.msra.mxu0 0.0
    %1413 = vmatprep.subr.mxu0 0.0
    %1414 = vmatpush1.msra.mxu0 0.0
    %1415 = vmatprep.subr.mxu0 0.0
    %1416 = vmatpush1.msra.mxu0 0.0
    %1417 = vmatprep.subr.mxu0 0.0
    %1418 = vmatpush1.msra.mxu0 0.0
    %1419 = vmatprep.subr.mxu0 0.0
    %1420 = vmatpush1.msra.mxu0 0.0
    %1421 = vmatprep.subr.mxu0 0.0
    %1422 = vmatpush1.msra.mxu0 0.0
    %1423 = vmatprep.subr.mxu0 0.0
    %1424 = vmatpush1.msra.mxu0 0.0
    %1425 = vmatprep.subr.mxu0 0.0
    %1426 = vmatpush1.msra.mxu0 0.0
    %1427 = vmatprep.subr.mxu0 0.0
    %1428 = vmatpush1.msra.mxu0 0.0
    %1429 = vmatprep.subr.mxu0 0.0
    %1430 = vmatpush1.msra.mxu0 0.0
    %1431 = vmatprep.subr.mxu0 0.0
    %1432 = vmatpush1.msra.mxu0 0.0
    %1433 = vmatprep.subr.mxu0 0.0
    %1434 = vmatpush1.msra.mxu0 0.0
    %1435 = vmatprep.subr.mxu0 0.0
    %1436 = vmatpush1.msra.mxu0 0.0
    %1437 = vmatprep.subr.mxu0 0.0
    %1438 = vmatpush1.msra.mxu0 0.0
    %1439 = vmatprep.subr.mxu0 0.0
    %1440 = vmatpush1.msra.mxu0 0.0
    %1441 = vmatprep.mubr.f32.mxu0 0.0
    %1442 = vmatmul.mubr.f32.gmra.mrb[0].mxu0 %v1374
    %v1443 = vpop.f32.mrb[0].mxu0
    %v1444 = vadd.f32 0.0, %v1443
    %v1445 = vpop.f32.mrb[0].mxu0
    %v1446 = vadd.f32 0.0, %v1445
    %1447 = vmatprep.mubr.f32.mxu0 0.0
    %1448 = vmatmul.mubr.f32.gmra.mrb[0].mxu0 %v1373
    %v1449 = vpop.f32.mrb[0].mxu0
    %v1450 = vadd.f32 0.0, %v1449
    %v1451 = vpop.f32.mrb[0].mxu0
    %v1452 = vadd.f32 0.0, %v1451
    %1453 = vdwg.mxu0
    %1454 = vmatprep.subr.mxu0 %v1306
    %1455 = vmatpush1.msra.mxu0 %v1305
    %1456 = vmatprep.subr.mxu0 %v1308
    %1457 = vmatpush1.msra.mxu0 %v1307
    %1458 = vmatprep.subr.mxu0 %v1310
    %1459 = vmatpush1.msra.mxu0 %v1309
    %1460 = vmatprep.subr.mxu0 %v1312
    %1461 = vmatpush1.msra.mxu0 %v1311
    %1462 = vmatprep.subr.mxu0 %v1314
    %1463 = vmatpush1.msra.mxu0 %v1313
    %1464 = vmatprep.subr.mxu0 %v1316
    %1465 = vmatpush1.msra.mxu0 %v1315
    %1466 = vmatprep.subr.mxu0 %v1318
    %1467 = vmatpush1.msra.mxu0 %v1317
    %1468 = vmatprep.subr.mxu0 %v1320
    %1469 = vmatpush1.msra.mxu0 %v1319
    %1470 = vmatprep.subr.mxu0 %v1322
    %1471 = vmatpush1.msra.mxu0 %v1321
    %1472 = vmatprep.subr.mxu0 %v1324
    %1473 = vmatpush1.msra.mxu0 %v1323
    %1474 = vmatprep.subr.mxu0 %v1326
    %1475 = vmatpush1.msra.mxu0 %v1325
    %1476 = vmatprep.subr.mxu0 %v1328
    %1477 = vmatpush1.msra.mxu0 %v1327
    %1478 = vmatprep.subr.mxu0 %v1330
    %1479 = vmatpush1.msra.mxu0 %v1329
    %1480 = vmatprep.subr.mxu0 %v1332
    %1481 = vmatpush1.msra.mxu0 %v1331
    %1482 = vmatprep.subr.mxu0 %v1334
    %1483 = vmatpush1.msra.mxu0 %v1333
    %1484 = vmatprep.subr.mxu0 %v1336
    %1485 = vmatpush1.msra.mxu0 %v1335
    %1486 = vmatprep.subr.mxu0 0.0
    %1487 = vmatpush1.msra.mxu0 0.0
    %1488 = vmatprep.subr.mxu0 0.0
    %1489 = vmatpush1.msra.mxu0 0.0
    %1490 = vmatprep.subr.mxu0 0.0
    %1491 = vmatpush1.msra.mxu0 0.0
    %1492 = vmatprep.subr.mxu0 0.0
    %1493 = vmatpush1.msra.mxu0 0.0
    %1494 = vmatprep.subr.mxu0 0.0
    %1495 = vmatpush1.msra.mxu0 0.0
    %1496 = vmatprep.subr.mxu0 0.0
    %1497 = vmatpush1.msra.mxu0 0.0
    %1498 = vmatprep.subr.mxu0 0.0
    %1499 = vmatpush1.msra.mxu0 0.0
    %1500 = vmatprep.subr.mxu0 0.0
    %1501 = vmatpush1.msra.mxu0 0.0
    %1502 = vmatprep.subr.mxu0 0.0
    %1503 = vmatpush1.msra.mxu0 0.0
    %1504 = vmatprep.subr.mxu0 0.0
    %1505 = vmatpush1.msra.mxu0 0.0
    %1506 = vmatprep.subr.mxu0 0.0
    %1507 = vmatpush1.msra.mxu0 0.0
    %1508 = vmatprep.subr.mxu0 0.0
    %1509 = vmatpush1.msra.mxu0 0.0
    %1510 = vmatprep.subr.mxu0 0.0
    %1511 = vmatpush1.msra.mxu0 0.0
    %1512 = vmatprep.subr.mxu0 0.0
    %1513 = vmatpush1.msra.mxu0 0.0
    %1514 = vmatprep.subr.mxu0 0.0
    %1515 = vmatpush1.msra.mxu0 0.0
    %1516 = vmatprep.subr.mxu0 0.0
    %1517 = vmatpush1.msra.mxu0 0.0
    %1518 = vmatprep.mubr.f32.mxu0 0.0
    %1519 = vmatmul.mubr.f32.gmra.mrb[0].mxu0 %v1303
    %v1520 = vpop.f32.mrb[0].mxu0
    %v1521 = vadd.f32 %v1444, %v1520
    %v1522 = vpop.f32.mrb[0].mxu0
    %v1523 = vadd.f32 %v1446, %v1522
    %1524 = vmatprep.mubr.f32.mxu0 0.0
    %1525 = vmatmul.mubr.f32.gmra.mrb[0].mxu0 %v1304
    %v1526 = vpop.f32.mrb[0].mxu0
    %v1527 = vadd.f32 %v1450, %v1526
    %v1528 = vpop.f32.mrb[0].mxu0
    %v1529 = vadd.f32 %v1452, %v1528
    %1530 = vdwg.mxu0
    %s1531 = scalar_lea.vmem [#allocation17], 512
    %v1532 = vld [vmem:[%s1531] sm:$0xff]
    %v1533 = vld [vmem:[%s1531 + $0x8] sm:$0xff]
    %v1534 = vld [vmem:[%s1531 + $0x10] sm:$0xff]
    %v1535 = vld [vmem:[%s1531 + $0x18] sm:$0xff]
    %v1536 = vld [vmem:[%s1531 + $0x20] sm:$0xff]
    %v1537 = vld [vmem:[%s1531 + $0x28] sm:$0xff]
    %v1538 = vld [vmem:[%s1531 + $0x30] sm:$0xff]
    %v1539 = vld [vmem:[%s1531 + $0x38] sm:$0xff]
    %v1540 = vld [vmem:[%s1531 + $0x40] sm:$0xff]
    %v1541 = vld [vmem:[%s1531 + $0x48] sm:$0xff]
    %v1542 = vld [vmem:[%s1531 + $0x50] sm:$0xff]
    %v1543 = vld [vmem:[%s1531 + $0x58] sm:$0xff]
    %v1544 = vld [vmem:[%s1531 + $0x60] sm:$0xff]
    %v1545 = vld [vmem:[%s1531 + $0x68] sm:$0xff]
    %v1546 = vld [vmem:[%s1531 + $0x70] sm:$0xff]
    %v1547 = vld [vmem:[%s1531 + $0x78] sm:$0xff]
    %v1548 = vld [vmem:[%s1531 + $0x80] sm:$0xff]
    %v1549 = vld [vmem:[%s1531 + $0x88] sm:$0xff]
    %v1550 = vld [vmem:[%s1531 + $0x90] sm:$0xff]
    %v1551 = vld [vmem:[%s1531 + $0x98] sm:$0xff]
    %v1552 = vld [vmem:[%s1531 + $0xa0] sm:$0xff]
    %v1553 = vld [vmem:[%s1531 + $0xa8] sm:$0xff]
    %v1554 = vld [vmem:[%s1531 + $0xb0] sm:$0xff]
    %v1555 = vld [vmem:[%s1531 + $0xb8] sm:$0xff]
    %v1556 = vld [vmem:[%s1531 + $0xc0] sm:$0xff]
    %v1557 = vld [vmem:[%s1531 + $0xc8] sm:$0xff]
    %v1558 = vld [vmem:[%s1531 + $0xd0] sm:$0xff]
    %v1559 = vld [vmem:[%s1531 + $0xd8] sm:$0xff]
    %v1560 = vld [vmem:[%s1531 + $0xe0] sm:$0xff]
    %v1561 = vld [vmem:[%s1531 + $0xe8] sm:$0xff]
    %v1562 = vld [vmem:[%s1531 + $0xf0] sm:$0xff]
    %v1563 = vld [vmem:[%s1531 + $0xf8] sm:$0xff]
    %v1564 = vrot.slane %v1303, 2
    %v1565 = vrot.slane %v1304, 2
    %v1566 = vsel %vm456, %v1564, %v1565
    %1569 = vmatprep.subr.mxu0 %v1533
    %1570 = vmatpush1.msra.mxu0 %v1532
    %1571 = vmatprep.subr.mxu0 %v1535
    %1572 = vmatpush1.msra.mxu0 %v1534
    %1573 = vmatprep.subr.mxu0 %v1537
    %1574 = vmatpush1.msra.mxu0 %v1536
    %1575 = vmatprep.subr.mxu0 %v1539
    %1576 = vmatpush1.msra.mxu0 %v1538
    %1577 = vmatprep.subr.mxu0 %v1541
    %1578 = vmatpush1.msra.mxu0 %v1540
    %1579 = vmatprep.subr.mxu0 %v1543
    %1580 = vmatpush1.msra.mxu0 %v1542
    %1581 = vmatprep.subr.mxu0 %v1545
    %1582 = vmatpush1.msra.mxu0 %v1544
    %1583 = vmatprep.subr.mxu0 %v1547
    %1584 = vmatpush1.msra.mxu0 %v1546
    %1585 = vmatprep.subr.mxu0 %v1549
    %1586 = vmatpush1.msra.mxu0 %v1548
    %1587 = vmatprep.subr.mxu0 %v1551
    %1588 = vmatpush1.msra.mxu0 %v1550
    %1589 = vmatprep.subr.mxu0 %v1553
    %1590 = vmatpush1.msra.mxu0 %v1552
    %1591 = vmatprep.subr.mxu0 %v1555
    %1592 = vmatpush1.msra.mxu0 %v1554
    %1593 = vmatprep.subr.mxu0 %v1557
    %1594 = vmatpush1.msra.mxu0 %v1556
    %1595 = vmatprep.subr.mxu0 %v1559
    %1596 = vmatpush1.msra.mxu0 %v1558
    %1597 = vmatprep.subr.mxu0 %v1561
    %1598 = vmatpush1.msra.mxu0 %v1560
    %1599 = vmatprep.subr.mxu0 %v1563
    %1600 = vmatpush1.msra.mxu0 %v1562
    %1601 = vmatprep.subr.mxu0 0.0
    %1602 = vmatpush1.msra.mxu0 0.0
    %1603 = vmatprep.subr.mxu0 0.0
    %1604 = vmatpush1.msra.mxu0 0.0
    %1605 = vmatprep.subr.mxu0 0.0
    %1606 = vmatpush1.msra.mxu0 0.0
    %1607 = vmatprep.subr.mxu0 0.0
    %1608 = vmatpush1.msra.mxu0 0.0
    %1609 = vmatprep.subr.mxu0 0.0
    %1610 = vmatpush1.msra.mxu0 0.0
    %1611 = vmatprep.subr.mxu0 0.0
    %1612 = vmatpush1.msra.mxu0 0.0
    %1613 = vmatprep.subr.mxu0 0.0
    %1614 = vmatpush1.msra.mxu0 0.0
    %1615 = vmatprep.subr.mxu0 0.0
    %1616 = vmatpush1.msra.mxu0 0.0
    %1617 = vmatprep.subr.mxu0 0.0
    %1618 = vmatpush1.msra.mxu0 0.0
    %1619 = vmatprep.subr.mxu0 0.0
    %1620 = vmatpush1.msra.mxu0 0.0
    %1621 = vmatprep.subr.mxu0 0.0
    %1622 = vmatpush1.msra.mxu0 0.0
    %1623 = vmatprep.subr.mxu0 0.0
    %1624 = vmatpush1.msra.mxu0 0.0
    %1625 = vmatprep.subr.mxu0 0.0
    %1626 = vmatpush1.msra.mxu0 0.0
    %1627 = vmatprep.subr.mxu0 0.0
    %1628 = vmatpush1.msra.mxu0 0.0
    %1629 = vmatprep.subr.mxu0 0.0
    %1630 = vmatpush1.msra.mxu0 0.0
    %1631 = vmatprep.subr.mxu0 0.0
    %1632 = vmatpush1.msra.mxu0 0.0
    %1633 = vmatprep.mubr.f32.mxu0 0.0
    %1634 = vmatmul.mubr.f32.gmra.mrb[0].mxu0 %v1566
    %v1635 = vpop.f32.mrb[0].mxu0
    %v1636 = vadd.f32 0.0, %v1635
    %v1637 = vpop.f32.mrb[0].mxu0
    %v1638 = vadd.f32 0.0, %v1637
    %1639 = vmatprep.mubr.f32.mxu0 0.0
    %1640 = vmatmul.mubr.f32.gmra.mrb[0].mxu0 %v1565
    %v1641 = vpop.f32.mrb[0].mxu0
    %v1642 = vadd.f32 0.0, %v1641
    %v1643 = vpop.f32.mrb[0].mxu0
    %v1644 = vadd.f32 0.0, %v1643
    %1645 = vdwg.mxu0
    %v1646 = vadd.f32 %v1521, %v1636
    %v1647 = vadd.f32 %v1523, %v1638
    %v1648 = vadd.f32 %v1527, %v1642
    %v1649 = vadd.f32 %v1529, %v1644
    %v1650 = vld [vmem:[#allocation18] sm:$0x3]
    %v1652 = vlaneseq
    %v1653 = vshrl.u32 %v1652, 7
    %v1654 = vsub.s32 0, %v1653
    %v1655 = vrot.slane %v1650, %v1654
    %v1656 = vlaneseq
    %v1657 = vshrl.u32 %v1656, 7
    %v1658 = vsub.s32 1, %v1657
    %v1659 = vrot.slane %v1650, %v1658
    %v1662 = vmul.f32 %v1646, %v1655
    %v1663 = vmul.f32 %v1647, %v1659
    %v1664 = vmul.f32 %v1648, %v1655
    %v1665 = vmul.f32 %v1649, %v1659
    %v1666 = vld [vmem:[#allocation20] sm:$0x3]
    %v1668 = vlaneseq
    %v1669 = vshrl.u32 %v1668, 7
    %v1670 = vsub.s32 0, %v1669
    %v1671 = vrot.slane %v1666, %v1670
    %v1672 = vlaneseq
    %v1673 = vshrl.u32 %v1672, 7
    %v1674 = vsub.s32 1, %v1673
    %v1675 = vrot.slane %v1666, %v1674
    %v1678 = vadd.f32 %v1662, %v1671
    %v1679 = vadd.f32 %v1663, %v1675
    %v1680 = vadd.f32 %v1664, %v1671
    %v1681 = vadd.f32 %v1665, %v1675
    %v1682 = vmax.f32 %v1678, 0.0
    %v1683 = vmax.f32 %v1679, 0.0
    %v1684 = vmax.f32 %v1680, 0.0
    %v1685 = vmax.f32 %v1681, 0.0
    %v1688 = vcombine.low %v1682, %v1683
    %v1690 = vunpack.c.l.s4 1983009808
    %v1691 = vunpack.c.0.s8 %v1690
    %v1692 = vlaneseq
    %v1693 = vshrl.u32 %v1692, 7
    %v1694 = vsub.s32 %v1691, %v1693
    %v1695 = vrot.slane %v1688, %v1694
    %v1696 = vcombine.high %v1695, %v1695
    %v1698 = vunpack.c.l.s4 1983009808
    %v1699 = vunpack.c.0.s8 %v1698
    %v1700 = vlaneseq
    %v1701 = vshrl.u32 %v1700, 7
    %v1702 = vsub.s32 %v1699, %v1701
    %v1703 = vrot.slane %v1695, %v1702
    %v1704 = vcombine.high %v1703, %v1703
    %v1706 = vunpack.c.l.s4 1983009808
    %v1707 = vunpack.c.0.s8 %v1706
    %v1708 = vlaneseq
    %v1709 = vshrl.u32 %v1708, 7
    %v1710 = vsub.s32 %v1707, %v1709
    %v1711 = vrot.slane %v1696, %v1710
    %v1712 = vcombine.high %v1711, %v1711
    %v1717 = vsel %vm1198, %v1703, -inf
    %v1718 = vrot.slane %v1717, 4
    %v1719 = vmax.f32 %v1717, %v1718
    %v1720 = vrot.slane %v1719, 2
    %v1721 = vmax.f32 %v1719, %v1720
    %v1722 = vrot.slane %v1721, 1
    %v1723 = vmax.f32 %v1721, %v1722
    %v1724 = vsel %vm1198, %v1704, -inf
    %v1725 = vrot.slane %v1724, 4
    %v1726 = vmax.f32 %v1724, %v1725
    %v1727 = vrot.slane %v1726, 2
    %v1728 = vmax.f32 %v1726, %v1727
    %v1729 = vrot.slane %v1728, 1
    %v1730 = vmax.f32 %v1728, %v1729
    %v1731 = vsel %vm1198, %v1711, -inf
    %v1732 = vrot.slane %v1731, 4
    %v1733 = vmax.f32 %v1731, %v1732
    %v1734 = vrot.slane %v1733, 2
    %v1735 = vmax.f32 %v1733, %v1734
    %v1736 = vrot.slane %v1735, 1
    %v1737 = vmax.f32 %v1735, %v1736
    %v1738 = vsel %vm1198, %v1712, -inf
    %v1739 = vrot.slane %v1738, 4
    %v1740 = vmax.f32 %v1738, %v1739
    %v1741 = vrot.slane %v1740, 2
    %v1742 = vmax.f32 %v1740, %v1741
    %v1743 = vrot.slane %v1742, 1
    %v1744 = vmax.f32 %v1742, %v1743
    %v1747 = vcombine.low %v1723, %v1730
    %v1749 = vunpack.c.l.s4 1966171168
    %v1750 = vunpack.c.0.s8 %v1749
    %v1751 = vlaneseq
    %v1752 = vshrl.u32 %v1751, 7
    %v1753 = vsub.s32 %v1750, %v1752
    %v1754 = vrot.slane %v1747, %v1753
    %v1756 = vunpack.c.l.s4 1966171168
    %v1757 = vunpack.c.0.s8 %v1756
    %v1758 = vlaneseq
    %v1759 = vshrl.u32 %v1758, 7
    %v1760 = vsub.s32 %v1757, %v1759
    %v1761 = vrot.slane %v1754, %v1760
    %v1763 = vlaneseq
    %vm1764 = vcmp.ge.s32.totalorder %v1763, 0
    %vm1765 = vcmp.lt.s32.totalorder %v1763, 256
    %vm1766 = vmand %vm1764, %vm1765
    %1767 = vst.msk [vmem:[#allocation5] ss:$2 sm:$0x3] %vm1766, %v1761
    %v1770 = vcombine.low %v1737, %v1744
    %v1772 = vunpack.c.l.s4 1966171168
    %v1773 = vunpack.c.0.s8 %v1772
    %v1774 = vlaneseq
    %v1775 = vshrl.u32 %v1774, 7
    %v1776 = vsub.s32 %v1773, %v1775
    %v1777 = vrot.slane %v1770, %v1776
    %v1779 = vunpack.c.l.s4 1966171168
    %v1780 = vunpack.c.0.s8 %v1779
    %v1781 = vlaneseq
    %v1782 = vshrl.u32 %v1781, 7
    %v1783 = vsub.s32 %v1780, %v1782
    %v1784 = vrot.slane %v1777, %v1783
    %s1786 = scalar_lea.vmem [#allocation5], 4
    %1787 = vst.msk [vmem:[%s1786] ss:$2 sm:$0x3] %vm1766, %v1784
    %v1790 = vcombine.high %v1682, %v1683
    %v1792 = vunpack.c.l.s4 1983009808
    %v1793 = vunpack.c.0.s8 %v1792
    %v1794 = vlaneseq
    %v1795 = vshrl.u32 %v1794, 7
    %v1796 = vsub.s32 %v1793, %v1795
    %v1797 = vrot.slane %v1790, %v1796
    %v1798 = vcombine.high %v1797, %v1797
    %v1799 = vcombine.low %v1684, %v1685
    %v1801 = vunpack.c.l.s4 1983009808
    %v1802 = vunpack.c.0.s8 %v1801
    %v1803 = vlaneseq
    %v1804 = vshrl.u32 %v1803, 7
    %v1805 = vsub.s32 %v1802, %v1804
    %v1806 = vrot.slane %v1799, %v1805
    %v1808 = vunpack.c.l.s4 1983009808
    %v1809 = vunpack.c.0.s8 %v1808
    %v1810 = vlaneseq
    %v1811 = vshrl.u32 %v1810, 7
    %v1812 = vsub.s32 %v1809, %v1811
    %v1813 = vrot.slane %v1798, %v1812
    %v1814 = vcombine.high %v1813, %v1813
    %v1816 = vunpack.c.l.s4 1983009808
    %v1817 = vunpack.c.0.s8 %v1816
    %v1818 = vlaneseq
    %v1819 = vshrl.u32 %v1818, 7
    %v1820 = vsub.s32 %v1817, %v1819
    %v1821 = vrot.slane %v1806, %v1820
    %v1822 = vcombine.high %v1821, %v1821
    %v1827 = vsel %vm1198, %v1813, -inf
    %v1828 = vrot.slane %v1827, 4
    %v1829 = vmax.f32 %v1827, %v1828
    %v1830 = vrot.slane %v1829, 2
    %v1831 = vmax.f32 %v1829, %v1830
    %v1832 = vrot.slane %v1831, 1
    %v1833 = vmax.f32 %v1831, %v1832
    %v1834 = vsel %vm1198, %v1814, -inf
    %v1835 = vrot.slane %v1834, 4
    %v1836 = vmax.f32 %v1834, %v1835
    %v1837 = vrot.slane %v1836, 2
    %v1838 = vmax.f32 %v1836, %v1837
    %v1839 = vrot.slane %v1838, 1
    %v1840 = vmax.f32 %v1838, %v1839
    %v1841 = vsel %vm1198, %v1821, -inf
    %v1842 = vrot.slane %v1841, 4
    %v1843 = vmax.f32 %v1841, %v1842
    %v1844 = vrot.slane %v1843, 2
    %v1845 = vmax.f32 %v1843, %v1844
    %v1846 = vrot.slane %v1845, 1
    %v1847 = vmax.f32 %v1845, %v1846
    %v1848 = vsel %vm1198, %v1822, -inf
    %v1849 = vrot.slane %v1848, 4
    %v1850 = vmax.f32 %v1848, %v1849
    %v1851 = vrot.slane %v1850, 2
    %v1852 = vmax.f32 %v1850, %v1851
    %v1853 = vrot.slane %v1852, 1
    %v1854 = vmax.f32 %v1852, %v1853
    %v1857 = vcombine.low %v1833, %v1840
    %v1859 = vunpack.c.l.s4 1966171168
    %v1860 = vunpack.c.0.s8 %v1859
    %v1861 = vlaneseq
    %v1862 = vshrl.u32 %v1861, 7
    %v1863 = vsub.s32 %v1860, %v1862
    %v1864 = vrot.slane %v1857, %v1863
    %v1866 = vunpack.c.l.s4 1966171168
    %v1867 = vunpack.c.0.s8 %v1866
    %v1868 = vlaneseq
    %v1869 = vshrl.u32 %v1868, 7
    %v1870 = vsub.s32 %v1867, %v1869
    %v1871 = vrot.slane %v1864, %v1870
    %s1873 = scalar_lea.vmem [#allocation5], 1
    %1874 = vst.msk [vmem:[%s1873] ss:$2 sm:$0x3] %vm1766, %v1871
    %v1877 = vcombine.low %v1847, %v1854
    %v1879 = vunpack.c.l.s4 1966171168
    %v1880 = vunpack.c.0.s8 %v1879
    %v1881 = vlaneseq
    %v1882 = vshrl.u32 %v1881, 7
    %v1883 = vsub.s32 %v1880, %v1882
    %v1884 = vrot.slane %v1877, %v1883
    %v1886 = vunpack.c.l.s4 1966171168
    %v1887 = vunpack.c.0.s8 %v1886
    %v1888 = vlaneseq
    %v1889 = vshrl.u32 %v1888, 7
    %v1890 = vsub.s32 %v1887, %v1889
    %v1891 = vrot.slane %v1884, %v1890
    %s1893 = scalar_lea.vmem [#allocation5], 5
    %1894 = vst.msk [vmem:[%s1893] ss:$2 sm:$0x3] %vm1766, %v1891
    %v1895 = vld [vmem:[#allocation5] sm:$0xff]
    %v1896 = vld [vmem:[#allocation21] sm:$0xff]
    %v1897 = vld [vmem:[#allocation21 + $0x8] sm:$0xff]
    %v1898 = vld [vmem:[#allocation21 + $0x10] sm:$0xff]
    %v1899 = vld [vmem:[#allocation21 + $0x18] sm:$0xff]
    %v1900 = vld [vmem:[#allocation21 + $0x20] sm:$0xff]
    %v1901 = vld [vmem:[#allocation21 + $0x28] sm:$0xff]
    %v1902 = vld [vmem:[#allocation21 + $0x30] sm:$0xff]
    %v1903 = vld [vmem:[#allocation21 + $0x38] sm:$0xff]
    %v1904 = vld [vmem:[#allocation21 + $0x40] sm:$0xff]
    %v1905 = vld [vmem:[#allocation21 + $0x48] sm:$0xff]
    %v1906 = vld [vmem:[#allocation21 + $0x50] sm:$0xff]
    %v1907 = vld [vmem:[#allocation21 + $0x58] sm:$0xff]
    %v1908 = vld [vmem:[#allocation21 + $0x60] sm:$0xff]
    %v1909 = vld [vmem:[#allocation21 + $0x68] sm:$0xff]
    %v1910 = vld [vmem:[#allocation21 + $0x70] sm:$0xff]
    %v1911 = vld [vmem:[#allocation21 + $0x78] sm:$0xff]
    %v1912 = vld [vmem:[#allocation21 + $0x80] sm:$0xff]
    %v1913 = vld [vmem:[#allocation21 + $0x88] sm:$0xff]
    %v1914 = vld [vmem:[#allocation21 + $0x90] sm:$0xff]
    %v1915 = vld [vmem:[#allocation21 + $0x98] sm:$0xff]
    %v1916 = vld [vmem:[#allocation21 + $0xa0] sm:$0xff]
    %v1917 = vld [vmem:[#allocation21 + $0xa8] sm:$0xff]
    %v1918 = vld [vmem:[#allocation21 + $0xb0] sm:$0xff]
    %v1919 = vld [vmem:[#allocation21 + $0xb8] sm:$0xff]
    %v1920 = vld [vmem:[#allocation21 + $0xc0] sm:$0xff]
    %v1921 = vld [vmem:[#allocation21 + $0xc8] sm:$0xff]
    %v1922 = vld [vmem:[#allocation21 + $0xd0] sm:$0xff]
    %v1923 = vld [vmem:[#allocation21 + $0xd8] sm:$0xff]
    %v1924 = vld [vmem:[#allocation21 + $0xe0] sm:$0xff]
    %v1925 = vld [vmem:[#allocation21 + $0xe8] sm:$0xff]
    %v1926 = vld [vmem:[#allocation21 + $0xf0] sm:$0xff]
    %v1927 = vld [vmem:[#allocation21 + $0xf8] sm:$0xff]
    %v1928 = vld [vmem:[#allocation21 + $0x100] sm:$0xff]
    %v1929 = vld [vmem:[#allocation21 + $0x108] sm:$0xff]
    %v1930 = vld [vmem:[#allocation21 + $0x110] sm:$0xff]
    %v1931 = vld [vmem:[#allocation21 + $0x118] sm:$0xff]
    %v1932 = vld [vmem:[#allocation21 + $0x120] sm:$0xff]
    %v1933 = vld [vmem:[#allocation21 + $0x128] sm:$0xff]
    %v1934 = vld [vmem:[#allocation21 + $0x130] sm:$0xff]
    %v1935 = vld [vmem:[#allocation21 + $0x138] sm:$0xff]
    %v1936 = vld [vmem:[#allocation21 + $0x140] sm:$0xff]
    %v1937 = vld [vmem:[#allocation21 + $0x148] sm:$0xff]
    %v1938 = vld [vmem:[#allocation21 + $0x150] sm:$0xff]
    %v1939 = vld [vmem:[#allocation21 + $0x158] sm:$0xff]
    %v1940 = vld [vmem:[#allocation21 + $0x160] sm:$0xff]
    %v1941 = vld [vmem:[#allocation21 + $0x168] sm:$0xff]
    %v1942 = vld [vmem:[#allocation21 + $0x170] sm:$0xff]
    %v1943 = vld [vmem:[#allocation21 + $0x178] sm:$0xff]
    %v1944 = vld [vmem:[#allocation21 + $0x180] sm:$0xff]
    %v1945 = vld [vmem:[#allocation21 + $0x188] sm:$0xff]
    %v1946 = vld [vmem:[#allocation21 + $0x190] sm:$0xff]
    %v1947 = vld [vmem:[#allocation21 + $0x198] sm:$0xff]
    %v1948 = vld [vmem:[#allocation21 + $0x1a0] sm:$0xff]
    %v1949 = vld [vmem:[#allocation21 + $0x1a8] sm:$0xff]
    %v1950 = vld [vmem:[#allocation21 + $0x1b0] sm:$0xff]
    %v1951 = vld [vmem:[#allocation21 + $0x1b8] sm:$0xff]
    %v1952 = vld [vmem:[#allocation21 + $0x1c0] sm:$0xff]
    %v1953 = vld [vmem:[#allocation21 + $0x1c8] sm:$0xff]
    %v1954 = vld [vmem:[#allocation21 + $0x1d0] sm:$0xff]
    %v1955 = vld [vmem:[#allocation21 + $0x1d8] sm:$0xff]
    %v1956 = vld [vmem:[#allocation21 + $0x1e0] sm:$0xff]
    %v1957 = vld [vmem:[#allocation21 + $0x1e8] sm:$0xff]
    %v1958 = vld [vmem:[#allocation21 + $0x1f0] sm:$0xff]
    %v1959 = vld [vmem:[#allocation21 + $0x1f8] sm:$0xff]
    %v1960 = vld [vmem:[#allocation21 + $0x200] sm:$0xff]
    %v1961 = vld [vmem:[#allocation21 + $0x208] sm:$0xff]
    %v1962 = vld [vmem:[#allocation21 + $0x210] sm:$0xff]
    %v1963 = vld [vmem:[#allocation21 + $0x218] sm:$0xff]
    %v1964 = vld [vmem:[#allocation21 + $0x220] sm:$0xff]
    %v1965 = vld [vmem:[#allocation21 + $0x228] sm:$0xff]
    %v1966 = vld [vmem:[#allocation21 + $0x230] sm:$0xff]
    %v1967 = vld [vmem:[#allocation21 + $0x238] sm:$0xff]
    %v1968 = vld [vmem:[#allocation21 + $0x240] sm:$0xff]
    %v1969 = vld [vmem:[#allocation21 + $0x248] sm:$0xff]
    %v1970 = vld [vmem:[#allocation21 + $0x250] sm:$0xff]
    %v1971 = vld [vmem:[#allocation21 + $0x258] sm:$0xff]
    %v1972 = vld [vmem:[#allocation21 + $0x260] sm:$0xff]
    %v1973 = vld [vmem:[#allocation21 + $0x268] sm:$0xff]
    %v1974 = vld [vmem:[#allocation21 + $0x270] sm:$0xff]
    %v1975 = vld [vmem:[#allocation21 + $0x278] sm:$0xff]
    %v1976 = vld [vmem:[#allocation21 + $0x280] sm:$0xff]
    %v1977 = vld [vmem:[#allocation21 + $0x288] sm:$0xff]
    %v1978 = vld [vmem:[#allocation21 + $0x290] sm:$0xff]
    %v1979 = vld [vmem:[#allocation21 + $0x298] sm:$0xff]
    %v1980 = vld [vmem:[#allocation21 + $0x2a0] sm:$0xff]
    %v1981 = vld [vmem:[#allocation21 + $0x2a8] sm:$0xff]
    %v1982 = vld [vmem:[#allocation21 + $0x2b0] sm:$0xff]
    %v1983 = vld [vmem:[#allocation21 + $0x2b8] sm:$0xff]
    %v1984 = vld [vmem:[#allocation21 + $0x2c0] sm:$0xff]
    %v1985 = vld [vmem:[#allocation21 + $0x2c8] sm:$0xff]
    %v1986 = vld [vmem:[#allocation21 + $0x2d0] sm:$0xff]
    %v1987 = vld [vmem:[#allocation21 + $0x2d8] sm:$0xff]
    %v1988 = vld [vmem:[#allocation21 + $0x2e0] sm:$0xff]
    %v1989 = vld [vmem:[#allocation21 + $0x2e8] sm:$0xff]
    %v1990 = vld [vmem:[#allocation21 + $0x2f0] sm:$0xff]
    %v1991 = vld [vmem:[#allocation21 + $0x2f8] sm:$0xff]
    %v1992 = vld [vmem:[#allocation21 + $0x300] sm:$0xff]
    %v1993 = vld [vmem:[#allocation21 + $0x308] sm:$0xff]
    %v1994 = vld [vmem:[#allocation21 + $0x310] sm:$0xff]
    %v1995 = vld [vmem:[#allocation21 + $0x318] sm:$0xff]
    %v1996 = vld [vmem:[#allocation21 + $0x320] sm:$0xff]
    %v1997 = vld [vmem:[#allocation21 + $0x328] sm:$0xff]
    %v1998 = vld [vmem:[#allocation21 + $0x330] sm:$0xff]
    %v1999 = vld [vmem:[#allocation21 + $0x338] sm:$0xff]
    %v2000 = vld [vmem:[#allocation21 + $0x340] sm:$0xff]
    %v2001 = vld [vmem:[#allocation21 + $0x348] sm:$0xff]
    %v2002 = vld [vmem:[#allocation21 + $0x350] sm:$0xff]
    %v2003 = vld [vmem:[#allocation21 + $0x358] sm:$0xff]
    %v2004 = vld [vmem:[#allocation21 + $0x360] sm:$0xff]
    %v2005 = vld [vmem:[#allocation21 + $0x368] sm:$0xff]
    %v2006 = vld [vmem:[#allocation21 + $0x370] sm:$0xff]
    %v2007 = vld [vmem:[#allocation21 + $0x378] sm:$0xff]
    %v2008 = vld [vmem:[#allocation21 + $0x380] sm:$0xff]
    %v2009 = vld [vmem:[#allocation21 + $0x388] sm:$0xff]
    %v2010 = vld [vmem:[#allocation21 + $0x390] sm:$0xff]
    %v2011 = vld [vmem:[#allocation21 + $0x398] sm:$0xff]
    %v2012 = vld [vmem:[#allocation21 + $0x3a0] sm:$0xff]
    %v2013 = vld [vmem:[#allocation21 + $0x3a8] sm:$0xff]
    %v2014 = vld [vmem:[#allocation21 + $0x3b0] sm:$0xff]
    %v2015 = vld [vmem:[#allocation21 + $0x3b8] sm:$0xff]
    %v2016 = vld [vmem:[#allocation21 + $0x3c0] sm:$0xff]
    %v2017 = vld [vmem:[#allocation21 + $0x3c8] sm:$0xff]
    %v2018 = vld [vmem:[#allocation21 + $0x3d0] sm:$0xff]
    %v2019 = vld [vmem:[#allocation21 + $0x3d8] sm:$0xff]
    %v2020 = vld [vmem:[#allocation21 + $0x3e0] sm:$0xff]
    %v2021 = vld [vmem:[#allocation21 + $0x3e8] sm:$0xff]
    %v2022 = vld [vmem:[#allocation21 + $0x3f0] sm:$0xff]
    %v2023 = vld [vmem:[#allocation21 + $0x3f8] sm:$0xff]
    %v2024 = vld [vmem:[#allocation21 + $0x400] sm:$0xff]
    %v2025 = vld [vmem:[#allocation21 + $0x408] sm:$0xff]
    %v2026 = vld [vmem:[#allocation21 + $0x410] sm:$0xff]
    %v2027 = vld [vmem:[#allocation21 + $0x418] sm:$0xff]
    %v2028 = vld [vmem:[#allocation21 + $0x420] sm:$0xff]
    %v2029 = vld [vmem:[#allocation21 + $0x428] sm:$0xff]
    %v2030 = vld [vmem:[#allocation21 + $0x430] sm:$0xff]
    %v2031 = vld [vmem:[#allocation21 + $0x438] sm:$0xff]
    %v2032 = vld [vmem:[#allocation21 + $0x440] sm:$0xff]
    %v2033 = vld [vmem:[#allocation21 + $0x448] sm:$0xff]
    %v2034 = vld [vmem:[#allocation21 + $0x450] sm:$0xff]
    %v2035 = vld [vmem:[#allocation21 + $0x458] sm:$0xff]
    %v2036 = vld [vmem:[#allocation21 + $0x460] sm:$0xff]
    %v2037 = vld [vmem:[#allocation21 + $0x468] sm:$0xff]
    %v2038 = vld [vmem:[#allocation21 + $0x470] sm:$0xff]
    %v2039 = vld [vmem:[#allocation21 + $0x478] sm:$0xff]
    %v2040 = vld [vmem:[#allocation21 + $0x480] sm:$0xff]
    %v2041 = vld [vmem:[#allocation21 + $0x488] sm:$0xff]
    %v2042 = vld [vmem:[#allocation21 + $0x490] sm:$0xff]
    %v2043 = vld [vmem:[#allocation21 + $0x498] sm:$0xff]
    %v2044 = vld [vmem:[#allocation21 + $0x4a0] sm:$0xff]
    %v2045 = vld [vmem:[#allocation21 + $0x4a8] sm:$0xff]
    %v2046 = vld [vmem:[#allocation21 + $0x4b0] sm:$0xff]
    %v2047 = vld [vmem:[#allocation21 + $0x4b8] sm:$0xff]
    %v2048 = vld [vmem:[#allocation21 + $0x4c0] sm:$0xff]
    %v2049 = vld [vmem:[#allocation21 + $0x4c8] sm:$0xff]
    %v2050 = vld [vmem:[#allocation21 + $0x4d0] sm:$0xff]
    %v2051 = vld [vmem:[#allocation21 + $0x4d8] sm:$0xff]
    %v2052 = vld [vmem:[#allocation21 + $0x4e0] sm:$0xff]
    %v2053 = vld [vmem:[#allocation21 + $0x4e8] sm:$0xff]
    %v2054 = vld [vmem:[#allocation21 + $0x4f0] sm:$0xff]
    %v2055 = vld [vmem:[#allocation21 + $0x4f8] sm:$0xff]
    %v2056 = vld [vmem:[#allocation21 + $0x500] sm:$0xff]
    %v2057 = vld [vmem:[#allocation21 + $0x508] sm:$0xff]
    %v2058 = vld [vmem:[#allocation21 + $0x510] sm:$0xff]
    %v2059 = vld [vmem:[#allocation21 + $0x518] sm:$0xff]
    %v2060 = vld [vmem:[#allocation21 + $0x520] sm:$0xff]
    %v2061 = vld [vmem:[#allocation21 + $0x528] sm:$0xff]
    %v2062 = vld [vmem:[#allocation21 + $0x530] sm:$0xff]
    %v2063 = vld [vmem:[#allocation21 + $0x538] sm:$0xff]
    %v2064 = vld [vmem:[#allocation21 + $0x540] sm:$0xff]
    %v2065 = vld [vmem:[#allocation21 + $0x548] sm:$0xff]
    %v2066 = vld [vmem:[#allocation21 + $0x550] sm:$0xff]
    %v2067 = vld [vmem:[#allocation21 + $0x558] sm:$0xff]
    %v2068 = vld [vmem:[#allocation21 + $0x560] sm:$0xff]
    %v2069 = vld [vmem:[#allocation21 + $0x568] sm:$0xff]
    %v2070 = vld [vmem:[#allocation21 + $0x570] sm:$0xff]
    %v2071 = vld [vmem:[#allocation21 + $0x578] sm:$0xff]
    %v2072 = vld [vmem:[#allocation21 + $0x580] sm:$0xff]
    %v2073 = vld [vmem:[#allocation21 + $0x588] sm:$0xff]
    %v2074 = vld [vmem:[#allocation21 + $0x590] sm:$0xff]
    %v2075 = vld [vmem:[#allocation21 + $0x598] sm:$0xff]
    %v2076 = vld [vmem:[#allocation21 + $0x5a0] sm:$0xff]
    %v2077 = vld [vmem:[#allocation21 + $0x5a8] sm:$0xff]
    %v2078 = vld [vmem:[#allocation21 + $0x5b0] sm:$0xff]
    %v2079 = vld [vmem:[#allocation21 + $0x5b8] sm:$0xff]
    %v2080 = vld [vmem:[#allocation21 + $0x5c0] sm:$0xff]
    %v2081 = vld [vmem:[#allocation21 + $0x5c8] sm:$0xff]
    %v2082 = vld [vmem:[#allocation21 + $0x5d0] sm:$0xff]
    %v2083 = vld [vmem:[#allocation21 + $0x5d8] sm:$0xff]
    %v2084 = vld [vmem:[#allocation21 + $0x5e0] sm:$0xff]
    %v2085 = vld [vmem:[#allocation21 + $0x5e8] sm:$0xff]
    %v2086 = vld [vmem:[#allocation21 + $0x5f0] sm:$0xff]
    %v2087 = vld [vmem:[#allocation21 + $0x5f8] sm:$0xff]
    %v2088 = vld [vmem:[#allocation21 + $0x600] sm:$0xff]
    %v2089 = vld [vmem:[#allocation21 + $0x608] sm:$0xff]
    %v2090 = vld [vmem:[#allocation21 + $0x610] sm:$0xff]
    %v2091 = vld [vmem:[#allocation21 + $0x618] sm:$0xff]
    %v2092 = vld [vmem:[#allocation21 + $0x620] sm:$0xff]
    %v2093 = vld [vmem:[#allocation21 + $0x628] sm:$0xff]
    %v2094 = vld [vmem:[#allocation21 + $0x630] sm:$0xff]
    %v2095 = vld [vmem:[#allocation21 + $0x638] sm:$0xff]
    %v2096 = vld [vmem:[#allocation21 + $0x640] sm:$0xff]
    %v2097 = vld [vmem:[#allocation21 + $0x648] sm:$0xff]
    %v2098 = vld [vmem:[#allocation21 + $0x650] sm:$0xff]
    %v2099 = vld [vmem:[#allocation21 + $0x658] sm:$0xff]
    %v2100 = vld [vmem:[#allocation21 + $0x660] sm:$0xff]
    %v2101 = vld [vmem:[#allocation21 + $0x668] sm:$0xff]
    %v2102 = vld [vmem:[#allocation21 + $0x670] sm:$0xff]
    %v2103 = vld [vmem:[#allocation21 + $0x678] sm:$0xff]
    %v2104 = vld [vmem:[#allocation21 + $0x680] sm:$0xff]
    %v2105 = vld [vmem:[#allocation21 + $0x688] sm:$0xff]
    %v2106 = vld [vmem:[#allocation21 + $0x690] sm:$0xff]
    %v2107 = vld [vmem:[#allocation21 + $0x698] sm:$0xff]
    %v2108 = vld [vmem:[#allocation21 + $0x6a0] sm:$0xff]
    %v2109 = vld [vmem:[#allocation21 + $0x6a8] sm:$0xff]
    %v2110 = vld [vmem:[#allocation21 + $0x6b0] sm:$0xff]
    %v2111 = vld [vmem:[#allocation21 + $0x6b8] sm:$0xff]
    %v2112 = vld [vmem:[#allocation21 + $0x6c0] sm:$0xff]
    %v2113 = vld [vmem:[#allocation21 + $0x6c8] sm:$0xff]
    %v2114 = vld [vmem:[#allocation21 + $0x6d0] sm:$0xff]
    %v2115 = vld [vmem:[#allocation21 + $0x6d8] sm:$0xff]
    %v2116 = vld [vmem:[#allocation21 + $0x6e0] sm:$0xff]
    %v2117 = vld [vmem:[#allocation21 + $0x6e8] sm:$0xff]
    %v2118 = vld [vmem:[#allocation21 + $0x6f0] sm:$0xff]
    %v2119 = vld [vmem:[#allocation21 + $0x6f8] sm:$0xff]
    %v2120 = vld [vmem:[#allocation21 + $0x700] sm:$0xff]
    %v2121 = vld [vmem:[#allocation21 + $0x708] sm:$0xff]
    %v2122 = vld [vmem:[#allocation21 + $0x710] sm:$0xff]
    %v2123 = vld [vmem:[#allocation21 + $0x718] sm:$0xff]
    %v2124 = vld [vmem:[#allocation21 + $0x720] sm:$0xff]
    %v2125 = vld [vmem:[#allocation21 + $0x728] sm:$0xff]
    %v2126 = vld [vmem:[#allocation21 + $0x730] sm:$0xff]
    %v2127 = vld [vmem:[#allocation21 + $0x738] sm:$0xff]
    %v2128 = vld [vmem:[#allocation21 + $0x740] sm:$0xff]
    %v2129 = vld [vmem:[#allocation21 + $0x748] sm:$0xff]
    %v2130 = vld [vmem:[#allocation21 + $0x750] sm:$0xff]
    %v2131 = vld [vmem:[#allocation21 + $0x758] sm:$0xff]
    %v2132 = vld [vmem:[#allocation21 + $0x760] sm:$0xff]
    %v2133 = vld [vmem:[#allocation21 + $0x768] sm:$0xff]
    %v2134 = vld [vmem:[#allocation21 + $0x770] sm:$0xff]
    %v2135 = vld [vmem:[#allocation21 + $0x778] sm:$0xff]
    %v2136 = vld [vmem:[#allocation21 + $0x780] sm:$0xff]
    %v2137 = vld [vmem:[#allocation21 + $0x788] sm:$0xff]
    %v2138 = vld [vmem:[#allocation21 + $0x790] sm:$0xff]
    %v2139 = vld [vmem:[#allocation21 + $0x798] sm:$0xff]
    %v2140 = vld [vmem:[#allocation21 + $0x7a0] sm:$0xff]
    %v2141 = vld [vmem:[#allocation21 + $0x7a8] sm:$0xff]
    %v2142 = vld [vmem:[#allocation21 + $0x7b0] sm:$0xff]
    %v2143 = vld [vmem:[#allocation21 + $0x7b8] sm:$0xff]
    %v2144 = vld [vmem:[#allocation21 + $0x7c0] sm:$0xff]
    %v2145 = vld [vmem:[#allocation21 + $0x7c8] sm:$0xff]
    %v2146 = vld [vmem:[#allocation21 + $0x7d0] sm:$0xff]
    %v2147 = vld [vmem:[#allocation21 + $0x7d8] sm:$0xff]
    %v2148 = vld [vmem:[#allocation21 + $0x7e0] sm:$0xff]
    %v2149 = vld [vmem:[#allocation21 + $0x7e8] sm:$0xff]
    %v2150 = vld [vmem:[#allocation21 + $0x7f0] sm:$0xff]
    %v2151 = vld [vmem:[#allocation21 + $0x7f8] sm:$0xff]
    %v2152 = vld [vmem:[#allocation21 + $0x800] sm:$0xff]
    %v2153 = vld [vmem:[#allocation21 + $0x808] sm:$0xff]
    %v2154 = vld [vmem:[#allocation21 + $0x810] sm:$0xff]
    %v2155 = vld [vmem:[#allocation21 + $0x818] sm:$0xff]
    %v2156 = vld [vmem:[#allocation21 + $0x820] sm:$0xff]
    %v2157 = vld [vmem:[#allocation21 + $0x828] sm:$0xff]
    %v2158 = vld [vmem:[#allocation21 + $0x830] sm:$0xff]
    %v2159 = vld [vmem:[#allocation21 + $0x838] sm:$0xff]
    %v2160 = vld [vmem:[#allocation21 + $0x840] sm:$0xff]
    %v2161 = vld [vmem:[#allocation21 + $0x848] sm:$0xff]
    %v2162 = vld [vmem:[#allocation21 + $0x850] sm:$0xff]
    %v2163 = vld [vmem:[#allocation21 + $0x858] sm:$0xff]
    %v2164 = vld [vmem:[#allocation21 + $0x860] sm:$0xff]
    %v2165 = vld [vmem:[#allocation21 + $0x868] sm:$0xff]
    %v2166 = vld [vmem:[#allocation21 + $0x870] sm:$0xff]
    %v2167 = vld [vmem:[#allocation21 + $0x878] sm:$0xff]
    %v2168 = vld [vmem:[#allocation21 + $0x880] sm:$0xff]
    %v2169 = vld [vmem:[#allocation21 + $0x888] sm:$0xff]
    %v2170 = vld [vmem:[#allocation21 + $0x890] sm:$0xff]
    %v2171 = vld [vmem:[#allocation21 + $0x898] sm:$0xff]
    %v2172 = vld [vmem:[#allocation21 + $0x8a0] sm:$0xff]
    %v2173 = vld [vmem:[#allocation21 + $0x8a8] sm:$0xff]
    %v2174 = vld [vmem:[#allocation21 + $0x8b0] sm:$0xff]
    %v2175 = vld [vmem:[#allocation21 + $0x8b8] sm:$0xff]
    %v2176 = vld [vmem:[#allocation21 + $0x8c0] sm:$0xff]
    %v2177 = vld [vmem:[#allocation21 + $0x8c8] sm:$0xff]
    %v2178 = vld [vmem:[#allocation21 + $0x8d0] sm:$0xff]
    %v2179 = vld [vmem:[#allocation21 + $0x8d8] sm:$0xff]
    %v2180 = vld [vmem:[#allocation21 + $0x8e0] sm:$0xff]
    %v2181 = vld [vmem:[#allocation21 + $0x8e8] sm:$0xff]
    %v2182 = vld [vmem:[#allocation21 + $0x8f0] sm:$0xff]
    %v2183 = vld [vmem:[#allocation21 + $0x8f8] sm:$0xff]
    %v2184 = vld [vmem:[#allocation21 + $0x900] sm:$0xff]
    %v2185 = vld [vmem:[#allocation21 + $0x908] sm:$0xff]
    %v2186 = vld [vmem:[#allocation21 + $0x910] sm:$0xff]
    %v2187 = vld [vmem:[#allocation21 + $0x918] sm:$0xff]
    %v2188 = vld [vmem:[#allocation21 + $0x920] sm:$0xff]
    %v2189 = vld [vmem:[#allocation21 + $0x928] sm:$0xff]
    %v2190 = vld [vmem:[#allocation21 + $0x930] sm:$0xff]
    %v2191 = vld [vmem:[#allocation21 + $0x938] sm:$0xff]
    %v2192 = vld [vmem:[#allocation21 + $0x940] sm:$0xff]
    %v2193 = vld [vmem:[#allocation21 + $0x948] sm:$0xff]
    %v2194 = vld [vmem:[#allocation21 + $0x950] sm:$0xff]
    %v2195 = vld [vmem:[#allocation21 + $0x958] sm:$0xff]
    %v2196 = vld [vmem:[#allocation21 + $0x960] sm:$0xff]
    %v2197 = vld [vmem:[#allocation21 + $0x968] sm:$0xff]
    %v2198 = vld [vmem:[#allocation21 + $0x970] sm:$0xff]
    %v2199 = vld [vmem:[#allocation21 + $0x978] sm:$0xff]
    %v2200 = vld [vmem:[#allocation21 + $0x980] sm:$0xff]
    %v2201 = vld [vmem:[#allocation21 + $0x988] sm:$0xff]
    %v2202 = vld [vmem:[#allocation21 + $0x990] sm:$0xff]
    %v2203 = vld [vmem:[#allocation21 + $0x998] sm:$0xff]
    %v2204 = vld [vmem:[#allocation21 + $0x9a0] sm:$0xff]
    %v2205 = vld [vmem:[#allocation21 + $0x9a8] sm:$0xff]
    %v2206 = vld [vmem:[#allocation21 + $0x9b0] sm:$0xff]
    %v2207 = vld [vmem:[#allocation21 + $0x9b8] sm:$0xff]
    %v2208 = vld [vmem:[#allocation21 + $0x9c0] sm:$0xff]
    %v2209 = vld [vmem:[#allocation21 + $0x9c8] sm:$0xff]
    %v2210 = vld [vmem:[#allocation21 + $0x9d0] sm:$0xff]
    %v2211 = vld [vmem:[#allocation21 + $0x9d8] sm:$0xff]
    %v2212 = vld [vmem:[#allocation21 + $0x9e0] sm:$0xff]
    %v2213 = vld [vmem:[#allocation21 + $0x9e8] sm:$0xff]
    %v2214 = vld [vmem:[#allocation21 + $0x9f0] sm:$0xff]
    %v2215 = vld [vmem:[#allocation21 + $0x9f8] sm:$0xff]
    %v2216 = vld [vmem:[#allocation21 + $0xa00] sm:$0xff]
    %v2217 = vld [vmem:[#allocation21 + $0xa08] sm:$0xff]
    %v2218 = vld [vmem:[#allocation21 + $0xa10] sm:$0xff]
    %v2219 = vld [vmem:[#allocation21 + $0xa18] sm:$0xff]
    %v2220 = vld [vmem:[#allocation21 + $0xa20] sm:$0xff]
    %v2221 = vld [vmem:[#allocation21 + $0xa28] sm:$0xff]
    %v2222 = vld [vmem:[#allocation21 + $0xa30] sm:$0xff]
    %v2223 = vld [vmem:[#allocation21 + $0xa38] sm:$0xff]
    %v2224 = vld [vmem:[#allocation21 + $0xa40] sm:$0xff]
    %v2225 = vld [vmem:[#allocation21 + $0xa48] sm:$0xff]
    %v2226 = vld [vmem:[#allocation21 + $0xa50] sm:$0xff]
    %v2227 = vld [vmem:[#allocation21 + $0xa58] sm:$0xff]
    %v2228 = vld [vmem:[#allocation21 + $0xa60] sm:$0xff]
    %v2229 = vld [vmem:[#allocation21 + $0xa68] sm:$0xff]
    %v2230 = vld [vmem:[#allocation21 + $0xa70] sm:$0xff]
    %v2231 = vld [vmem:[#allocation21 + $0xa78] sm:$0xff]
    %v2232 = vld [vmem:[#allocation21 + $0xa80] sm:$0xff]
    %v2233 = vld [vmem:[#allocation21 + $0xa88] sm:$0xff]
    %v2234 = vld [vmem:[#allocation21 + $0xa90] sm:$0xff]
    %v2235 = vld [vmem:[#allocation21 + $0xa98] sm:$0xff]
    %v2236 = vld [vmem:[#allocation21 + $0xaa0] sm:$0xff]
    %v2237 = vld [vmem:[#allocation21 + $0xaa8] sm:$0xff]
    %v2238 = vld [vmem:[#allocation21 + $0xab0] sm:$0xff]
    %v2239 = vld [vmem:[#allocation21 + $0xab8] sm:$0xff]
    %v2240 = vld [vmem:[#allocation21 + $0xac0] sm:$0xff]
    %v2241 = vld [vmem:[#allocation21 + $0xac8] sm:$0xff]
    %v2242 = vld [vmem:[#allocation21 + $0xad0] sm:$0xff]
    %v2243 = vld [vmem:[#allocation21 + $0xad8] sm:$0xff]
    %v2244 = vld [vmem:[#allocation21 + $0xae0] sm:$0xff]
    %v2245 = vld [vmem:[#allocation21 + $0xae8] sm:$0xff]
    %v2246 = vld [vmem:[#allocation21 + $0xaf0] sm:$0xff]
    %v2247 = vld [vmem:[#allocation21 + $0xaf8] sm:$0xff]
    %v2248 = vld [vmem:[#allocation21 + $0xb00] sm:$0xff]
    %v2249 = vld [vmem:[#allocation21 + $0xb08] sm:$0xff]
    %v2250 = vld [vmem:[#allocation21 + $0xb10] sm:$0xff]
    %v2251 = vld [vmem:[#allocation21 + $0xb18] sm:$0xff]
    %v2252 = vld [vmem:[#allocation21 + $0xb20] sm:$0xff]
    %v2253 = vld [vmem:[#allocation21 + $0xb28] sm:$0xff]
    %v2254 = vld [vmem:[#allocation21 + $0xb30] sm:$0xff]
    %v2255 = vld [vmem:[#allocation21 + $0xb38] sm:$0xff]
    %v2256 = vld [vmem:[#allocation21 + $0xb40] sm:$0xff]
    %v2257 = vld [vmem:[#allocation21 + $0xb48] sm:$0xff]
    %v2258 = vld [vmem:[#allocation21 + $0xb50] sm:$0xff]
    %v2259 = vld [vmem:[#allocation21 + $0xb58] sm:$0xff]
    %v2260 = vld [vmem:[#allocation21 + $0xb60] sm:$0xff]
    %v2261 = vld [vmem:[#allocation21 + $0xb68] sm:$0xff]
    %v2262 = vld [vmem:[#allocation21 + $0xb70] sm:$0xff]
    %v2263 = vld [vmem:[#allocation21 + $0xb78] sm:$0xff]
    %v2264 = vld [vmem:[#allocation21 + $0xb80] sm:$0xff]
    %v2265 = vld [vmem:[#allocation21 + $0xb88] sm:$0xff]
    %v2266 = vld [vmem:[#allocation21 + $0xb90] sm:$0xff]
    %v2267 = vld [vmem:[#allocation21 + $0xb98] sm:$0xff]
    %v2268 = vld [vmem:[#allocation21 + $0xba0] sm:$0xff]
    %v2269 = vld [vmem:[#allocation21 + $0xba8] sm:$0xff]
    %v2270 = vld [vmem:[#allocation21 + $0xbb0] sm:$0xff]
    %v2271 = vld [vmem:[#allocation21 + $0xbb8] sm:$0xff]
    %v2272 = vld [vmem:[#allocation21 + $0xbc0] sm:$0xff]
    %v2273 = vld [vmem:[#allocation21 + $0xbc8] sm:$0xff]
    %v2274 = vld [vmem:[#allocation21 + $0xbd0] sm:$0xff]
    %v2275 = vld [vmem:[#allocation21 + $0xbd8] sm:$0xff]
    %v2276 = vld [vmem:[#allocation21 + $0xbe0] sm:$0xff]
    %v2277 = vld [vmem:[#allocation21 + $0xbe8] sm:$0xff]
    %v2278 = vld [vmem:[#allocation21 + $0xbf0] sm:$0xff]
    %v2279 = vld [vmem:[#allocation21 + $0xbf8] sm:$0xff]
    %v2280 = vld [vmem:[#allocation21 + $0xc00] sm:$0xff]
    %v2281 = vld [vmem:[#allocation21 + $0xc08] sm:$0xff]
    %v2282 = vld [vmem:[#allocation21 + $0xc10] sm:$0xff]
    %v2283 = vld [vmem:[#allocation21 + $0xc18] sm:$0xff]
    %v2284 = vld [vmem:[#allocation21 + $0xc20] sm:$0xff]
    %v2285 = vld [vmem:[#allocation21 + $0xc28] sm:$0xff]
    %v2286 = vld [vmem:[#allocation21 + $0xc30] sm:$0xff]
    %v2287 = vld [vmem:[#allocation21 + $0xc38] sm:$0xff]
    %v2288 = vld [vmem:[#allocation21 + $0xc40] sm:$0xff]
    %v2289 = vld [vmem:[#allocation21 + $0xc48] sm:$0xff]
    %v2290 = vld [vmem:[#allocation21 + $0xc50] sm:$0xff]
    %v2291 = vld [vmem:[#allocation21 + $0xc58] sm:$0xff]
    %v2292 = vld [vmem:[#allocation21 + $0xc60] sm:$0xff]
    %v2293 = vld [vmem:[#allocation21 + $0xc68] sm:$0xff]
    %v2294 = vld [vmem:[#allocation21 + $0xc70] sm:$0xff]
    %v2295 = vld [vmem:[#allocation21 + $0xc78] sm:$0xff]
    %v2296 = vld [vmem:[#allocation21 + $0xc80] sm:$0xff]
    %v2297 = vld [vmem:[#allocation21 + $0xc88] sm:$0xff]
    %v2298 = vld [vmem:[#allocation21 + $0xc90] sm:$0xff]
    %v2299 = vld [vmem:[#allocation21 + $0xc98] sm:$0xff]
    %v2300 = vld [vmem:[#allocation21 + $0xca0] sm:$0xff]
    %v2301 = vld [vmem:[#allocation21 + $0xca8] sm:$0xff]
    %v2302 = vld [vmem:[#allocation21 + $0xcb0] sm:$0xff]
    %v2303 = vld [vmem:[#allocation21 + $0xcb8] sm:$0xff]
    %v2304 = vld [vmem:[#allocation21 + $0xcc0] sm:$0xff]
    %v2305 = vld [vmem:[#allocation21 + $0xcc8] sm:$0xff]
    %v2306 = vld [vmem:[#allocation21 + $0xcd0] sm:$0xff]
    %v2307 = vld [vmem:[#allocation21 + $0xcd8] sm:$0xff]
    %v2308 = vld [vmem:[#allocation21 + $0xce0] sm:$0xff]
    %v2309 = vld [vmem:[#allocation21 + $0xce8] sm:$0xff]
    %v2310 = vld [vmem:[#allocation21 + $0xcf0] sm:$0xff]
    %v2311 = vld [vmem:[#allocation21 + $0xcf8] sm:$0xff]
    %v2312 = vld [vmem:[#allocation21 + $0xd00] sm:$0xff]
    %v2313 = vld [vmem:[#allocation21 + $0xd08] sm:$0xff]
    %v2314 = vld [vmem:[#allocation21 + $0xd10] sm:$0xff]
    %v2315 = vld [vmem:[#allocation21 + $0xd18] sm:$0xff]
    %v2316 = vld [vmem:[#allocation21 + $0xd20] sm:$0xff]
    %v2317 = vld [vmem:[#allocation21 + $0xd28] sm:$0xff]
    %v2318 = vld [vmem:[#allocation21 + $0xd30] sm:$0xff]
    %v2319 = vld [vmem:[#allocation21 + $0xd38] sm:$0xff]
    %v2320 = vld [vmem:[#allocation21 + $0xd40] sm:$0xff]
    %v2321 = vld [vmem:[#allocation21 + $0xd48] sm:$0xff]
    %v2322 = vld [vmem:[#allocation21 + $0xd50] sm:$0xff]
    %v2323 = vld [vmem:[#allocation21 + $0xd58] sm:$0xff]
    %v2324 = vld [vmem:[#allocation21 + $0xd60] sm:$0xff]
    %v2325 = vld [vmem:[#allocation21 + $0xd68] sm:$0xff]
    %v2326 = vld [vmem:[#allocation21 + $0xd70] sm:$0xff]
    %v2327 = vld [vmem:[#allocation21 + $0xd78] sm:$0xff]
    %v2328 = vld [vmem:[#allocation21 + $0xd80] sm:$0xff]
    %v2329 = vld [vmem:[#allocation21 + $0xd88] sm:$0xff]
    %v2330 = vld [vmem:[#allocation21 + $0xd90] sm:$0xff]
    %v2331 = vld [vmem:[#allocation21 + $0xd98] sm:$0xff]
    %v2332 = vld [vmem:[#allocation21 + $0xda0] sm:$0xff]
    %v2333 = vld [vmem:[#allocation21 + $0xda8] sm:$0xff]
    %v2334 = vld [vmem:[#allocation21 + $0xdb0] sm:$0xff]
    %v2335 = vld [vmem:[#allocation21 + $0xdb8] sm:$0xff]
    %v2336 = vld [vmem:[#allocation21 + $0xdc0] sm:$0xff]
    %v2337 = vld [vmem:[#allocation21 + $0xdc8] sm:$0xff]
    %v2338 = vld [vmem:[#allocation21 + $0xdd0] sm:$0xff]
    %v2339 = vld [vmem:[#allocation21 + $0xdd8] sm:$0xff]
    %v2340 = vld [vmem:[#allocation21 + $0xde0] sm:$0xff]
    %v2341 = vld [vmem:[#allocation21 + $0xde8] sm:$0xff]
    %v2342 = vld [vmem:[#allocation21 + $0xdf0] sm:$0xff]
    %v2343 = vld [vmem:[#allocation21 + $0xdf8] sm:$0xff]
    %v2344 = vld [vmem:[#allocation21 + $0xe00] sm:$0xff]
    %v2345 = vld [vmem:[#allocation21 + $0xe08] sm:$0xff]
    %v2346 = vld [vmem:[#allocation21 + $0xe10] sm:$0xff]
    %v2347 = vld [vmem:[#allocation21 + $0xe18] sm:$0xff]
    %v2348 = vld [vmem:[#allocation21 + $0xe20] sm:$0xff]
    %v2349 = vld [vmem:[#allocation21 + $0xe28] sm:$0xff]
    %v2350 = vld [vmem:[#allocation21 + $0xe30] sm:$0xff]
    %v2351 = vld [vmem:[#allocation21 + $0xe38] sm:$0xff]
    %v2352 = vld [vmem:[#allocation21 + $0xe40] sm:$0xff]
    %v2353 = vld [vmem:[#allocation21 + $0xe48] sm:$0xff]
    %v2354 = vld [vmem:[#allocation21 + $0xe50] sm:$0xff]
    %v2355 = vld [vmem:[#allocation21 + $0xe58] sm:$0xff]
    %v2356 = vld [vmem:[#allocation21 + $0xe60] sm:$0xff]
    %v2357 = vld [vmem:[#allocation21 + $0xe68] sm:$0xff]
    %v2358 = vld [vmem:[#allocation21 + $0xe70] sm:$0xff]
    %v2359 = vld [vmem:[#allocation21 + $0xe78] sm:$0xff]
    %v2360 = vld [vmem:[#allocation21 + $0xe80] sm:$0xff]
    %v2361 = vld [vmem:[#allocation21 + $0xe88] sm:$0xff]
    %v2362 = vld [vmem:[#allocation21 + $0xe90] sm:$0xff]
    %v2363 = vld [vmem:[#allocation21 + $0xe98] sm:$0xff]
    %v2364 = vld [vmem:[#allocation21 + $0xea0] sm:$0xff]
    %v2365 = vld [vmem:[#allocation21 + $0xea8] sm:$0xff]
    %v2366 = vld [vmem:[#allocation21 + $0xeb0] sm:$0xff]
    %v2367 = vld [vmem:[#allocation21 + $0xeb8] sm:$0xff]
    %v2368 = vld [vmem:[#allocation21 + $0xec0] sm:$0xff]
    %v2369 = vld [vmem:[#allocation21 + $0xec8] sm:$0xff]
    %v2370 = vld [vmem:[#allocation21 + $0xed0] sm:$0xff]
    %v2371 = vld [vmem:[#allocation21 + $0xed8] sm:$0xff]
    %v2372 = vld [vmem:[#allocation21 + $0xee0] sm:$0xff]
    %v2373 = vld [vmem:[#allocation21 + $0xee8] sm:$0xff]
    %v2374 = vld [vmem:[#allocation21 + $0xef0] sm:$0xff]
    %v2375 = vld [vmem:[#allocation21 + $0xef8] sm:$0xff]
    %v2376 = vld [vmem:[#allocation21 + $0xf00] sm:$0xff]
    %v2377 = vld [vmem:[#allocation21 + $0xf08] sm:$0xff]
    %v2378 = vld [vmem:[#allocation21 + $0xf10] sm:$0xff]
    %v2379 = vld [vmem:[#allocation21 + $0xf18] sm:$0xff]
    %v2380 = vld [vmem:[#allocation21 + $0xf20] sm:$0xff]
    %v2381 = vld [vmem:[#allocation21 + $0xf28] sm:$0xff]
    %v2382 = vld [vmem:[#allocation21 + $0xf30] sm:$0xff]
    %v2383 = vld [vmem:[#allocation21 + $0xf38] sm:$0xff]
    %v2384 = vld [vmem:[#allocation21 + $0xf40] sm:$0xff]
    %v2385 = vld [vmem:[#allocation21 + $0xf48] sm:$0xff]
    %v2386 = vld [vmem:[#allocation21 + $0xf50] sm:$0xff]
    %v2387 = vld [vmem:[#allocation21 + $0xf58] sm:$0xff]
    %v2388 = vld [vmem:[#allocation21 + $0xf60] sm:$0xff]
    %v2389 = vld [vmem:[#allocation21 + $0xf68] sm:$0xff]
    %v2390 = vld [vmem:[#allocation21 + $0xf70] sm:$0xff]
    %v2391 = vld [vmem:[#allocation21 + $0xf78] sm:$0xff]
    %v2392 = vld [vmem:[#allocation21 + $0xf80] sm:$0xff]
    %v2393 = vld [vmem:[#allocation21 + $0xf88] sm:$0xff]
    %v2394 = vld [vmem:[#allocation21 + $0xf90] sm:$0xff]
    %v2395 = vld [vmem:[#allocation21 + $0xf98] sm:$0xff]
    %v2396 = vld [vmem:[#allocation21 + $0xfa0] sm:$0xff]
    %v2397 = vld [vmem:[#allocation21 + $0xfa8] sm:$0xff]
    %v2398 = vld [vmem:[#allocation21 + $0xfb0] sm:$0xff]
    %v2399 = vld [vmem:[#allocation21 + $0xfb8] sm:$0xff]
    %v2400 = vld [vmem:[#allocation21 + $0xfc0] sm:$0xff]
    %v2401 = vld [vmem:[#allocation21 + $0xfc8] sm:$0xff]
    %v2402 = vld [vmem:[#allocation21 + $0xfd0] sm:$0xff]
    %v2403 = vld [vmem:[#allocation21 + $0xfd8] sm:$0xff]
    %v2404 = vld [vmem:[#allocation21 + $0xfe0] sm:$0xff]
    %v2405 = vld [vmem:[#allocation21 + $0xfe8] sm:$0xff]
    %v2406 = vld [vmem:[#allocation21 + $0xff0] sm:$0xff]
    %v2407 = vld [vmem:[#allocation21 + $0xff8] sm:$0xff]
    %v2408 = vld [vmem:[#allocation23] sm:$0xff]
    %v2410 = vlaneseq
    %v2411 = vshrl.u32 %v2410, 7
    %v2412 = vsub.s32 0, %v2411
    %v2413 = vrot.slane %v2408, %v2412
    %v2414 = vlaneseq
    %v2415 = vshrl.u32 %v2414, 7
    %v2416 = vsub.s32 1, %v2415
    %v2417 = vrot.slane %v2408, %v2416
    %v2418 = vlaneseq
    %v2419 = vshrl.u32 %v2418, 7
    %v2420 = vsub.s32 2, %v2419
    %v2421 = vrot.slane %v2408, %v2420
    %v2422 = vlaneseq
    %v2423 = vshrl.u32 %v2422, 7
    %v2424 = vsub.s32 3, %v2423
    %v2425 = vrot.slane %v2408, %v2424
    %v2426 = vlaneseq
    %v2427 = vshrl.u32 %v2426, 7
    %v2428 = vsub.s32 4, %v2427
    %v2429 = vrot.slane %v2408, %v2428
    %v2430 = vlaneseq
    %v2431 = vshrl.u32 %v2430, 7
    %v2432 = vsub.s32 5, %v2431
    %v2433 = vrot.slane %v2408, %v2432
    %v2434 = vlaneseq
    %v2435 = vshrl.u32 %v2434, 7
    %v2436 = vsub.s32 6, %v2435
    %v2437 = vrot.slane %v2408, %v2436
    %v2438 = vlaneseq
    %v2439 = vshrl.u32 %v2438, 7
    %v2440 = vsub.s32 7, %v2439
    %v2441 = vrot.slane %v2408, %v2440
    %v2451 = vcombine.high %v1895, %v1895
    %v2453 = vunpack.c.l.s4 1983009808
    %v2454 = vunpack.c.0.s8 %v2453
    %v2455 = vlaneseq
    %v2456 = vshrl.u32 %v2455, 7
    %v2457 = vsub.s32 %v2454, %v2456
    %v2458 = vrot.slane %v1895, %v2457
    %v2460 = vunpack.c.l.s4 1983009808
    %v2461 = vunpack.c.0.s8 %v2460
    %v2462 = vlaneseq
    %v2463 = vshrl.u32 %v2462, 7
    %v2464 = vsub.s32 %v2461, %v2463
    %v2465 = vrot.slane %v2451, %v2464
    %v2466 = vcombine.high %v2458, %v2458
    %v2467 = vcombine.high %v2465, %v2465
    %2472 = vmatprep.subr.mxu0 %v1897
    %2473 = vmatpush1.msra.mxu0 %v1896
    %2474 = vmatprep.subr.mxu0 %v1905
    %2475 = vmatpush1.msra.mxu0 %v1904
    %2476 = vmatprep.subr.mxu0 %v1913
    %2477 = vmatpush1.msra.mxu0 %v1912
    %2478 = vmatprep.subr.mxu0 %v1921
    %2479 = vmatpush1.msra.mxu0 %v1920
    %2480 = vmatprep.subr.mxu0 %v1929
    %2481 = vmatpush1.msra.mxu0 %v1928
    %2482 = vmatprep.subr.mxu0 %v1937
    %2483 = vmatpush1.msra.mxu0 %v1936
    %2484 = vmatprep.subr.mxu0 %v1945
    %2485 = vmatpush1.msra.mxu0 %v1944
    %2486 = vmatprep.subr.mxu0 %v1953
    %2487 = vmatpush1.msra.mxu0 %v1952
    %2488 = vmatprep.subr.mxu0 %v1961
    %2489 = vmatpush1.msra.mxu0 %v1960
    %2490 = vmatprep.subr.mxu0 %v1969
    %2491 = vmatpush1.msra.mxu0 %v1968
    %2492 = vmatprep.subr.mxu0 %v1977
    %2493 = vmatpush1.msra.mxu0 %v1976
    %2494 = vmatprep.subr.mxu0 %v1985
    %2495 = vmatpush1.msra.mxu0 %v1984
    %2496 = vmatprep.subr.mxu0 %v1993
    %2497 = vmatpush1.msra.mxu0 %v1992
    %2498 = vmatprep.subr.mxu0 %v2001
    %2499 = vmatpush1.msra.mxu0 %v2000
    %2500 = vmatprep.subr.mxu0 %v2009
    %2501 = vmatpush1.msra.mxu0 %v2008
    %2502 = vmatprep.subr.mxu0 %v2017
    %2503 = vmatpush1.msra.mxu0 %v2016
    %2504 = vmatprep.subr.mxu0 %v2025
    %2505 = vmatpush1.msra.mxu0 %v2024
    %2506 = vmatprep.subr.mxu0 %v2033
    %2507 = vmatpush1.msra.mxu0 %v2032
    %2508 = vmatprep.subr.mxu0 %v2041
    %2509 = vmatpush1.msra.mxu0 %v2040
    %2510 = vmatprep.subr.mxu0 %v2049
    %2511 = vmatpush1.msra.mxu0 %v2048
    %2512 = vmatprep.subr.mxu0 %v2057
    %2513 = vmatpush1.msra.mxu0 %v2056
    %2514 = vmatprep.subr.mxu0 %v2065
    %2515 = vmatpush1.msra.mxu0 %v2064
    %2516 = vmatprep.subr.mxu0 %v2073
    %2517 = vmatpush1.msra.mxu0 %v2072
    %2518 = vmatprep.subr.mxu0 %v2081
    %2519 = vmatpush1.msra.mxu0 %v2080
    %2520 = vmatprep.subr.mxu0 %v2089
    %2521 = vmatpush1.msra.mxu0 %v2088
    %2522 = vmatprep.subr.mxu0 %v2097
    %2523 = vmatpush1.msra.mxu0 %v2096
    %2524 = vmatprep.subr.mxu0 %v2105
    %2525 = vmatpush1.msra.mxu0 %v2104
    %2526 = vmatprep.subr.mxu0 %v2113
    %2527 = vmatpush1.msra.mxu0 %v2112
    %2528 = vmatprep.subr.mxu0 %v2121
    %2529 = vmatpush1.msra.mxu0 %v2120
    %2530 = vmatprep.subr.mxu0 %v2129
    %2531 = vmatpush1.msra.mxu0 %v2128
    %2532 = vmatprep.subr.mxu0 %v2137
    %2533 = vmatpush1.msra.mxu0 %v2136
    %2534 = vmatprep.subr.mxu0 %v2145
    %2535 = vmatpush1.msra.mxu0 %v2144
    %2536 = vmatprep.mubr.f32.mxu0 %v2466
    %2537 = vmatmul.mubr.f32.gmra.mrb[0].mxu0 %v2458
    %v2538 = vpop.f32.mrb[0].mxu0
    %v2539 = vadd.f32 %v2413, %v2538
    %v2540 = vpop.f32.mrb[0].mxu0
    %v2541 = vadd.f32 %v2417, %v2540
    %2542 = vdwg.mxu0
    %2543 = vmatprep.subr.mxu0 %v2153
    %2544 = vmatpush1.msra.mxu0 %v2152
    %2545 = vmatprep.subr.mxu0 %v2161
    %2546 = vmatpush1.msra.mxu0 %v2160
    %2547 = vmatprep.subr.mxu0 %v2169
    %2548 = vmatpush1.msra.mxu0 %v2168
    %2549 = vmatprep.subr.mxu0 %v2177
    %2550 = vmatpush1.msra.mxu0 %v2176
    %2551 = vmatprep.subr.mxu0 %v2185
    %2552 = vmatpush1.msra.mxu0 %v2184
    %2553 = vmatprep.subr.mxu0 %v2193
    %2554 = vmatpush1.msra.mxu0 %v2192
    %2555 = vmatprep.subr.mxu0 %v2201
    %2556 = vmatpush1.msra.mxu0 %v2200
    %2557 = vmatprep.subr.mxu0 %v2209
    %2558 = vmatpush1.msra.mxu0 %v2208
    %2559 = vmatprep.subr.mxu0 %v2217
    %2560 = vmatpush1.msra.mxu0 %v2216
    %2561 = vmatprep.subr.mxu0 %v2225
    %2562 = vmatpush1.msra.mxu0 %v2224
    %2563 = vmatprep.subr.mxu0 %v2233
    %2564 = vmatpush1.msra.mxu0 %v2232
    %2565 = vmatprep.subr.mxu0 %v2241
    %2566 = vmatpush1.msra.mxu0 %v2240
    %2567 = vmatprep.subr.mxu0 %v2249
    %2568 = vmatpush1.msra.mxu0 %v2248
    %2569 = vmatprep.subr.mxu0 %v2257
    %2570 = vmatpush1.msra.mxu0 %v2256
    %2571 = vmatprep.subr.mxu0 %v2265
    %2572 = vmatpush1.msra.mxu0 %v2264
    %2573 = vmatprep.subr.mxu0 %v2273
    %2574 = vmatpush1.msra.mxu0 %v2272
    %2575 = vmatprep.subr.mxu0 %v2281
    %2576 = vmatpush1.msra.mxu0 %v2280
    %2577 = vmatprep.subr.mxu0 %v2289
    %2578 = vmatpush1.msra.mxu0 %v2288
    %2579 = vmatprep.subr.mxu0 %v2297
    %2580 = vmatpush1.msra.mxu0 %v2296
    %2581 = vmatprep.subr.mxu0 %v2305
    %2582 = vmatpush1.msra.mxu0 %v2304
    %2583 = vmatprep.subr.mxu0 %v2313
    %2584 = vmatpush1.msra.mxu0 %v2312
    %2585 = vmatprep.subr.mxu0 %v2321
    %2586 = vmatpush1.msra.mxu0 %v2320
    %2587 = vmatprep.subr.mxu0 %v2329
    %2588 = vmatpush1.msra.mxu0 %v2328
    %2589 = vmatprep.subr.mxu0 %v2337
    %2590 = vmatpush1.msra.mxu0 %v2336
    %2591 = vmatprep.subr.mxu0 %v2345
    %2592 = vmatpush1.msra.mxu0 %v2344
    %2593 = vmatprep.subr.mxu0 %v2353
    %2594 = vmatpush1.msra.mxu0 %v2352
    %2595 = vmatprep.subr.mxu0 %v2361
    %2596 = vmatpush1.msra.mxu0 %v2360
    %2597 = vmatprep.subr.mxu0 %v2369
    %2598 = vmatpush1.msra.mxu0 %v2368
    %2599 = vmatprep.subr.mxu0 %v2377
    %2600 = vmatpush1.msra.mxu0 %v2376
    %2601 = vmatprep.subr.mxu0 %v2385
    %2602 = vmatpush1.msra.mxu0 %v2384
    %2603 = vmatprep.subr.mxu0 %v2393
    %2604 = vmatpush1.msra.mxu0 %v2392
    %2605 = vmatprep.subr.mxu0 %v2401
    %2606 = vmatpush1.msra.mxu0 %v2400
    %2607 = vmatprep.mubr.f32.mxu0 %v2467
    %2608 = vmatmul.mubr.f32.gmra.mrb[0].mxu0 %v2465
    %v2609 = vpop.f32.mrb[0].mxu0
    %v2610 = vadd.f32 %v2539, %v2609
    %v2611 = vpop.f32.mrb[0].mxu0
    %v2612 = vadd.f32 %v2541, %v2611
    %2613 = vdwg.mxu0
    %2614 = vmatprep.subr.mxu0 %v1899
    %2615 = vmatpush1.msra.mxu0 %v1898
    %2616 = vmatprep.subr.mxu0 %v1907
    %2617 = vmatpush1.msra.mxu0 %v1906
    %2618 = vmatprep.subr.mxu0 %v1915
    %2619 = vmatpush1.msra.mxu0 %v1914
    %2620 = vmatprep.subr.mxu0 %v1923
    %2621 = vmatpush1.msra.mxu0 %v1922
    %2622 = vmatprep.subr.mxu0 %v1931
    %2623 = vmatpush1.msra.mxu0 %v1930
    %2624 = vmatprep.subr.mxu0 %v1939
    %2625 = vmatpush1.msra.mxu0 %v1938
    %2626 = vmatprep.subr.mxu0 %v1947
    %2627 = vmatpush1.msra.mxu0 %v1946
    %2628 = vmatprep.subr.mxu0 %v1955
    %2629 = vmatpush1.msra.mxu0 %v1954
    %2630 = vmatprep.subr.mxu0 %v1963
    %2631 = vmatpush1.msra.mxu0 %v1962
    %2632 = vmatprep.subr.mxu0 %v1971
    %2633 = vmatpush1.msra.mxu0 %v1970
    %2634 = vmatprep.subr.mxu0 %v1979
    %2635 = vmatpush1.msra.mxu0 %v1978
    %2636 = vmatprep.subr.mxu0 %v1987
    %2637 = vmatpush1.msra.mxu0 %v1986
    %2638 = vmatprep.subr.mxu0 %v1995
    %2639 = vmatpush1.msra.mxu0 %v1994
    %2640 = vmatprep.subr.mxu0 %v2003
    %2641 = vmatpush1.msra.mxu0 %v2002
    %2642 = vmatprep.subr.mxu0 %v2011
    %2643 = vmatpush1.msra.mxu0 %v2010
    %2644 = vmatprep.subr.mxu0 %v2019
    %2645 = vmatpush1.msra.mxu0 %v2018
    %2646 = vmatprep.subr.mxu0 %v2027
    %2647 = vmatpush1.msra.mxu0 %v2026
    %2648 = vmatprep.subr.mxu0 %v2035
    %2649 = vmatpush1.msra.mxu0 %v2034
    %2650 = vmatprep.subr.mxu0 %v2043
    %2651 = vmatpush1.msra.mxu0 %v2042
    %2652 = vmatprep.subr.mxu0 %v2051
    %2653 = vmatpush1.msra.mxu0 %v2050
    %2654 = vmatprep.subr.mxu0 %v2059
    %2655 = vmatpush1.msra.mxu0 %v2058
    %2656 = vmatprep.subr.mxu0 %v2067
    %2657 = vmatpush1.msra.mxu0 %v2066
    %2658 = vmatprep.subr.mxu0 %v2075
    %2659 = vmatpush1.msra.mxu0 %v2074
    %2660 = vmatprep.subr.mxu0 %v2083
    %2661 = vmatpush1.msra.mxu0 %v2082
    %2662 = vmatprep.subr.mxu0 %v2091
    %2663 = vmatpush1.msra.mxu0 %v2090
    %2664 = vmatprep.subr.mxu0 %v2099
    %2665 = vmatpush1.msra.mxu0 %v2098
    %2666 = vmatprep.subr.mxu0 %v2107
    %2667 = vmatpush1.msra.mxu0 %v2106
    %2668 = vmatprep.subr.mxu0 %v2115
    %2669 = vmatpush1.msra.mxu0 %v2114
    %2670 = vmatprep.subr.mxu0 %v2123
    %2671 = vmatpush1.msra.mxu0 %v2122
    %2672 = vmatprep.subr.mxu0 %v2131
    %2673 = vmatpush1.msra.mxu0 %v2130
    %2674 = vmatprep.subr.mxu0 %v2139
    %2675 = vmatpush1.msra.mxu0 %v2138
    %2676 = vmatprep.subr.mxu0 %v2147
    %2677 = vmatpush1.msra.mxu0 %v2146
    %2678 = vmatprep.mubr.f32.mxu0 %v2466
    %2679 = vmatmul.mubr.f32.gmra.mrb[0].mxu0 %v2458
    %v2680 = vpop.f32.mrb[0].mxu0
    %v2681 = vadd.f32 %v2421, %v2680
    %v2682 = vpop.f32.mrb[0].mxu0
    %v2683 = vadd.f32 %v2425, %v2682
    %2684 = vdwg.mxu0
    %2685 = vmatprep.subr.mxu0 %v2155
    %2686 = vmatpush1.msra.mxu0 %v2154
    %2687 = vmatprep.subr.mxu0 %v2163
    %2688 = vmatpush1.msra.mxu0 %v2162
    %2689 = vmatprep.subr.mxu0 %v2171
    %2690 = vmatpush1.msra.mxu0 %v2170
    %2691 = vmatprep.subr.mxu0 %v2179
    %2692 = vmatpush1.msra.mxu0 %v2178
    %2693 = vmatprep.subr.mxu0 %v2187
    %2694 = vmatpush1.msra.mxu0 %v2186
    %2695 = vmatprep.subr.mxu0 %v2195
    %2696 = vmatpush1.msra.mxu0 %v2194
    %2697 = vmatprep.subr.mxu0 %v2203
    %2698 = vmatpush1.msra.mxu0 %v2202
    %2699 = vmatprep.subr.mxu0 %v2211
    %2700 = vmatpush1.msra.mxu0 %v2210
    %2701 = vmatprep.subr.mxu0 %v2219
    %2702 = vmatpush1.msra.mxu0 %v2218
    %2703 = vmatprep.subr.mxu0 %v2227
    %2704 = vmatpush1.msra.mxu0 %v2226
    %2705 = vmatprep.subr.mxu0 %v2235
    %2706 = vmatpush1.msra.mxu0 %v2234
    %2707 = vmatprep.subr.mxu0 %v2243
    %2708 = vmatpush1.msra.mxu0 %v2242
    %2709 = vmatprep.subr.mxu0 %v2251
    %2710 = vmatpush1.msra.mxu0 %v2250
    %2711 = vmatprep.subr.mxu0 %v2259
    %2712 = vmatpush1.msra.mxu0 %v2258
    %2713 = vmatprep.subr.mxu0 %v2267
    %2714 = vmatpush1.msra.mxu0 %v2266
    %2715 = vmatprep.subr.mxu0 %v2275
    %2716 = vmatpush1.msra.mxu0 %v2274
    %2717 = vmatprep.subr.mxu0 %v2283
    %2718 = vmatpush1.msra.mxu0 %v2282
    %2719 = vmatprep.subr.mxu0 %v2291
    %2720 = vmatpush1.msra.mxu0 %v2290
    %2721 = vmatprep.subr.mxu0 %v2299
    %2722 = vmatpush1.msra.mxu0 %v2298
    %2723 = vmatprep.subr.mxu0 %v2307
    %2724 = vmatpush1.msra.mxu0 %v2306
    %2725 = vmatprep.subr.mxu0 %v2315
    %2726 = vmatpush1.msra.mxu0 %v2314
    %2727 = vmatprep.subr.mxu0 %v2323
    %2728 = vmatpush1.msra.mxu0 %v2322
    %2729 = vmatprep.subr.mxu0 %v2331
    %2730 = vmatpush1.msra.mxu0 %v2330
    %2731 = vmatprep.subr.mxu0 %v2339
    %2732 = vmatpush1.msra.mxu0 %v2338
    %2733 = vmatprep.subr.mxu0 %v2347
    %2734 = vmatpush1.msra.mxu0 %v2346
    %2735 = vmatprep.subr.mxu0 %v2355
    %2736 = vmatpush1.msra.mxu0 %v2354
    %2737 = vmatprep.subr.mxu0 %v2363
    %2738 = vmatpush1.msra.mxu0 %v2362
    %2739 = vmatprep.subr.mxu0 %v2371
    %2740 = vmatpush1.msra.mxu0 %v2370
    %2741 = vmatprep.subr.mxu0 %v2379
    %2742 = vmatpush1.msra.mxu0 %v2378
    %2743 = vmatprep.subr.mxu0 %v2387
    %2744 = vmatpush1.msra.mxu0 %v2386
    %2745 = vmatprep.subr.mxu0 %v2395
    %2746 = vmatpush1.msra.mxu0 %v2394
    %2747 = vmatprep.subr.mxu0 %v2403
    %2748 = vmatpush1.msra.mxu0 %v2402
    %2749 = vmatprep.mubr.f32.mxu0 %v2467
    %2750 = vmatmul.mubr.f32.gmra.mrb[0].mxu0 %v2465
    %v2751 = vpop.f32.mrb[0].mxu0
    %v2752 = vadd.f32 %v2681, %v2751
    %v2753 = vpop.f32.mrb[0].mxu0
    %v2754 = vadd.f32 %v2683, %v2753
    %2755 = vdwg.mxu0
    %2756 = vmatprep.subr.mxu0 %v1901
    %2757 = vmatpush1.msra.mxu0 %v1900
    %2758 = vmatprep.subr.mxu0 %v1909
    %2759 = vmatpush1.msra.mxu0 %v1908
    %2760 = vmatprep.subr.mxu0 %v1917
    %2761 = vmatpush1.msra.mxu0 %v1916
    %2762 = vmatprep.subr.mxu0 %v1925
    %2763 = vmatpush1.msra.mxu0 %v1924
    %2764 = vmatprep.subr.mxu0 %v1933
    %2765 = vmatpush1.msra.mxu0 %v1932
    %2766 = vmatprep.subr.mxu0 %v1941
    %2767 = vmatpush1.msra.mxu0 %v1940
    %2768 = vmatprep.subr.mxu0 %v1949
    %2769 = vmatpush1.msra.mxu0 %v1948
    %2770 = vmatprep.subr.mxu0 %v1957
    %2771 = vmatpush1.msra.mxu0 %v1956
    %2772 = vmatprep.subr.mxu0 %v1965
    %2773 = vmatpush1.msra.mxu0 %v1964
    %2774 = vmatprep.subr.mxu0 %v1973
    %2775 = vmatpush1.msra.mxu0 %v1972
    %2776 = vmatprep.subr.mxu0 %v1981
    %2777 = vmatpush1.msra.mxu0 %v1980
    %2778 = vmatprep.subr.mxu0 %v1989
    %2779 = vmatpush1.msra.mxu0 %v1988
    %2780 = vmatprep.subr.mxu0 %v1997
    %2781 = vmatpush1.msra.mxu0 %v1996
    %2782 = vmatprep.subr.mxu0 %v2005
    %2783 = vmatpush1.msra.mxu0 %v2004
    %2784 = vmatprep.subr.mxu0 %v2013
    %2785 = vmatpush1.msra.mxu0 %v2012
    %2786 = vmatprep.subr.mxu0 %v2021
    %2787 = vmatpush1.msra.mxu0 %v2020
    %2788 = vmatprep.subr.mxu0 %v2029
    %2789 = vmatpush1.msra.mxu0 %v2028
    %2790 = vmatprep.subr.mxu0 %v2037
    %2791 = vmatpush1.msra.mxu0 %v2036
    %2792 = vmatprep.subr.mxu0 %v2045
    %2793 = vmatpush1.msra.mxu0 %v2044
    %2794 = vmatprep.subr.mxu0 %v2053
    %2795 = vmatpush1.msra.mxu0 %v2052
    %2796 = vmatprep.subr.mxu0 %v2061
    %2797 = vmatpush1.msra.mxu0 %v2060
    %2798 = vmatprep.subr.mxu0 %v2069
    %2799 = vmatpush1.msra.mxu0 %v2068
    %2800 = vmatprep.subr.mxu0 %v2077
    %2801 = vmatpush1.msra.mxu0 %v2076
    %2802 = vmatprep.subr.mxu0 %v2085
    %2803 = vmatpush1.msra.mxu0 %v2084
    %2804 = vmatprep.subr.mxu0 %v2093
    %2805 = vmatpush1.msra.mxu0 %v2092
    %2806 = vmatprep.subr.mxu0 %v2101
    %2807 = vmatpush1.msra.mxu0 %v2100
    %2808 = vmatprep.subr.mxu0 %v2109
    %2809 = vmatpush1.msra.mxu0 %v2108
    %2810 = vmatprep.subr.mxu0 %v2117
    %2811 = vmatpush1.msra.mxu0 %v2116
    %2812 = vmatprep.subr.mxu0 %v2125
    %2813 = vmatpush1.msra.mxu0 %v2124
    %2814 = vmatprep.subr.mxu0 %v2133
    %2815 = vmatpush1.msra.mxu0 %v2132
    %2816 = vmatprep.subr.mxu0 %v2141
    %2817 = vmatpush1.msra.mxu0 %v2140
    %2818 = vmatprep.subr.mxu0 %v2149
    %2819 = vmatpush1.msra.mxu0 %v2148
    %2820 = vmatprep.mubr.f32.mxu0 %v2466
    %2821 = vmatmul.mubr.f32.gmra.mrb[0].mxu0 %v2458
    %v2822 = vpop.f32.mrb[0].mxu0
    %v2823 = vadd.f32 %v2429, %v2822
    %v2824 = vpop.f32.mrb[0].mxu0
    %v2825 = vadd.f32 %v2433, %v2824
    %2826 = vdwg.mxu0
    %2827 = vmatprep.subr.mxu0 %v2157
    %2828 = vmatpush1.msra.mxu0 %v2156
    %2829 = vmatprep.subr.mxu0 %v2165
    %2830 = vmatpush1.msra.mxu0 %v2164
    %2831 = vmatprep.subr.mxu0 %v2173
    %2832 = vmatpush1.msra.mxu0 %v2172
    %2833 = vmatprep.subr.mxu0 %v2181
    %2834 = vmatpush1.msra.mxu0 %v2180
    %2835 = vmatprep.subr.mxu0 %v2189
    %2836 = vmatpush1.msra.mxu0 %v2188
    %2837 = vmatprep.subr.mxu0 %v2197
    %2838 = vmatpush1.msra.mxu0 %v2196
    %2839 = vmatprep.subr.mxu0 %v2205
    %2840 = vmatpush1.msra.mxu0 %v2204
    %2841 = vmatprep.subr.mxu0 %v2213
    %2842 = vmatpush1.msra.mxu0 %v2212
    %2843 = vmatprep.subr.mxu0 %v2221
    %2844 = vmatpush1.msra.mxu0 %v2220
    %2845 = vmatprep.subr.mxu0 %v2229
    %2846 = vmatpush1.msra.mxu0 %v2228
    %2847 = vmatprep.subr.mxu0 %v2237
    %2848 = vmatpush1.msra.mxu0 %v2236
    %2849 = vmatprep.subr.mxu0 %v2245
    %2850 = vmatpush1.msra.mxu0 %v2244
    %2851 = vmatprep.subr.mxu0 %v2253
    %2852 = vmatpush1.msra.mxu0 %v2252
    %2853 = vmatprep.subr.mxu0 %v2261
    %2854 = vmatpush1.msra.mxu0 %v2260
    %2855 = vmatprep.subr.mxu0 %v2269
    %2856 = vmatpush1.msra.mxu0 %v2268
    %2857 = vmatprep.subr.mxu0 %v2277
    %2858 = vmatpush1.msra.mxu0 %v2276
    %2859 = vmatprep.subr.mxu0 %v2285
    %2860 = vmatpush1.msra.mxu0 %v2284
    %2861 = vmatprep.subr.mxu0 %v2293
    %2862 = vmatpush1.msra.mxu0 %v2292
    %2863 = vmatprep.subr.mxu0 %v2301
    %2864 = vmatpush1.msra.mxu0 %v2300
    %2865 = vmatprep.subr.mxu0 %v2309
    %2866 = vmatpush1.msra.mxu0 %v2308
    %2867 = vmatprep.subr.mxu0 %v2317
    %2868 = vmatpush1.msra.mxu0 %v2316
    %2869 = vmatprep.subr.mxu0 %v2325
    %2870 = vmatpush1.msra.mxu0 %v2324
    %2871 = vmatprep.subr.mxu0 %v2333
    %2872 = vmatpush1.msra.mxu0 %v2332
    %2873 = vmatprep.subr.mxu0 %v2341
    %2874 = vmatpush1.msra.mxu0 %v2340
    %2875 = vmatprep.subr.mxu0 %v2349
    %2876 = vmatpush1.msra.mxu0 %v2348
    %2877 = vmatprep.subr.mxu0 %v2357
    %2878 = vmatpush1.msra.mxu0 %v2356
    %2879 = vmatprep.subr.mxu0 %v2365
    %2880 = vmatpush1.msra.mxu0 %v2364
    %2881 = vmatprep.subr.mxu0 %v2373
    %2882 = vmatpush1.msra.mxu0 %v2372
    %2883 = vmatprep.subr.mxu0 %v2381
    %2884 = vmatpush1.msra.mxu0 %v2380
    %2885 = vmatprep.subr.mxu0 %v2389
    %2886 = vmatpush1.msra.mxu0 %v2388
    %2887 = vmatprep.subr.mxu0 %v2397
    %2888 = vmatpush1.msra.mxu0 %v2396
    %2889 = vmatprep.subr.mxu0 %v2405
    %2890 = vmatpush1.msra.mxu0 %v2404
    %2891 = vmatprep.mubr.f32.mxu0 %v2467
    %2892 = vmatmul.mubr.f32.gmra.mrb[0].mxu0 %v2465
    %v2893 = vpop.f32.mrb[0].mxu0
    %v2894 = vadd.f32 %v2823, %v2893
    %v2895 = vpop.f32.mrb[0].mxu0
    %v2896 = vadd.f32 %v2825, %v2895
    %2897 = vdwg.mxu0
    %2898 = vmatprep.subr.mxu0 %v1903
    %2899 = vmatpush1.msra.mxu0 %v1902
    %2900 = vmatprep.subr.mxu0 %v1911
    %2901 = vmatpush1.msra.mxu0 %v1910
    %2902 = vmatprep.subr.mxu0 %v1919
    %2903 = vmatpush1.msra.mxu0 %v1918
    %2904 = vmatprep.subr.mxu0 %v1927
    %2905 = vmatpush1.msra.mxu0 %v1926
    %2906 = vmatprep.subr.mxu0 %v1935
    %2907 = vmatpush1.msra.mxu0 %v1934
    %2908 = vmatprep.subr.mxu0 %v1943
    %2909 = vmatpush1.msra.mxu0 %v1942
    %2910 = vmatprep.subr.mxu0 %v1951
    %2911 = vmatpush1.msra.mxu0 %v1950
    %2912 = vmatprep.subr.mxu0 %v1959
    %2913 = vmatpush1.msra.mxu0 %v1958
    %2914 = vmatprep.subr.mxu0 %v1967
    %2915 = vmatpush1.msra.mxu0 %v1966
    %2916 = vmatprep.subr.mxu0 %v1975
    %2917 = vmatpush1.msra.mxu0 %v1974
    %2918 = vmatprep.subr.mxu0 %v1983
    %2919 = vmatpush1.msra.mxu0 %v1982
    %2920 = vmatprep.subr.mxu0 %v1991
    %2921 = vmatpush1.msra.mxu0 %v1990
    %2922 = vmatprep.subr.mxu0 %v1999
    %2923 = vmatpush1.msra.mxu0 %v1998
    %2924 = vmatprep.subr.mxu0 %v2007
    %2925 = vmatpush1.msra.mxu0 %v2006
    %2926 = vmatprep.subr.mxu0 %v2015
    %2927 = vmatpush1.msra.mxu0 %v2014
    %2928 = vmatprep.subr.mxu0 %v2023
    %2929 = vmatpush1.msra.mxu0 %v2022
    %2930 = vmatprep.subr.mxu0 %v2031
    %2931 = vmatpush1.msra.mxu0 %v2030
    %2932 = vmatprep.subr.mxu0 %v2039
    %2933 = vmatpush1.msra.mxu0 %v2038
    %2934 = vmatprep.subr.mxu0 %v2047
    %2935 = vmatpush1.msra.mxu0 %v2046
    %2936 = vmatprep.subr.mxu0 %v2055
    %2937 = vmatpush1.msra.mxu0 %v2054
    %2938 = vmatprep.subr.mxu0 %v2063
    %2939 = vmatpush1.msra.mxu0 %v2062
    %2940 = vmatprep.subr.mxu0 %v2071
    %2941 = vmatpush1.msra.mxu0 %v2070
    %2942 = vmatprep.subr.mxu0 %v2079
    %2943 = vmatpush1.msra.mxu0 %v2078
    %2944 = vmatprep.subr.mxu0 %v2087
    %2945 = vmatpush1.msra.mxu0 %v2086
    %2946 = vmatprep.subr.mxu0 %v2095
    %2947 = vmatpush1.msra.mxu0 %v2094
    %2948 = vmatprep.subr.mxu0 %v2103
    %2949 = vmatpush1.msra.mxu0 %v2102
    %2950 = vmatprep.subr.mxu0 %v2111
    %2951 = vmatpush1.msra.mxu0 %v2110
    %2952 = vmatprep.subr.mxu0 %v2119
    %2953 = vmatpush1.msra.mxu0 %v2118
    %2954 = vmatprep.subr.mxu0 %v2127
    %2955 = vmatpush1.msra.mxu0 %v2126
    %2956 = vmatprep.subr.mxu0 %v2135
    %2957 = vmatpush1.msra.mxu0 %v2134
    %2958 = vmatprep.subr.mxu0 %v2143
    %2959 = vmatpush1.msra.mxu0 %v2142
    %2960 = vmatprep.subr.mxu0 %v2151
    %2961 = vmatpush1.msra.mxu0 %v2150
    %2962 = vmatprep.mubr.f32.mxu0 %v2466
    %2963 = vmatmul.mubr.f32.gmra.mrb[0].mxu0 %v2458
    %v2964 = vpop.f32.mrb[0].mxu0
    %v2965 = vadd.f32 %v2437, %v2964
    %v2966 = vpop.f32.mrb[0].mxu0
    %v2967 = vadd.f32 %v2441, %v2966
    %2968 = vdwg.mxu0
    %2969 = vmatprep.subr.mxu0 %v2159
    %2970 = vmatpush1.msra.mxu0 %v2158
    %2971 = vmatprep.subr.mxu0 %v2167
    %2972 = vmatpush1.msra.mxu0 %v2166
    %2973 = vmatprep.subr.mxu0 %v2175
    %2974 = vmatpush1.msra.mxu0 %v2174
    %2975 = vmatprep.subr.mxu0 %v2183
    %2976 = vmatpush1.msra.mxu0 %v2182
    %2977 = vmatprep.subr.mxu0 %v2191
    %2978 = vmatpush1.msra.mxu0 %v2190
    %2979 = vmatprep.subr.mxu0 %v2199
    %2980 = vmatpush1.msra.mxu0 %v2198
    %2981 = vmatprep.subr.mxu0 %v2207
    %2982 = vmatpush1.msra.mxu0 %v2206
    %2983 = vmatprep.subr.mxu0 %v2215
    %2984 = vmatpush1.msra.mxu0 %v2214
    %2985 = vmatprep.subr.mxu0 %v2223
    %2986 = vmatpush1.msra.mxu0 %v2222
    %2987 = vmatprep.subr.mxu0 %v2231
    %2988 = vmatpush1.msra.mxu0 %v2230
    %2989 = vmatprep.subr.mxu0 %v2239
    %2990 = vmatpush1.msra.mxu0 %v2238
    %2991 = vmatprep.subr.mxu0 %v2247
    %2992 = vmatpush1.msra.mxu0 %v2246
    %2993 = vmatprep.subr.mxu0 %v2255
    %2994 = vmatpush1.msra.mxu0 %v2254
    %2995 = vmatprep.subr.mxu0 %v2263
    %2996 = vmatpush1.msra.mxu0 %v2262
    %2997 = vmatprep.subr.mxu0 %v2271
    %2998 = vmatpush1.msra.mxu0 %v2270
    %2999 = vmatprep.subr.mxu0 %v2279
    %3000 = vmatpush1.msra.mxu0 %v2278
    %3001 = vmatprep.subr.mxu0 %v2287
    %3002 = vmatpush1.msra.mxu0 %v2286
    %3003 = vmatprep.subr.mxu0 %v2295
    %3004 = vmatpush1.msra.mxu0 %v2294
    %3005 = vmatprep.subr.mxu0 %v2303
    %3006 = vmatpush1.msra.mxu0 %v2302
    %3007 = vmatprep.subr.mxu0 %v2311
    %3008 = vmatpush1.msra.mxu0 %v2310
    %3009 = vmatprep.subr.mxu0 %v2319
    %3010 = vmatpush1.msra.mxu0 %v2318
    %3011 = vmatprep.subr.mxu0 %v2327
    %3012 = vmatpush1.msra.mxu0 %v2326
    %3013 = vmatprep.subr.mxu0 %v2335
    %3014 = vmatpush1.msra.mxu0 %v2334
    %3015 = vmatprep.subr.mxu0 %v2343
    %3016 = vmatpush1.msra.mxu0 %v2342
    %3017 = vmatprep.subr.mxu0 %v2351
    %3018 = vmatpush1.msra.mxu0 %v2350
    %3019 = vmatprep.subr.mxu0 %v2359
    %3020 = vmatpush1.msra.mxu0 %v2358
    %3021 = vmatprep.subr.mxu0 %v2367
    %3022 = vmatpush1.msra.mxu0 %v2366
    %3023 = vmatprep.subr.mxu0 %v2375
    %3024 = vmatpush1.msra.mxu0 %v2374
    %3025 = vmatprep.subr.mxu0 %v2383
    %3026 = vmatpush1.msra.mxu0 %v2382
    %3027 = vmatprep.subr.mxu0 %v2391
    %3028 = vmatpush1.msra.mxu0 %v2390
    %3029 = vmatprep.subr.mxu0 %v2399
    %3030 = vmatpush1.msra.mxu0 %v2398
    %3031 = vmatprep.subr.mxu0 %v2407
    %3032 = vmatpush1.msra.mxu0 %v2406
    %3033 = vmatprep.mubr.f32.mxu0 %v2467
    %3034 = vmatmul.mubr.f32.gmra.mrb[0].mxu0 %v2465
    %v3035 = vpop.f32.mrb[0].mxu0
    %v3036 = vadd.f32 %v2965, %v3035
    %v3037 = vpop.f32.mrb[0].mxu0
    %v3038 = vadd.f32 %v2967, %v3037
    %3039 = vdwg.mxu0
    %v3040 = vmax.f32 %v2610, 0.0
    %v3041 = vmax.f32 %v2612, 0.0
    %v3042 = vmax.f32 %v2752, 0.0
    %v3043 = vmax.f32 %v2754, 0.0
    %v3044 = vmax.f32 %v2894, 0.0
    %v3045 = vmax.f32 %v2896, 0.0
    %v3046 = vmax.f32 %v3036, 0.0
    %v3047 = vmax.f32 %v3038, 0.0
    %v3048 = vld [vmem:[#allocation24] sm:$0xff]
    %v3049 = vld [vmem:[#allocation24 + $0x8] sm:$0xff]
    %v3050 = vld [vmem:[#allocation24 + $0x10] sm:$0xff]
    %v3051 = vld [vmem:[#allocation24 + $0x18] sm:$0xff]
    %v3052 = vld [vmem:[#allocation24 + $0x20] sm:$0xff]
    %v3053 = vld [vmem:[#allocation24 + $0x28] sm:$0xff]
    %v3054 = vld [vmem:[#allocation24 + $0x30] sm:$0xff]
    %v3055 = vld [vmem:[#allocation24 + $0x38] sm:$0xff]
    %v3056 = vld [vmem:[#allocation24 + $0x40] sm:$0xff]
    %v3057 = vld [vmem:[#allocation24 + $0x48] sm:$0xff]
    %v3058 = vld [vmem:[#allocation24 + $0x50] sm:$0xff]
    %v3059 = vld [vmem:[#allocation24 + $0x58] sm:$0xff]
    %v3060 = vld [vmem:[#allocation24 + $0x60] sm:$0xff]
    %v3061 = vld [vmem:[#allocation24 + $0x68] sm:$0xff]
    %v3062 = vld [vmem:[#allocation24 + $0x70] sm:$0xff]
    %v3063 = vld [vmem:[#allocation24 + $0x78] sm:$0xff]
    %v3064 = vld [vmem:[#allocation24 + $0x80] sm:$0xff]
    %v3065 = vld [vmem:[#allocation24 + $0x88] sm:$0xff]
    %v3066 = vld [vmem:[#allocation24 + $0x90] sm:$0xff]
    %v3067 = vld [vmem:[#allocation24 + $0x98] sm:$0xff]
    %v3068 = vld [vmem:[#allocation24 + $0xa0] sm:$0xff]
    %v3069 = vld [vmem:[#allocation24 + $0xa8] sm:$0xff]
    %v3070 = vld [vmem:[#allocation24 + $0xb0] sm:$0xff]
    %v3071 = vld [vmem:[#allocation24 + $0xb8] sm:$0xff]
    %v3072 = vld [vmem:[#allocation24 + $0xc0] sm:$0xff]
    %v3073 = vld [vmem:[#allocation24 + $0xc8] sm:$0xff]
    %v3074 = vld [vmem:[#allocation24 + $0xd0] sm:$0xff]
    %v3075 = vld [vmem:[#allocation24 + $0xd8] sm:$0xff]
    %v3076 = vld [vmem:[#allocation24 + $0xe0] sm:$0xff]
    %v3077 = vld [vmem:[#allocation24 + $0xe8] sm:$0xff]
    %v3078 = vld [vmem:[#allocation24 + $0xf0] sm:$0xff]
    %v3079 = vld [vmem:[#allocation24 + $0xf8] sm:$0xff]
    %v3080 = vld [vmem:[#allocation24 + $0x100] sm:$0xff]
    %v3081 = vld [vmem:[#allocation24 + $0x108] sm:$0xff]
    %v3082 = vld [vmem:[#allocation24 + $0x110] sm:$0xff]
    %v3083 = vld [vmem:[#allocation24 + $0x118] sm:$0xff]
    %v3084 = vld [vmem:[#allocation24 + $0x120] sm:$0xff]
    %v3085 = vld [vmem:[#allocation24 + $0x128] sm:$0xff]
    %v3086 = vld [vmem:[#allocation24 + $0x130] sm:$0xff]
    %v3087 = vld [vmem:[#allocation24 + $0x138] sm:$0xff]
    %v3088 = vld [vmem:[#allocation24 + $0x140] sm:$0xff]
    %v3089 = vld [vmem:[#allocation24 + $0x148] sm:$0xff]
    %v3090 = vld [vmem:[#allocation24 + $0x150] sm:$0xff]
    %v3091 = vld [vmem:[#allocation24 + $0x158] sm:$0xff]
    %v3092 = vld [vmem:[#allocation24 + $0x160] sm:$0xff]
    %v3093 = vld [vmem:[#allocation24 + $0x168] sm:$0xff]
    %v3094 = vld [vmem:[#allocation24 + $0x170] sm:$0xff]
    %v3095 = vld [vmem:[#allocation24 + $0x178] sm:$0xff]
    %v3096 = vld [vmem:[#allocation24 + $0x180] sm:$0xff]
    %v3097 = vld [vmem:[#allocation24 + $0x188] sm:$0xff]
    %v3098 = vld [vmem:[#allocation24 + $0x190] sm:$0xff]
    %v3099 = vld [vmem:[#allocation24 + $0x198] sm:$0xff]
    %v3100 = vld [vmem:[#allocation24 + $0x1a0] sm:$0xff]
    %v3101 = vld [vmem:[#allocation24 + $0x1a8] sm:$0xff]
    %v3102 = vld [vmem:[#allocation24 + $0x1b0] sm:$0xff]
    %v3103 = vld [vmem:[#allocation24 + $0x1b8] sm:$0xff]
    %v3104 = vld [vmem:[#allocation24 + $0x1c0] sm:$0xff]
    %v3105 = vld [vmem:[#allocation24 + $0x1c8] sm:$0xff]
    %v3106 = vld [vmem:[#allocation24 + $0x1d0] sm:$0xff]
    %v3107 = vld [vmem:[#allocation24 + $0x1d8] sm:$0xff]
    %v3108 = vld [vmem:[#allocation24 + $0x1e0] sm:$0xff]
    %v3109 = vld [vmem:[#allocation24 + $0x1e8] sm:$0xff]
    %v3110 = vld [vmem:[#allocation24 + $0x1f0] sm:$0xff]
    %v3111 = vld [vmem:[#allocation24 + $0x1f8] sm:$0xff]
    %v3112 = vld [vmem:[#allocation24 + $0x200] sm:$0xff]
    %v3113 = vld [vmem:[#allocation24 + $0x208] sm:$0xff]
    %v3114 = vld [vmem:[#allocation24 + $0x210] sm:$0xff]
    %v3115 = vld [vmem:[#allocation24 + $0x218] sm:$0xff]
    %v3116 = vld [vmem:[#allocation24 + $0x220] sm:$0xff]
    %v3117 = vld [vmem:[#allocation24 + $0x228] sm:$0xff]
    %v3118 = vld [vmem:[#allocation24 + $0x230] sm:$0xff]
    %v3119 = vld [vmem:[#allocation24 + $0x238] sm:$0xff]
    %v3120 = vld [vmem:[#allocation24 + $0x240] sm:$0xff]
    %v3121 = vld [vmem:[#allocation24 + $0x248] sm:$0xff]
    %v3122 = vld [vmem:[#allocation24 + $0x250] sm:$0xff]
    %v3123 = vld [vmem:[#allocation24 + $0x258] sm:$0xff]
    %v3124 = vld [vmem:[#allocation24 + $0x260] sm:$0xff]
    %v3125 = vld [vmem:[#allocation24 + $0x268] sm:$0xff]
    %v3126 = vld [vmem:[#allocation24 + $0x270] sm:$0xff]
    %v3127 = vld [vmem:[#allocation24 + $0x278] sm:$0xff]
    %v3128 = vld [vmem:[#allocation24 + $0x280] sm:$0xff]
    %v3129 = vld [vmem:[#allocation24 + $0x288] sm:$0xff]
    %v3130 = vld [vmem:[#allocation24 + $0x290] sm:$0xff]
    %v3131 = vld [vmem:[#allocation24 + $0x298] sm:$0xff]
    %v3132 = vld [vmem:[#allocation24 + $0x2a0] sm:$0xff]
    %v3133 = vld [vmem:[#allocation24 + $0x2a8] sm:$0xff]
    %v3134 = vld [vmem:[#allocation24 + $0x2b0] sm:$0xff]
    %v3135 = vld [vmem:[#allocation24 + $0x2b8] sm:$0xff]
    %v3136 = vld [vmem:[#allocation24 + $0x2c0] sm:$0xff]
    %v3137 = vld [vmem:[#allocation24 + $0x2c8] sm:$0xff]
    %v3138 = vld [vmem:[#allocation24 + $0x2d0] sm:$0xff]
    %v3139 = vld [vmem:[#allocation24 + $0x2d8] sm:$0xff]
    %v3140 = vld [vmem:[#allocation24 + $0x2e0] sm:$0xff]
    %v3141 = vld [vmem:[#allocation24 + $0x2e8] sm:$0xff]
    %v3142 = vld [vmem:[#allocation24 + $0x2f0] sm:$0xff]
    %v3143 = vld [vmem:[#allocation24 + $0x2f8] sm:$0xff]
    %v3144 = vld [vmem:[#allocation24 + $0x300] sm:$0xff]
    %v3145 = vld [vmem:[#allocation24 + $0x308] sm:$0xff]
    %v3146 = vld [vmem:[#allocation24 + $0x310] sm:$0xff]
    %v3147 = vld [vmem:[#allocation24 + $0x318] sm:$0xff]
    %v3148 = vld [vmem:[#allocation24 + $0x320] sm:$0xff]
    %v3149 = vld [vmem:[#allocation24 + $0x328] sm:$0xff]
    %v3150 = vld [vmem:[#allocation24 + $0x330] sm:$0xff]
    %v3151 = vld [vmem:[#allocation24 + $0x338] sm:$0xff]
    %v3152 = vld [vmem:[#allocation24 + $0x340] sm:$0xff]
    %v3153 = vld [vmem:[#allocation24 + $0x348] sm:$0xff]
    %v3154 = vld [vmem:[#allocation24 + $0x350] sm:$0xff]
    %v3155 = vld [vmem:[#allocation24 + $0x358] sm:$0xff]
    %v3156 = vld [vmem:[#allocation24 + $0x360] sm:$0xff]
    %v3157 = vld [vmem:[#allocation24 + $0x368] sm:$0xff]
    %v3158 = vld [vmem:[#allocation24 + $0x370] sm:$0xff]
    %v3159 = vld [vmem:[#allocation24 + $0x378] sm:$0xff]
    %v3160 = vld [vmem:[#allocation24 + $0x380] sm:$0xff]
    %v3161 = vld [vmem:[#allocation24 + $0x388] sm:$0xff]
    %v3162 = vld [vmem:[#allocation24 + $0x390] sm:$0xff]
    %v3163 = vld [vmem:[#allocation24 + $0x398] sm:$0xff]
    %v3164 = vld [vmem:[#allocation24 + $0x3a0] sm:$0xff]
    %v3165 = vld [vmem:[#allocation24 + $0x3a8] sm:$0xff]
    %v3166 = vld [vmem:[#allocation24 + $0x3b0] sm:$0xff]
    %v3167 = vld [vmem:[#allocation24 + $0x3b8] sm:$0xff]
    %v3168 = vld [vmem:[#allocation24 + $0x3c0] sm:$0xff]
    %v3169 = vld [vmem:[#allocation24 + $0x3c8] sm:$0xff]
    %v3170 = vld [vmem:[#allocation24 + $0x3d0] sm:$0xff]
    %v3171 = vld [vmem:[#allocation24 + $0x3d8] sm:$0xff]
    %v3172 = vld [vmem:[#allocation24 + $0x3e0] sm:$0xff]
    %v3173 = vld [vmem:[#allocation24 + $0x3e8] sm:$0xff]
    %v3174 = vld [vmem:[#allocation24 + $0x3f0] sm:$0xff]
    %v3175 = vld [vmem:[#allocation24 + $0x3f8] sm:$0xff]
    %v3176 = vld [vmem:[#allocation24 + $0x400] sm:$0xff]
    %v3177 = vld [vmem:[#allocation24 + $0x408] sm:$0xff]
    %v3178 = vld [vmem:[#allocation24 + $0x410] sm:$0xff]
    %v3179 = vld [vmem:[#allocation24 + $0x418] sm:$0xff]
    %v3180 = vld [vmem:[#allocation24 + $0x420] sm:$0xff]
    %v3181 = vld [vmem:[#allocation24 + $0x428] sm:$0xff]
    %v3182 = vld [vmem:[#allocation24 + $0x430] sm:$0xff]
    %v3183 = vld [vmem:[#allocation24 + $0x438] sm:$0xff]
    %v3184 = vld [vmem:[#allocation24 + $0x440] sm:$0xff]
    %v3185 = vld [vmem:[#allocation24 + $0x448] sm:$0xff]
    %v3186 = vld [vmem:[#allocation24 + $0x450] sm:$0xff]
    %v3187 = vld [vmem:[#allocation24 + $0x458] sm:$0xff]
    %v3188 = vld [vmem:[#allocation24 + $0x460] sm:$0xff]
    %v3189 = vld [vmem:[#allocation24 + $0x468] sm:$0xff]
    %v3190 = vld [vmem:[#allocation24 + $0x470] sm:$0xff]
    %v3191 = vld [vmem:[#allocation24 + $0x478] sm:$0xff]
    %v3192 = vld [vmem:[#allocation24 + $0x480] sm:$0xff]
    %v3193 = vld [vmem:[#allocation24 + $0x488] sm:$0xff]
    %v3194 = vld [vmem:[#allocation24 + $0x490] sm:$0xff]
    %v3195 = vld [vmem:[#allocation24 + $0x498] sm:$0xff]
    %v3196 = vld [vmem:[#allocation24 + $0x4a0] sm:$0xff]
    %v3197 = vld [vmem:[#allocation24 + $0x4a8] sm:$0xff]
    %v3198 = vld [vmem:[#allocation24 + $0x4b0] sm:$0xff]
    %v3199 = vld [vmem:[#allocation24 + $0x4b8] sm:$0xff]
    %v3200 = vld [vmem:[#allocation24 + $0x4c0] sm:$0xff]
    %v3201 = vld [vmem:[#allocation24 + $0x4c8] sm:$0xff]
    %v3202 = vld [vmem:[#allocation24 + $0x4d0] sm:$0xff]
    %v3203 = vld [vmem:[#allocation24 + $0x4d8] sm:$0xff]
    %v3204 = vld [vmem:[#allocation24 + $0x4e0] sm:$0xff]
    %v3205 = vld [vmem:[#allocation24 + $0x4e8] sm:$0xff]
    %v3206 = vld [vmem:[#allocation24 + $0x4f0] sm:$0xff]
    %v3207 = vld [vmem:[#allocation24 + $0x4f8] sm:$0xff]
    %v3208 = vld [vmem:[#allocation24 + $0x500] sm:$0xff]
    %v3209 = vld [vmem:[#allocation24 + $0x508] sm:$0xff]
    %v3210 = vld [vmem:[#allocation24 + $0x510] sm:$0xff]
    %v3211 = vld [vmem:[#allocation24 + $0x518] sm:$0xff]
    %v3212 = vld [vmem:[#allocation24 + $0x520] sm:$0xff]
    %v3213 = vld [vmem:[#allocation24 + $0x528] sm:$0xff]
    %v3214 = vld [vmem:[#allocation24 + $0x530] sm:$0xff]
    %v3215 = vld [vmem:[#allocation24 + $0x538] sm:$0xff]
    %v3216 = vld [vmem:[#allocation24 + $0x540] sm:$0xff]
    %v3217 = vld [vmem:[#allocation24 + $0x548] sm:$0xff]
    %v3218 = vld [vmem:[#allocation24 + $0x550] sm:$0xff]
    %v3219 = vld [vmem:[#allocation24 + $0x558] sm:$0xff]
    %v3220 = vld [vmem:[#allocation24 + $0x560] sm:$0xff]
    %v3221 = vld [vmem:[#allocation24 + $0x568] sm:$0xff]
    %v3222 = vld [vmem:[#allocation24 + $0x570] sm:$0xff]
    %v3223 = vld [vmem:[#allocation24 + $0x578] sm:$0xff]
    %v3224 = vld [vmem:[#allocation24 + $0x580] sm:$0xff]
    %v3225 = vld [vmem:[#allocation24 + $0x588] sm:$0xff]
    %v3226 = vld [vmem:[#allocation24 + $0x590] sm:$0xff]
    %v3227 = vld [vmem:[#allocation24 + $0x598] sm:$0xff]
    %v3228 = vld [vmem:[#allocation24 + $0x5a0] sm:$0xff]
    %v3229 = vld [vmem:[#allocation24 + $0x5a8] sm:$0xff]
    %v3230 = vld [vmem:[#allocation24 + $0x5b0] sm:$0xff]
    %v3231 = vld [vmem:[#allocation24 + $0x5b8] sm:$0xff]
    %v3232 = vld [vmem:[#allocation24 + $0x5c0] sm:$0xff]
    %v3233 = vld [vmem:[#allocation24 + $0x5c8] sm:$0xff]
    %v3234 = vld [vmem:[#allocation24 + $0x5d0] sm:$0xff]
    %v3235 = vld [vmem:[#allocation24 + $0x5d8] sm:$0xff]
    %v3236 = vld [vmem:[#allocation24 + $0x5e0] sm:$0xff]
    %v3237 = vld [vmem:[#allocation24 + $0x5e8] sm:$0xff]
    %v3238 = vld [vmem:[#allocation24 + $0x5f0] sm:$0xff]
    %v3239 = vld [vmem:[#allocation24 + $0x5f8] sm:$0xff]
    %v3240 = vld [vmem:[#allocation24 + $0x600] sm:$0xff]
    %v3241 = vld [vmem:[#allocation24 + $0x608] sm:$0xff]
    %v3242 = vld [vmem:[#allocation24 + $0x610] sm:$0xff]
    %v3243 = vld [vmem:[#allocation24 + $0x618] sm:$0xff]
    %v3244 = vld [vmem:[#allocation24 + $0x620] sm:$0xff]
    %v3245 = vld [vmem:[#allocation24 + $0x628] sm:$0xff]
    %v3246 = vld [vmem:[#allocation24 + $0x630] sm:$0xff]
    %v3247 = vld [vmem:[#allocation24 + $0x638] sm:$0xff]
    %v3248 = vld [vmem:[#allocation24 + $0x640] sm:$0xff]
    %v3249 = vld [vmem:[#allocation24 + $0x648] sm:$0xff]
    %v3250 = vld [vmem:[#allocation24 + $0x650] sm:$0xff]
    %v3251 = vld [vmem:[#allocation24 + $0x658] sm:$0xff]
    %v3252 = vld [vmem:[#allocation24 + $0x660] sm:$0xff]
    %v3253 = vld [vmem:[#allocation24 + $0x668] sm:$0xff]
    %v3254 = vld [vmem:[#allocation24 + $0x670] sm:$0xff]
    %v3255 = vld [vmem:[#allocation24 + $0x678] sm:$0xff]
    %v3256 = vld [vmem:[#allocation24 + $0x680] sm:$0xff]
    %v3257 = vld [vmem:[#allocation24 + $0x688] sm:$0xff]
    %v3258 = vld [vmem:[#allocation24 + $0x690] sm:$0xff]
    %v3259 = vld [vmem:[#allocation24 + $0x698] sm:$0xff]
    %v3260 = vld [vmem:[#allocation24 + $0x6a0] sm:$0xff]
    %v3261 = vld [vmem:[#allocation24 + $0x6a8] sm:$0xff]
    %v3262 = vld [vmem:[#allocation24 + $0x6b0] sm:$0xff]
    %v3263 = vld [vmem:[#allocation24 + $0x6b8] sm:$0xff]
    %v3264 = vld [vmem:[#allocation24 + $0x6c0] sm:$0xff]
    %v3265 = vld [vmem:[#allocation24 + $0x6c8] sm:$0xff]
    %v3266 = vld [vmem:[#allocation24 + $0x6d0] sm:$0xff]
    %v3267 = vld [vmem:[#allocation24 + $0x6d8] sm:$0xff]
    %v3268 = vld [vmem:[#allocation24 + $0x6e0] sm:$0xff]
    %v3269 = vld [vmem:[#allocation24 + $0x6e8] sm:$0xff]
    %v3270 = vld [vmem:[#allocation24 + $0x6f0] sm:$0xff]
    %v3271 = vld [vmem:[#allocation24 + $0x6f8] sm:$0xff]
    %v3272 = vld [vmem:[#allocation24 + $0x700] sm:$0xff]
    %v3273 = vld [vmem:[#allocation24 + $0x708] sm:$0xff]
    %v3274 = vld [vmem:[#allocation24 + $0x710] sm:$0xff]
    %v3275 = vld [vmem:[#allocation24 + $0x718] sm:$0xff]
    %v3276 = vld [vmem:[#allocation24 + $0x720] sm:$0xff]
    %v3277 = vld [vmem:[#allocation24 + $0x728] sm:$0xff]
    %v3278 = vld [vmem:[#allocation24 + $0x730] sm:$0xff]
    %v3279 = vld [vmem:[#allocation24 + $0x738] sm:$0xff]
    %v3280 = vld [vmem:[#allocation24 + $0x740] sm:$0xff]
    %v3281 = vld [vmem:[#allocation24 + $0x748] sm:$0xff]
    %v3282 = vld [vmem:[#allocation24 + $0x750] sm:$0xff]
    %v3283 = vld [vmem:[#allocation24 + $0x758] sm:$0xff]
    %v3284 = vld [vmem:[#allocation24 + $0x760] sm:$0xff]
    %v3285 = vld [vmem:[#allocation24 + $0x768] sm:$0xff]
    %v3286 = vld [vmem:[#allocation24 + $0x770] sm:$0xff]
    %v3287 = vld [vmem:[#allocation24 + $0x778] sm:$0xff]
    %v3288 = vld [vmem:[#allocation24 + $0x780] sm:$0xff]
    %v3289 = vld [vmem:[#allocation24 + $0x788] sm:$0xff]
    %v3290 = vld [vmem:[#allocation24 + $0x790] sm:$0xff]
    %v3291 = vld [vmem:[#allocation24 + $0x798] sm:$0xff]
    %v3292 = vld [vmem:[#allocation24 + $0x7a0] sm:$0xff]
    %v3293 = vld [vmem:[#allocation24 + $0x7a8] sm:$0xff]
    %v3294 = vld [vmem:[#allocation24 + $0x7b0] sm:$0xff]
    %v3295 = vld [vmem:[#allocation24 + $0x7b8] sm:$0xff]
    %v3296 = vld [vmem:[#allocation24 + $0x7c0] sm:$0xff]
    %v3297 = vld [vmem:[#allocation24 + $0x7c8] sm:$0xff]
    %v3298 = vld [vmem:[#allocation24 + $0x7d0] sm:$0xff]
    %v3299 = vld [vmem:[#allocation24 + $0x7d8] sm:$0xff]
    %v3300 = vld [vmem:[#allocation24 + $0x7e0] sm:$0xff]
    %v3301 = vld [vmem:[#allocation24 + $0x7e8] sm:$0xff]
    %v3302 = vld [vmem:[#allocation24 + $0x7f0] sm:$0xff]
    %v3303 = vld [vmem:[#allocation24 + $0x7f8] sm:$0xff]
    %v3304 = vld [vmem:[#allocation26] sm:$0x3]
    %v3306 = vlaneseq
    %v3307 = vshrl.u32 %v3306, 7
    %v3308 = vsub.s32 0, %v3307
    %v3309 = vrot.slane %v3304, %v3308
    %v3310 = vlaneseq
    %v3311 = vshrl.u32 %v3310, 7
    %v3312 = vsub.s32 1, %v3311
    %v3313 = vrot.slane %v3304, %v3312
    %3316 = vmatprep.subr.mxu0 %v3049
    %3317 = vmatpush1.msra.mxu0 %v3048
    %3318 = vmatprep.subr.mxu0 %v3051
    %3319 = vmatpush1.msra.mxu0 %v3050
    %3320 = vmatprep.subr.mxu0 %v3053
    %3321 = vmatpush1.msra.mxu0 %v3052
    %3322 = vmatprep.subr.mxu0 %v3055
    %3323 = vmatpush1.msra.mxu0 %v3054
    %3324 = vmatprep.subr.mxu0 %v3057
    %3325 = vmatpush1.msra.mxu0 %v3056
    %3326 = vmatprep.subr.mxu0 %v3059
    %3327 = vmatpush1.msra.mxu0 %v3058
    %3328 = vmatprep.subr.mxu0 %v3061
    %3329 = vmatpush1.msra.mxu0 %v3060
    %3330 = vmatprep.subr.mxu0 %v3063
    %3331 = vmatpush1.msra.mxu0 %v3062
    %3332 = vmatprep.subr.mxu0 %v3065
    %3333 = vmatpush1.msra.mxu0 %v3064
    %3334 = vmatprep.subr.mxu0 %v3067
    %3335 = vmatpush1.msra.mxu0 %v3066
    %3336 = vmatprep.subr.mxu0 %v3069
    %3337 = vmatpush1.msra.mxu0 %v3068
    %3338 = vmatprep.subr.mxu0 %v3071
    %3339 = vmatpush1.msra.mxu0 %v3070
    %3340 = vmatprep.subr.mxu0 %v3073
    %3341 = vmatpush1.msra.mxu0 %v3072
    %3342 = vmatprep.subr.mxu0 %v3075
    %3343 = vmatpush1.msra.mxu0 %v3074
    %3344 = vmatprep.subr.mxu0 %v3077
    %3345 = vmatpush1.msra.mxu0 %v3076
    %3346 = vmatprep.subr.mxu0 %v3079
    %3347 = vmatpush1.msra.mxu0 %v3078
    %3348 = vmatprep.subr.mxu0 %v3081
    %3349 = vmatpush1.msra.mxu0 %v3080
    %3350 = vmatprep.subr.mxu0 %v3083
    %3351 = vmatpush1.msra.mxu0 %v3082
    %3352 = vmatprep.subr.mxu0 %v3085
    %3353 = vmatpush1.msra.mxu0 %v3084
    %3354 = vmatprep.subr.mxu0 %v3087
    %3355 = vmatpush1.msra.mxu0 %v3086
    %3356 = vmatprep.subr.mxu0 %v3089
    %3357 = vmatpush1.msra.mxu0 %v3088
    %3358 = vmatprep.subr.mxu0 %v3091
    %3359 = vmatpush1.msra.mxu0 %v3090
    %3360 = vmatprep.subr.mxu0 %v3093
    %3361 = vmatpush1.msra.mxu0 %v3092
    %3362 = vmatprep.subr.mxu0 %v3095
    %3363 = vmatpush1.msra.mxu0 %v3094
    %3364 = vmatprep.subr.mxu0 %v3097
    %3365 = vmatpush1.msra.mxu0 %v3096
    %3366 = vmatprep.subr.mxu0 %v3099
    %3367 = vmatpush1.msra.mxu0 %v3098
    %3368 = vmatprep.subr.mxu0 %v3101
    %3369 = vmatpush1.msra.mxu0 %v3100
    %3370 = vmatprep.subr.mxu0 %v3103
    %3371 = vmatpush1.msra.mxu0 %v3102
    %3372 = vmatprep.subr.mxu0 %v3105
    %3373 = vmatpush1.msra.mxu0 %v3104
    %3374 = vmatprep.subr.mxu0 %v3107
    %3375 = vmatpush1.msra.mxu0 %v3106
    %3376 = vmatprep.subr.mxu0 %v3109
    %3377 = vmatpush1.msra.mxu0 %v3108
    %3378 = vmatprep.subr.mxu0 %v3111
    %3379 = vmatpush1.msra.mxu0 %v3110
    %3380 = vmatprep.mubr.f32.mxu0 %v3041
    %3381 = vmatmul.mubr.f32.gmra.mrb[0].mxu0 %v3040
    %v3382 = vpop.f32.mrb[0].mxu0
    %v3383 = vadd.f32 %v3309, %v3382
    %v3384 = vpop.f32.mrb[0].mxu0
    %v3385 = vadd.f32 %v3313, %v3384
    %3386 = vdwg.mxu0
    %3387 = vmatprep.subr.mxu0 %v3113
    %3388 = vmatpush1.msra.mxu0 %v3112
    %3389 = vmatprep.subr.mxu0 %v3115
    %3390 = vmatpush1.msra.mxu0 %v3114
    %3391 = vmatprep.subr.mxu0 %v3117
    %3392 = vmatpush1.msra.mxu0 %v3116
    %3393 = vmatprep.subr.mxu0 %v3119
    %3394 = vmatpush1.msra.mxu0 %v3118
    %3395 = vmatprep.subr.mxu0 %v3121
    %3396 = vmatpush1.msra.mxu0 %v3120
    %3397 = vmatprep.subr.mxu0 %v3123
    %3398 = vmatpush1.msra.mxu0 %v3122
    %3399 = vmatprep.subr.mxu0 %v3125
    %3400 = vmatpush1.msra.mxu0 %v3124
    %3401 = vmatprep.subr.mxu0 %v3127
    %3402 = vmatpush1.msra.mxu0 %v3126
    %3403 = vmatprep.subr.mxu0 %v3129
    %3404 = vmatpush1.msra.mxu0 %v3128
    %3405 = vmatprep.subr.mxu0 %v3131
    %3406 = vmatpush1.msra.mxu0 %v3130
    %3407 = vmatprep.subr.mxu0 %v3133
    %3408 = vmatpush1.msra.mxu0 %v3132
    %3409 = vmatprep.subr.mxu0 %v3135
    %3410 = vmatpush1.msra.mxu0 %v3134
    %3411 = vmatprep.subr.mxu0 %v3137
    %3412 = vmatpush1.msra.mxu0 %v3136
    %3413 = vmatprep.subr.mxu0 %v3139
    %3414 = vmatpush1.msra.mxu0 %v3138
    %3415 = vmatprep.subr.mxu0 %v3141
    %3416 = vmatpush1.msra.mxu0 %v3140
    %3417 = vmatprep.subr.mxu0 %v3143
    %3418 = vmatpush1.msra.mxu0 %v3142
    %3419 = vmatprep.subr.mxu0 %v3145
    %3420 = vmatpush1.msra.mxu0 %v3144
    %3421 = vmatprep.subr.mxu0 %v3147
    %3422 = vmatpush1.msra.mxu0 %v3146
    %3423 = vmatprep.subr.mxu0 %v3149
    %3424 = vmatpush1.msra.mxu0 %v3148
    %3425 = vmatprep.subr.mxu0 %v3151
    %3426 = vmatpush1.msra.mxu0 %v3150
    %3427 = vmatprep.subr.mxu0 %v3153
    %3428 = vmatpush1.msra.mxu0 %v3152
    %3429 = vmatprep.subr.mxu0 %v3155
    %3430 = vmatpush1.msra.mxu0 %v3154
    %3431 = vmatprep.subr.mxu0 %v3157
    %3432 = vmatpush1.msra.mxu0 %v3156
    %3433 = vmatprep.subr.mxu0 %v3159
    %3434 = vmatpush1.msra.mxu0 %v3158
    %3435 = vmatprep.subr.mxu0 %v3161
    %3436 = vmatpush1.msra.mxu0 %v3160
    %3437 = vmatprep.subr.mxu0 %v3163
    %3438 = vmatpush1.msra.mxu0 %v3162
    %3439 = vmatprep.subr.mxu0 %v3165
    %3440 = vmatpush1.msra.mxu0 %v3164
    %3441 = vmatprep.subr.mxu0 %v3167
    %3442 = vmatpush1.msra.mxu0 %v3166
    %3443 = vmatprep.subr.mxu0 %v3169
    %3444 = vmatpush1.msra.mxu0 %v3168
    %3445 = vmatprep.subr.mxu0 %v3171
    %3446 = vmatpush1.msra.mxu0 %v3170
    %3447 = vmatprep.subr.mxu0 %v3173
    %3448 = vmatpush1.msra.mxu0 %v3172
    %3449 = vmatprep.subr.mxu0 %v3175
    %3450 = vmatpush1.msra.mxu0 %v3174
    %3451 = vmatprep.mubr.f32.mxu0 %v3043
    %3452 = vmatmul.mubr.f32.gmra.mrb[0].mxu0 %v3042
    %v3453 = vpop.f32.mrb[0].mxu0
    %v3454 = vadd.f32 %v3383, %v3453
    %v3455 = vpop.f32.mrb[0].mxu0
    %v3456 = vadd.f32 %v3385, %v3455
    %3457 = vdwg.mxu0
    %3458 = vmatprep.subr.mxu0 %v3177
    %3459 = vmatpush1.msra.mxu0 %v3176
    %3460 = vmatprep.subr.mxu0 %v3179
    %3461 = vmatpush1.msra.mxu0 %v3178
    %3462 = vmatprep.subr.mxu0 %v3181
    %3463 = vmatpush1.msra.mxu0 %v3180
    %3464 = vmatprep.subr.mxu0 %v3183
    %3465 = vmatpush1.msra.mxu0 %v3182
    %3466 = vmatprep.subr.mxu0 %v3185
    %3467 = vmatpush1.msra.mxu0 %v3184
    %3468 = vmatprep.subr.mxu0 %v3187
    %3469 = vmatpush1.msra.mxu0 %v3186
    %3470 = vmatprep.subr.mxu0 %v3189
    %3471 = vmatpush1.msra.mxu0 %v3188
    %3472 = vmatprep.subr.mxu0 %v3191
    %3473 = vmatpush1.msra.mxu0 %v3190
    %3474 = vmatprep.subr.mxu0 %v3193
    %3475 = vmatpush1.msra.mxu0 %v3192
    %3476 = vmatprep.subr.mxu0 %v3195
    %3477 = vmatpush1.msra.mxu0 %v3194
    %3478 = vmatprep.subr.mxu0 %v3197
    %3479 = vmatpush1.msra.mxu0 %v3196
    %3480 = vmatprep.subr.mxu0 %v3199
    %3481 = vmatpush1.msra.mxu0 %v3198
    %3482 = vmatprep.subr.mxu0 %v3201
    %3483 = vmatpush1.msra.mxu0 %v3200
    %3484 = vmatprep.subr.mxu0 %v3203
    %3485 = vmatpush1.msra.mxu0 %v3202
    %3486 = vmatprep.subr.mxu0 %v3205
    %3487 = vmatpush1.msra.mxu0 %v3204
    %3488 = vmatprep.subr.mxu0 %v3207
    %3489 = vmatpush1.msra.mxu0 %v3206
    %3490 = vmatprep.subr.mxu0 %v3209
    %3491 = vmatpush1.msra.mxu0 %v3208
    %3492 = vmatprep.subr.mxu0 %v3211
    %3493 = vmatpush1.msra.mxu0 %v3210
    %3494 = vmatprep.subr.mxu0 %v3213
    %3495 = vmatpush1.msra.mxu0 %v3212
    %3496 = vmatprep.subr.mxu0 %v3215
    %3497 = vmatpush1.msra.mxu0 %v3214
    %3498 = vmatprep.subr.mxu0 %v3217
    %3499 = vmatpush1.msra.mxu0 %v3216
    %3500 = vmatprep.subr.mxu0 %v3219
    %3501 = vmatpush1.msra.mxu0 %v3218
    %3502 = vmatprep.subr.mxu0 %v3221
    %3503 = vmatpush1.msra.mxu0 %v3220
    %3504 = vmatprep.subr.mxu0 %v3223
    %3505 = vmatpush1.msra.mxu0 %v3222
    %3506 = vmatprep.subr.mxu0 %v3225
    %3507 = vmatpush1.msra.mxu0 %v3224
    %3508 = vmatprep.subr.mxu0 %v3227
    %3509 = vmatpush1.msra.mxu0 %v3226
    %3510 = vmatprep.subr.mxu0 %v3229
    %3511 = vmatpush1.msra.mxu0 %v3228
    %3512 = vmatprep.subr.mxu0 %v3231
    %3513 = vmatpush1.msra.mxu0 %v3230
    %3514 = vmatprep.subr.mxu0 %v3233
    %3515 = vmatpush1.msra.mxu0 %v3232
    %3516 = vmatprep.subr.mxu0 %v3235
    %3517 = vmatpush1.msra.mxu0 %v3234
    %3518 = vmatprep.subr.mxu0 %v3237
    %3519 = vmatpush1.msra.mxu0 %v3236
    %3520 = vmatprep.subr.mxu0 %v3239
    %3521 = vmatpush1.msra.mxu0 %v3238
    %3522 = vmatprep.mubr.f32.mxu0 %v3045
    %3523 = vmatmul.mubr.f32.gmra.mrb[0].mxu0 %v3044
    %v3524 = vpop.f32.mrb[0].mxu0
    %v3525 = vadd.f32 %v3454, %v3524
    %v3526 = vpop.f32.mrb[0].mxu0
    %v3527 = vadd.f32 %v3456, %v3526
    %3528 = vdwg.mxu0
    %3529 = vmatprep.subr.mxu0 %v3241
    %3530 = vmatpush1.msra.mxu0 %v3240
    %3531 = vmatprep.subr.mxu0 %v3243
    %3532 = vmatpush1.msra.mxu0 %v3242
    %3533 = vmatprep.subr.mxu0 %v3245
    %3534 = vmatpush1.msra.mxu0 %v3244
    %3535 = vmatprep.subr.mxu0 %v3247
    %3536 = vmatpush1.msra.mxu0 %v3246
    %3537 = vmatprep.subr.mxu0 %v3249
    %3538 = vmatpush1.msra.mxu0 %v3248
    %3539 = vmatprep.subr.mxu0 %v3251
    %3540 = vmatpush1.msra.mxu0 %v3250
    %3541 = vmatprep.subr.mxu0 %v3253
    %3542 = vmatpush1.msra.mxu0 %v3252
    %3543 = vmatprep.subr.mxu0 %v3255
    %3544 = vmatpush1.msra.mxu0 %v3254
    %3545 = vmatprep.subr.mxu0 %v3257
    %3546 = vmatpush1.msra.mxu0 %v3256
    %3547 = vmatprep.subr.mxu0 %v3259
    %3548 = vmatpush1.msra.mxu0 %v3258
    %3549 = vmatprep.subr.mxu0 %v3261
    %3550 = vmatpush1.msra.mxu0 %v3260
    %3551 = vmatprep.subr.mxu0 %v3263
    %3552 = vmatpush1.msra.mxu0 %v3262
    %3553 = vmatprep.subr.mxu0 %v3265
    %3554 = vmatpush1.msra.mxu0 %v3264
    %3555 = vmatprep.subr.mxu0 %v3267
    %3556 = vmatpush1.msra.mxu0 %v3266
    %3557 = vmatprep.subr.mxu0 %v3269
    %3558 = vmatpush1.msra.mxu0 %v3268
    %3559 = vmatprep.subr.mxu0 %v3271
    %3560 = vmatpush1.msra.mxu0 %v3270
    %3561 = vmatprep.subr.mxu0 %v3273
    %3562 = vmatpush1.msra.mxu0 %v3272
    %3563 = vmatprep.subr.mxu0 %v3275
    %3564 = vmatpush1.msra.mxu0 %v3274
    %3565 = vmatprep.subr.mxu0 %v3277
    %3566 = vmatpush1.msra.mxu0 %v3276
    %3567 = vmatprep.subr.mxu0 %v3279
    %3568 = vmatpush1.msra.mxu0 %v3278
    %3569 = vmatprep.subr.mxu0 %v3281
    %3570 = vmatpush1.msra.mxu0 %v3280
    %3571 = vmatprep.subr.mxu0 %v3283
    %3572 = vmatpush1.msra.mxu0 %v3282
    %3573 = vmatprep.subr.mxu0 %v3285
    %3574 = vmatpush1.msra.mxu0 %v3284
    %3575 = vmatprep.subr.mxu0 %v3287
    %3576 = vmatpush1.msra.mxu0 %v3286
    %3577 = vmatprep.subr.mxu0 %v3289
    %3578 = vmatpush1.msra.mxu0 %v3288
    %3579 = vmatprep.subr.mxu0 %v3291
    %3580 = vmatpush1.msra.mxu0 %v3290
    %3581 = vmatprep.subr.mxu0 %v3293
    %3582 = vmatpush1.msra.mxu0 %v3292
    %3583 = vmatprep.subr.mxu0 %v3295
    %3584 = vmatpush1.msra.mxu0 %v3294
    %3585 = vmatprep.subr.mxu0 %v3297
    %3586 = vmatpush1.msra.mxu0 %v3296
    %3587 = vmatprep.subr.mxu0 %v3299
    %3588 = vmatpush1.msra.mxu0 %v3298
    %3589 = vmatprep.subr.mxu0 %v3301
    %3590 = vmatpush1.msra.mxu0 %v3300
    %3591 = vmatprep.subr.mxu0 %v3303
    %3592 = vmatpush1.msra.mxu0 %v3302
    %3593 = vmatprep.mubr.f32.mxu0 %v3047
    %3594 = vmatmul.mubr.f32.gmra.mrb[0].mxu0 %v3046
    %v3595 = vpop.f32.mrb[0].mxu0
    %v3596 = vadd.f32 %v3525, %v3595
    %v3597 = vpop.f32.mrb[0].mxu0
    %v3598 = vadd.f32 %v3527, %v3597
    %3599 = vdwg.mxu0
    %v3602 = vcombine.low %v3596, %v3598
    %v3604 = vunpack.c.l.s4 1983009808
    %v3605 = vunpack.c.0.s8 %v3604
    %v3606 = vlaneseq
    %v3607 = vshrl.u32 %v3606, 7
    %v3608 = vsub.s32 %v3605, %v3607
    %v3609 = vrot.slane %v3602, %v3608
    %3611 = vst [vmem:[#allocation27] sm:$0xf] %v3609
    // Predicated region
    $region110: #{cnn1d_forward.1} parent=1 // pred_check
      _
    $region111: #{cnn1d_forward.1} parent=1 // pred_check_branch
      %3613 = sbr.rel (0) target = $region113
    $region112: #{cnn1d_forward.1} parent=1 // pred_region
      %s3615 = ssub.s32 64, 64
      %3616 = vsyncadd [#allocation8], %s3615
      %s3618 = sshll.u32 [#allocation27], 4
      %s3619 = int_to_ptr.vmem [resolvable:$true] %s3618
      %3621 = dma.vmem_to_hbm [thread:$0]  %s3619, 64, %s14, [#allocation8]
    $region113: #{cnn1d_forward.1} parent=1 // pred_fallthru
      _
    // Predicated region
    $region114: #{cnn1d_forward.1} parent=1 // pred_check
      _
    $region115: #{cnn1d_forward.1} parent=1 // pred_check_branch
      %3623 = sbr.rel (0) target = $region117
    $region116: #{cnn1d_forward.1} parent=1 // pred_region
      %3624 = dma.done [#allocation8], 64
    $region117: #{cnn1d_forward.1} parent=1 // pred_fallthru
      _
    %3625 = vsyncpa [#allocation7], 1
    %3626 = vsyncpa [#allocation10], 1
    %3627 = vsyncpa [#allocation13], 1
    %3628 = vsyncpa [#allocation16], 1
    %3629 = vsyncpa [#allocation19], 1
    %3630 = vsyncpa [#allocation22], 1
    %3631 = vsyncpa [#allocation25], 1
    %3632 = vsyncpa [#allocation8], 1

</llo_original>
